<compile_context>
chip_gen: v6e
topology: v6e:2x2x1
jax: 0.10.0
libtpu: 0.0.40
codegen_flags: <defaults>
</compile_context>

<pallas_src>
import functools
import math

import jax
import jax.numpy as jnp
from jax.experimental import pallas as pl
from jax.experimental.pallas import tpu as pltpu


# ---------------------- per-layer fused decoder kernel -----------------------
# grid = (B, L): b "parallel", l "arbitrary".  The output block (b, 0, 0) is
# resident across the layer axis and carries the activation between layers.

def _decoder_layer_kernel(tlen_ref, mlen_ref,            # scalar prefetch (SMEM)
                          x_ref, mem_ref,                # (1,T,D) f32 / (1,S,D) bf16
                          ln_g_ref, ln_b_ref,            # (1,3,1,D) f32
                          wq_ref, bq_ref,                # (1,2,D,D) bf16 / (1,2,1,D) f32
                          wkv_ref, bkv_ref,              # (1,2,D,2D) bf16 / (1,2,1,2D) f32
                          wo_ref, bo_ref,                # (1,2,D,D) bf16 / (1,2,1,D) f32
                          f1w_ref, f1b_ref,              # (1,D,F) bf16 / (1,1,F) f32
                          f2w_ref, f2b_ref,              # (1,F,D) bf16 / (1,1,D) f32
                          o_ref,                         # (1,T,D) f32 (resident state)
                          *, H, dk, T, S, D):
    b = pl.program_id(0)
    l = pl.program_id(1)

    tlen = tlen_ref[b]
    mlen = mlen_ref[b]

    # Masks built in-kernel from lengths (no HBM mask DMA).
    row = jax.lax.broadcasted_iota(jnp.int32, (T, T), 0)
    col = jax.lax.broadcasted_iota(jnp.int32, (T, T), 1)
    tgt_mask = (col <= row) & (col < tlen)                              # (T, T)
    mem_mask = jax.lax.broadcasted_iota(jnp.int32, (T, S), 1) < mlen    # (T, S)

    scale = 1.0 / math.sqrt(dk)
    neg = jnp.float32(-1e9)        # large-but-safe masked-score fill

    # Initialize the resident state from the embedded input at the first layer.
    @pl.when(l == 0)
    def _():
        o_ref[...] = x_ref[...]

    x = o_ref[0]                   # (T, D) fp32, carried across layers

    def layer_norm(v, j):
        g = ln_g_ref[0, j]         # (1, D)
        bb = ln_b_ref[0, j]        # (1, D)
        mean = jnp.mean(v, axis=-1, keepdims=True)
        c = v - mean
        var = jnp.mean(c * c, axis=-1, keepdims=True)
        return c * jax.lax.rsqrt(var + 1e-5) * g + bb

    def attention(xq, kv_src_bf16, mask, a):
        """Multi-head attention.  a: 0 = self-attn, 1 = src-attn.
        xq: (Tq, D) fp32, kv_src_bf16: (Tk, D) bf16, mask: (Tq, Tk) bool."""
        # Full-width, lane-dense projections (single large MXU pushes).
        q = jnp.dot(xq.astype(jnp.bfloat16), wq_ref[0, a],
                    preferred_element_type=jnp.float32) + bq_ref[0, a]     # (Tq, D)
        kv = jnp.dot(kv_src_bf16, wkv_ref[0, a],
                     preferred_element_type=jnp.float32) + bkv_ref[0, a]   # (Tk, 2D)
        k = kv[:, :D]
        v = kv[:, D:]

        q16 = (q * scale).astype(jnp.bfloat16)
        k16 = k.astype(jnp.bfloat16)
        v16 = v.astype(jnp.bfloat16)
        mask_f = mask.astype(jnp.float32)

        ctx_parts = []
        for h in range(H):                         # per-head static lane slices
            qh = q16[:, h * dk:(h + 1) * dk]
            kh = k16[:, h * dk:(h + 1) * dk]
            vh = v16[:, h * dk:(h + 1) * dk]
            s = jax.lax.dot_general(qh, kh, (((1,), (1,)), ((), ())),
                                    preferred_element_type=jnp.float32)    # (Tq, Tk)
            s = jnp.where(mask, s, neg)
            smax = jnp.max(s, axis=-1, keepdims=True)
            e = jnp.exp(s - smax)
            inv = pl.reciprocal(jnp.sum(e, axis=-1, keepdims=True), approx=True)
            p = (e * inv) * mask_f                 # re-mask folded into the multiply
            ctx_parts.append(jnp.dot(p.astype(jnp.bfloat16), vh,
                                     preferred_element_type=jnp.float32))  # (Tq, dk)
        ctx = jnp.concatenate(ctx_parts, axis=-1)  # (Tq, D) lane-dense
        # Single (Tq,D)@(D,D) output projection instead of H accumulating ones.
        return jnp.dot(ctx.astype(jnp.bfloat16), wo_ref[0, a],
                       preferred_element_type=jnp.float32) + bo_ref[0, a]

    mem16 = mem_ref[0]             # (S, D) bf16 (used only as K/V source)

    # self-attention sub-block (pre-norm, residual folded; dropout = identity)
    xn = layer_norm(x, 0)
    x = x + attention(xn, xn.astype(jnp.bfloat16), tgt_mask, 0)
    # cross-attention sub-block
    xn = layer_norm(x, 1)
    x = x + attention(xn, mem16, mem_mask, 1)
    # position-wise feed-forward sub-block
    xn = layer_norm(x, 2)
    hdn = jnp.maximum(
        jnp.dot(xn.astype(jnp.bfloat16), f1w_ref[0],
                preferred_element_type=jnp.float32) + f1b_ref[0], 0.0)
    x = x + jnp.dot(hdn.astype(jnp.bfloat16), f2w_ref[0],
                    preferred_element_type=jnp.float32) + f2b_ref[0]

    o_ref[0] = x


def _decoder_stack(params, x, memory_bf16, tgt_lens, mem_lens, *, L, H, dk):
    B, T, D = x.shape
    S = memory_bf16.shape[1]

    weights = (params["ln_g"], params["ln_b"],
               params["attn_wq"], params["attn_bq"],
               params["attn_wkv"], params["attn_bkv"],
               params["attn_wo"], params["attn_bo"],
               params["ffn_w1"], params["ffn_b1"],
               params["ffn_w2"], params["ffn_b2"])

    def layer_spec(arr):
        blk = (1,) + arr.shape[1:]
        nrest = arr.ndim - 1

        def imap(b, l, tl, ml, _n=nrest):
            return (l,) + (0,) * _n

        return pl.BlockSpec(blk, imap)

    in_specs = [
        pl.BlockSpec((1, T, D), lambda b, l, tl, ml: (b, 0, 0)),
        pl.BlockSpec((1, S, D), lambda b, l, tl, ml: (b, 0, 0)),
    ] + [layer_spec(wt) for wt in weights]

    grid_spec = pltpu.PrefetchScalarGridSpec(
        num_scalar_prefetch=2,
        grid=(B, L),
        in_specs=in_specs,
        out_specs=pl.BlockSpec((1, T, D), lambda b, l, tl, ml: (b, 0, 0)),
    )

    # vmem limit sized from the actual per-step blocks (x2-buffered) + headroom.
    block_bytes = 2 * (x.nbytes // B) + (memory_bf16.nbytes // B)
    block_bytes += sum(int(w.nbytes) // L for w in weights)
    vmem_limit = int(min(64 << 20, max(16 << 20, 3 * block_bytes + (2 << 20))))

    kernel = functools.partial(_decoder_layer_kernel, H=H, dk=dk, T=T, S=S, D=D)
    return pl.pallas_call(
        kernel,
        grid_spec=grid_spec,
        out_shape=jax.ShapeDtypeStruct((B, T, D), jnp.float32),
        compiler_params=pltpu.CompilerParams(
            dimension_semantics=("parallel", "arbitrary"),
            vmem_limit_bytes=vmem_limit),
    )(tgt_lens, mem_lens, x, memory_bf16, *weights)


# ----------------- fused after_norm + (padded) output layer ------------------

def _head_kernel(x_ref, g_ref, b_ref, w_ref, bo_ref, o_ref):
    x = x_ref[...]                                 # (TM, D) fp32
    mean = jnp.mean(x, axis=-1, keepdims=True)
    c = x - mean
    var = jnp.mean(c * c, axis=-1, keepdims=True)
    xn = c * jax.lax.rsqrt(var + 1e-5) * g_ref[...] + b_ref[...]
    o_ref[...] = jnp.dot(xn.astype(jnp.bfloat16), w_ref[...],
                         preferred_element_type=jnp.float32) + bo_ref[...]


def _decoder_head(params, x2):
    M, D = x2.shape
    Vp = params["out_w"].shape[1]
    TM = M if M <= 256 else 256                    # rows per step (mult. of 8 / full)
    TV = Vp if Vp <= 2048 else 1024                # vocab tile, lane-dense (x128)
    grid = (pl.cdiv(M, TM), pl.cdiv(Vp, TV))

    block_bytes = TM * D * 4 + D * TV * 2 + TM * TV * 4 + 2 * D * 4 + TV * 4
    vmem_limit = int(min(64 << 20, max(16 << 20, 3 * block_bytes + (2 << 20))))

    return pl.pallas_call(
        _head_kernel,
        grid=grid,
        in_specs=[
            pl.BlockSpec((TM, D), lambda i, j: (i, 0)),
            pl.BlockSpec((1, D), lambda i, j: (0, 0)),
            pl.BlockSpec((1, D), lambda i, j: (0, 0)),
            pl.BlockSpec((D, TV), lambda i, j: (0, j)),
            pl.BlockSpec((1, TV), lambda i, j: (0, j)),
        ],
        out_specs=pl.BlockSpec((TM, TV), lambda i, j: (i, j)),
        out_shape=jax.ShapeDtypeStruct((M, Vp), jnp.float32),
        compiler_params=pltpu.CompilerParams(
            dimension_semantics=("parallel", "parallel"),
            vmem_limit_bytes=vmem_limit),
    )(x2, params["after_norm_g"], params["after_norm_b"],
      params["out_w"], params["out_b"])


# ------------------------------- forward pass --------------------------------

def transformer_decoder_forward(params, memory, memory_mask, ys_in_pad,
                                ys_in_lens, num_heads):
    B, T = ys_in_pad.shape
    D = memory.shape[2]
    L = params["ffn_w1"].shape[0]
    vocab = params["embed"].shape[0]
    dk = D // num_heads

    # tgt_mask here is JAX glue used only for olens; attention masks are built
    # in-kernel from the lengths via scalar prefetch.
    pad = jnp.arange(T)[None, :] >= ys_in_lens[:, None]       # (B, T), True @ pad
    tgt_mask = (~pad)[:, None, :] & jnp.tril(jnp.ones((T, T), dtype=bool))[None]
    olens = tgt_mask.sum(1).astype(jnp.int32)                 # matches torch sum(1)

    # memory_mask is a prefix (length) mask in wenet -> recover lengths.
    mem_lens = memory_mask.reshape(B, -1).sum(-1).astype(jnp.int32)
    tgt_lens = ys_in_lens.astype(jnp.int32)

    # embedding + sinusoidal positional encoding (x*sqrt(D) + pe)
    # TODO(synk): embedding gather kept in JAX (data-dependent row gather, glue).
    x = jnp.take(params["embed"], ys_in_pad, axis=0) * math.sqrt(D)
    x = (x + params["pos_enc"][:T][None]).astype(jnp.float32)

    x = _decoder_stack(params, x, memory.astype(jnp.bfloat16),
                       tgt_lens, mem_lens, L=L, H=num_heads, dk=dk)

    logits_p = _decoder_head(params, x.reshape(B * T, D))     # (B*T, Vp) lane-dense
    logits = logits_p[:, :vocab].reshape(B, T, vocab)
    # NOTE: rows beyond tlen contain computed (not zeroed) values — same as wenet.
    return logits, jnp.float32(0.0), olens


# ----------------------------- parameter init --------------------------------

def init_params(key, vocab, D, ffn, num_blocks, num_heads):
    L, H = num_blocks, num_heads
    assert D % H == 0
    Vp = ((vocab + 127) // 128) * 128              # lane-dense padded vocab
    keys = jax.random.split(key, 2 + 10 * L)

    def w(k, shape, scale=0.02):
        return (scale * jax.random.normal(k, shape)).astype(jnp.float32)

    ki = 2
    wq, wkv, wo, f1w, f2w = [], [], [], [], []
    for _l in range(L):
        wq_l, wkv_l, wo_l = [], [], []
        for _a in range(2):                        # 0 = self-attn, 1 = src-attn
            Wq = w(keys[ki], (D, D)); ki += 1
            Wk = w(keys[ki], (D, D)); ki += 1
            Wv = w(keys[ki], (D, D)); ki += 1
            Wo = w(keys[ki], (D, D)); ki += 1
            wq_l.append(Wq)
            wkv_l.append(jnp.concatenate([Wk, Wv], axis=1))   # (D, 2D) lane-dense
            wo_l.append(Wo)
        wq.append(jnp.stack(wq_l)); wkv.append(jnp.stack(wkv_l)); wo.append(jnp.stack(wo_l))
        f1w.append(w(keys[ki], (D, ffn))); ki += 1
        f2w.append(w(keys[ki], (ffn, D))); ki += 1

    out_w = jnp.zeros((D, Vp), jnp.float32).at[:, :vocab].set(
        w(keys[1], (D, vocab)))

    return {
        "embed": w(keys[0], (vocab, D), 1.0 / math.sqrt(D)),
        # layer-major, lane-dense slabs (bf16 for matmul operands)
        "ln_g": jnp.ones((L, 3, 1, D), jnp.float32),
        "ln_b": jnp.zeros((L, 3, 1, D), jnp.float32),
        "attn_wq": jnp.stack(wq).astype(jnp.bfloat16),        # (L, 2, D, D)
        "attn_bq": jnp.zeros((L, 2, 1, D), jnp.float32),
        "attn_wkv": jnp.stack(wkv).astype(jnp.bfloat16),      # (L, 2, D, 2D)
        "attn_bkv": jnp.zeros((L, 2, 1, 2 * D), jnp.float32),
        "attn_wo": jnp.stack(wo).astype(jnp.bfloat16),        # (L, 2, D, D)
        "attn_bo": jnp.zeros((L, 2, 1, D), jnp.float32),
        "ffn_w1": jnp.stack(f1w).astype(jnp.bfloat16),        # (L, D, F)
        "ffn_b1": jnp.zeros((L, 1, ffn), jnp.float32),
        "ffn_w2": jnp.stack(f2w).astype(jnp.bfloat16),        # (L, F, D)
        "ffn_b2": jnp.zeros((L, 1, D), jnp.float32),
        "after_norm_g": jnp.ones((1, D), jnp.float32),
        "after_norm_b": jnp.zeros((1, D), jnp.float32),
        "out_w": out_w.astype(jnp.bfloat16),                  # (D, Vp) lane-dense
        "out_b": jnp.zeros((1, Vp), jnp.float32),
    }


# ---------------------------------- main --------------------------------------

if __name__ == "__main__":
    vocab_size = 50
    d_model = 32          # encoder_output_size / attention_dim
    num_heads = 4
    linear_units = 64
    num_blocks = 2
    B, T, S = 2, 8, 16    # batch, maxlen_out, maxlen_in

    key = jax.random.PRNGKey(0)
    k_mem, k_tgt, k_param = jax.random.split(key, 3)
    params = init_params(k_param, vocab_size, d_model, linear_units,
                         num_blocks, num_heads)

    # sinusoidal positional encoding table
    pos = jnp.arange(T, dtype=jnp.float32)[:, None]
    div = jnp.exp(jnp.arange(0, d_model, 2, dtype=jnp.float32)
                  * -(math.log(10000.0) / d_model))
    pe = jnp.zeros((T, d_model), jnp.float32)
    pe = pe.at[:, 0::2].set(jnp.sin(pos * div))
    pe = pe.at[:, 1::2].set(jnp.cos(pos * div))
    params["pos_enc"] = pe

    memory = jax.random.normal(k_mem, (B, S, d_model), jnp.float32)
    mem_lens = jnp.array([S, 12], jnp.int32)
    memory_mask = (jnp.arange(S)[None, :] < mem_lens[:, None])[:, None, :]  # (B,1,S)
    ys_in_pad = jax.random.randint(k_tgt, (B, T), 0, vocab_size)            # token ids
    ys_in_lens = jnp.array([T, 5], jnp.int32)

    logits, zero, olens = transformer_decoder_forward(
        params, memory, memory_mask, ys_in_pad, ys_in_lens, num_heads)
    jax.block_until_ready(logits)

    assert logits.shape == (B, T, vocab_size)
    assert olens.shape == (B, T)
    assert bool(jnp.isfinite(logits).all())
    print("KERNEL_OK")
</pallas_src>

<mosaic_0001>
module attributes {stable_mosaic.version = 11 : i64} {
  func.func @_decoder_layer_kernel(%arg0: i32, %arg1: i32, %arg2: memref<2xi32, #tpu.memory_space<smem>>, %arg3: memref<2xi32, #tpu.memory_space<smem>>, %arg4: memref<1x8x32xf32, #tpu.memory_space<vmem>>, %arg5: memref<1x16x32xbf16, #tpu.memory_space<vmem>>, %arg6: memref<1x3x1x32xf32, #tpu.memory_space<vmem>>, %arg7: memref<1x3x1x32xf32, #tpu.memory_space<vmem>>, %arg8: memref<1x2x32x32xbf16, #tpu.memory_space<vmem>>, %arg9: memref<1x2x1x32xf32, #tpu.memory_space<vmem>>, %arg10: memref<1x2x32x64xbf16, #tpu.memory_space<vmem>>, %arg11: memref<1x2x1x64xf32, #tpu.memory_space<vmem>>, %arg12: memref<1x2x32x32xbf16, #tpu.memory_space<vmem>>, %arg13: memref<1x2x1x32xf32, #tpu.memory_space<vmem>>, %arg14: memref<1x32x64xbf16, #tpu.memory_space<vmem>>, %arg15: memref<1x1x64xf32, #tpu.memory_space<vmem>>, %arg16: memref<1x64x32xbf16, #tpu.memory_space<vmem>>, %arg17: memref<1x1x32xf32, #tpu.memory_space<vmem>>, %arg18: memref<1x8x32xf32, #tpu.memory_space<vmem>>) attributes {dimension_semantics = [#tpu.dimension_semantics<parallel>, #tpu.dimension_semantics<arbitrary>], iteration_bounds = array<i64: 2, 2>, scalar_prefetch = 2 : i64, scratch_operands = 0 : i64, tpu.core_type = #tpu.core_type<tc>, window_params = [{transform_indices = @transform_0, window_bounds = array<i64: 1, 8, 32>}, {transform_indices = @transform_1, window_bounds = array<i64: 1, 16, 32>}, {transform_indices = @transform_2, window_bounds = array<i64: 1, 3, 1, 32>}, {transform_indices = @transform_3, window_bounds = array<i64: 1, 3, 1, 32>}, {transform_indices = @transform_4, window_bounds = array<i64: 1, 2, 32, 32>}, {transform_indices = @transform_5, window_bounds = array<i64: 1, 2, 1, 32>}, {transform_indices = @transform_6, window_bounds = array<i64: 1, 2, 32, 64>}, {transform_indices = @transform_7, window_bounds = array<i64: 1, 2, 1, 64>}, {transform_indices = @transform_8, window_bounds = array<i64: 1, 2, 32, 32>}, {transform_indices = @transform_9, window_bounds = array<i64: 1, 2, 1, 32>}, {transform_indices = @transform_10, window_bounds = array<i64: 1, 32, 64>}, {transform_indices = @transform_11, window_bounds = array<i64: 1, 1, 64>}, {transform_indices = @transform_12, window_bounds = array<i64: 1, 64, 32>}, {transform_indices = @transform_13, window_bounds = array<i64: 1, 1, 32>}, {transform_indices = @transform_14, window_bounds = array<i64: 1, 8, 32>}]} {
    %0 = arith.index_cast %arg0 : i32 to index
    %1 = memref.load %arg2[%0] : memref<2xi32, #tpu.memory_space<smem>>
    %2 = arith.index_cast %arg0 : i32 to index
    %3 = memref.load %arg3[%2] : memref<2xi32, #tpu.memory_space<smem>>
    %4 = tpu.iota {dimensions = array<i32: 0>} : vector<8x8xi32>
    %5 = tpu.iota {dimensions = array<i32: 1>} : vector<8x8xi32>
    %6 = arith.cmpi sle, %5, %4 : vector<8x8xi32>
    %7 = vector.broadcast %1 : i32 to vector<8x8xi32>
    %8 = arith.cmpi slt, %5, %7 : vector<8x8xi32>
    %9 = arith.andi %6, %8 : vector<8x8xi1>
    %10 = tpu.iota {dimensions = array<i32: 1>} : vector<8x16xi32>
    %11 = vector.broadcast %3 : i32 to vector<8x16xi32>
    %12 = arith.cmpi slt, %10, %11 : vector<8x16xi32>
    %c0_i32 = arith.constant 0 : i32
    %13 = arith.cmpi eq, %arg1, %c0_i32 : i32
    %14 = arith.extui %13 : i1 to i32
    %c0_i32_0 = arith.constant 0 : i32
    %15 = arith.cmpi ne, %14, %c0_i32_0 : i32
    scf.if %15 {
      %c0_156 = arith.constant 0 : index
      %c0_157 = arith.constant 0 : index
      %c0_158 = arith.constant 0 : index
      %335 = vector.load %arg4[%c0_156, %c0_157, %c0_158] : memref<1x8x32xf32, #tpu.memory_space<vmem>>, vector<1x8x32xf32>
      %c0_159 = arith.constant 0 : index
      %c0_160 = arith.constant 0 : index
      %c0_161 = arith.constant 0 : index
      %336 = vector.load %arg18[%c0_159, %c0_160, %c0_161] : memref<1x8x32xf32, #tpu.memory_space<vmem>>, vector<1x8x32xf32>
      tpu.vector_store %arg18[%c0_159, %c0_160, %c0_161], %335 {strides = array<i32>} : memref<1x8x32xf32, #tpu.memory_space<vmem>>, vector<1x8x32xf32>,
    } else {
    }
    %c0 = arith.constant 0 : index
    %c0_1 = arith.constant 0 : index
    %c0_2 = arith.constant 0 : index
    %16 = vector.load %arg18[%c0, %c0_1, %c0_2] : memref<1x8x32xf32, #tpu.memory_space<vmem>>, vector<1x8x32xf32>
    %17 = vector.shape_cast %16 : vector<1x8x32xf32> to vector<8x32xf32>
    %c0_3 = arith.constant 0 : index
    %c0_4 = arith.constant 0 : index
    %c0_5 = arith.constant 0 : index
    %18 = vector.load %arg5[%c0_3, %c0_4, %c0_5] : memref<1x16x32xbf16, #tpu.memory_space<vmem>>, vector<1x16x32xbf16>
    %19 = vector.shape_cast %18 : vector<1x16x32xbf16> to vector<16x32xbf16>
    %c0_6 = arith.constant 0 : index
    %c0_7 = arith.constant 0 : index
    %c0_8 = arith.constant 0 : index
    %c0_9 = arith.constant 0 : index
    %20 = vector.load %arg6[%c0_6, %c0_7, %c0_8, %c0_9] : memref<1x3x1x32xf32, #tpu.memory_space<vmem>>, vector<1x1x1x32xf32>
    %21 = vector.shape_cast %20 : vector<1x1x1x32xf32> to vector<1x32xf32>
    %c0_10 = arith.constant 0 : index
    %c0_11 = arith.constant 0 : index
    %c0_12 = arith.constant 0 : index
    %c0_13 = arith.constant 0 : index
    %22 = vector.load %arg7[%c0_10, %c0_11, %c0_12, %c0_13] : memref<1x3x1x32xf32, #tpu.memory_space<vmem>>, vector<1x1x1x32xf32>
    %23 = vector.shape_cast %22 : vector<1x1x1x32xf32> to vector<1x32xf32>
    %cst = arith.constant dense<0.000000e+00> : vector<8xf32>
    %24 = vector.multi_reduction <add>, %17, %cst [1] : vector<8x32xf32> to vector<8xf32>
    %25 = vector.shape_cast %24 : vector<8xf32> to vector<8x1xf32>
    %cst_14 = arith.constant 3.200000e+01 : f32
    %26 = vector.broadcast %cst_14 : f32 to vector<8x1xf32>
    %27 = arith.divf %25, %26 : vector<8x1xf32>
    %28 = vector.broadcast %27 : vector<8x1xf32> to vector<8x32xf32>
    %29 = arith.subf %17, %28 : vector<8x32xf32>
    %30 = arith.mulf %29, %29 : vector<8x32xf32>
    %cst_15 = arith.constant dense<0.000000e+00> : vector<8xf32>
    %31 = vector.multi_reduction <add>, %30, %cst_15 [1] : vector<8x32xf32> to vector<8xf32>
    %32 = vector.shape_cast %31 : vector<8xf32> to vector<8x1xf32>
    %cst_16 = arith.constant 3.200000e+01 : f32
    %33 = vector.broadcast %cst_16 : f32 to vector<8x1xf32>
    %34 = arith.divf %32, %33 : vector<8x1xf32>
    %cst_17 = arith.constant 9.99999974E-6 : f32
    %35 = vector.broadcast %cst_17 : f32 to vector<8x1xf32>
    %36 = arith.addf %34, %35 : vector<8x1xf32>
    %37 = math.rsqrt %36 : vector<8x1xf32>
    %38 = vector.broadcast %37 : vector<8x1xf32> to vector<8x32xf32>
    %39 = arith.mulf %29, %38 : vector<8x32xf32>
    %40 = vector.broadcast %21 : vector<1x32xf32> to vector<8x32xf32>
    %41 = arith.mulf %39, %40 : vector<8x32xf32>
    %42 = vector.broadcast %23 : vector<1x32xf32> to vector<8x32xf32>
    %43 = arith.addf %41, %42 : vector<8x32xf32>
    %44 = arith.truncf %43 : vector<8x32xf32> to vector<8x32xbf16>
    %45 = arith.truncf %43 : vector<8x32xf32> to vector<8x32xbf16>
    %c0_18 = arith.constant 0 : index
    %c0_19 = arith.constant 0 : index
    %c0_20 = arith.constant 0 : index
    %c0_21 = arith.constant 0 : index
    %46 = vector.load %arg8[%c0_18, %c0_19, %c0_20, %c0_21] : memref<1x2x32x32xbf16, #tpu.memory_space<vmem>>, vector<1x1x32x32xbf16>
    %47 = vector.shape_cast %46 : vector<1x1x32x32xbf16> to vector<32x32xbf16>
    %cst_22 = arith.constant dense<0.000000e+00> : vector<8x32xf32>
    %48 = tpu.matmul %45, %47, %cst_22 {dimension_numbers = #tpu.dot_dimension_numbers<[1], [0], [0], [1], [0, 0, 1, 1], [], []>} : vector<8x32xbf16>, vector<32x32xbf16>, vector<8x32xf32> -> vector<8x32xf32>
    %c0_23 = arith.constant 0 : index
    %c0_24 = arith.constant 0 : index
    %c0_25 = arith.constant 0 : index
    %c0_26 = arith.constant 0 : index
    %49 = vector.load %arg9[%c0_23, %c0_24, %c0_25, %c0_26] : memref<1x2x1x32xf32, #tpu.memory_space<vmem>>, vector<1x1x1x32xf32>
    %50 = vector.shape_cast %49 : vector<1x1x1x32xf32> to vector<1x32xf32>
    %51 = vector.broadcast %50 : vector<1x32xf32> to vector<8x32xf32>
    %52 = arith.addf %48, %51 : vector<8x32xf32>
    %c0_27 = arith.constant 0 : index
    %c0_28 = arith.constant 0 : index
    %c0_29 = arith.constant 0 : index
    %c0_30 = arith.constant 0 : index
    %53 = vector.load %arg10[%c0_27, %c0_28, %c0_29, %c0_30] : memref<1x2x32x64xbf16, #tpu.memory_space<vmem>>, vector<1x1x32x64xbf16>
    %54 = vector.shape_cast %53 : vector<1x1x32x64xbf16> to vector<32x64xbf16>
    %cst_31 = arith.constant dense<0.000000e+00> : vector<8x64xf32>
    %55 = tpu.matmul %44, %54, %cst_31 {dimension_numbers = #tpu.dot_dimension_numbers<[1], [0], [0], [1], [0, 0, 1, 1], [], []>} : vector<8x32xbf16>, vector<32x64xbf16>, vector<8x64xf32> -> vector<8x64xf32>
    %c0_32 = arith.constant 0 : index
    %c0_33 = arith.constant 0 : index
    %c0_34 = arith.constant 0 : index
    %c0_35 = arith.constant 0 : index
    %56 = vector.load %arg11[%c0_32, %c0_33, %c0_34, %c0_35] : memref<1x2x1x64xf32, #tpu.memory_space<vmem>>, vector<1x1x1x64xf32>
    %57 = vector.shape_cast %56 : vector<1x1x1x64xf32> to vector<1x64xf32>
    %58 = vector.broadcast %57 : vector<1x64xf32> to vector<8x64xf32>
    %59 = arith.addf %55, %58 : vector<8x64xf32>
    %60 = vector.extract_strided_slice %59 {offsets = [0, 0], sizes = [8, 32], strides = [1, 1]} : vector<8x64xf32> to vector<8x32xf32>
    %61 = vector.extract_strided_slice %59 {offsets = [0, 32], sizes = [8, 32], strides = [1, 1]} : vector<8x64xf32> to vector<8x32xf32>
    %cst_36 = arith.constant 0.353553385 : f32
    %62 = vector.broadcast %cst_36 : f32 to vector<8x32xf32>
    %63 = arith.mulf %52, %62 : vector<8x32xf32>
    %64 = arith.truncf %63 : vector<8x32xf32> to vector<8x32xbf16>
    %65 = arith.truncf %60 : vector<8x32xf32> to vector<8x32xbf16>
    %66 = arith.truncf %61 : vector<8x32xf32> to vector<8x32xbf16>
    %67 = arith.extui %9 : vector<8x8xi1> to vector<8x8xi32>
    %68 = arith.sitofp %67 : vector<8x8xi32> to vector<8x8xf32>
    %69 = vector.extract_strided_slice %64 {offsets = [0, 0], sizes = [8, 8], strides = [1, 1]} : vector<8x32xbf16> to vector<8x8xbf16>
    %70 = vector.extract_strided_slice %65 {offsets = [0, 0], sizes = [8, 8], strides = [1, 1]} : vector<8x32xbf16> to vector<8x8xbf16>
    %71 = vector.extract_strided_slice %66 {offsets = [0, 0], sizes = [8, 8], strides = [1, 1]} : vector<8x32xbf16> to vector<8x8xbf16>
    %cst_37 = arith.constant dense<0.000000e+00> : vector<8x8xf32>
    %72 = tpu.matmul %69, %70, %cst_37 {dimension_numbers = #tpu.dot_dimension_numbers<[1], [1], [0], [0], [0, 0, 1, 0], [], []>} : vector<8x8xbf16>, vector<8x8xbf16>, vector<8x8xf32> -> vector<8x8xf32>
    %cst_38 = arith.constant -1.000000e+09 : f32
    %73 = vector.broadcast %cst_38 : f32 to vector<8x8xf32>
    %74 = arith.select %9, %72, %73 : vector<8x8xi1>, vector<8x8xf32>
    %cst_39 = arith.constant dense<0xFF800000> : vector<8xf32>
    %75 = vector.multi_reduction <maximumf>, %74, %cst_39 [1] : vector<8x8xf32> to vector<8xf32>
    %76 = vector.shape_cast %75 : vector<8xf32> to vector<8x1xf32>
    %77 = vector.broadcast %76 : vector<8x1xf32> to vector<8x8xf32>
    %78 = arith.subf %74, %77 : vector<8x8xf32>
    %79 = math.exp %78 : vector<8x8xf32>
    %cst_40 = arith.constant dense<0.000000e+00> : vector<8xf32>
    %80 = vector.multi_reduction <add>, %79, %cst_40 [1] : vector<8x8xf32> to vector<8xf32>
    %81 = vector.shape_cast %80 : vector<8xf32> to vector<8x1xf32>
    %82 = tpu.reciprocal %81 {approx = true} : vector<8x1xf32> -> vector<8x1xf32>
    %83 = vector.broadcast %82 : vector<8x1xf32> to vector<8x8xf32>
    %84 = arith.mulf %79, %83 : vector<8x8xf32>
    %85 = arith.mulf %84, %68 : vector<8x8xf32>
    %86 = arith.truncf %85 : vector<8x8xf32> to vector<8x8xbf16>
    %cst_41 = arith.constant dense<0.000000e+00> : vector<8x8xf32>
    %87 = tpu.matmul %86, %71, %cst_41 {dimension_numbers = #tpu.dot_dimension_numbers<[1], [0], [0], [1], [0, 0, 1, 1], [], []>} : vector<8x8xbf16>, vector<8x8xbf16>, vector<8x8xf32> -> vector<8x8xf32>
    %88 = vector.extract_strided_slice %64 {offsets = [0, 8], sizes = [8, 8], strides = [1, 1]} : vector<8x32xbf16> to vector<8x8xbf16>
    %89 = vector.extract_strided_slice %65 {offsets = [0, 8], sizes = [8, 8], strides = [1, 1]} : vector<8x32xbf16> to vector<8x8xbf16>
    %90 = vector.extract_strided_slice %66 {offsets = [0, 8], sizes = [8, 8], strides = [1, 1]} : vector<8x32xbf16> to vector<8x8xbf16>
    %cst_42 = arith.constant dense<0.000000e+00> : vector<8x8xf32>
    %91 = tpu.matmul %88, %89, %cst_42 {dimension_numbers = #tpu.dot_dimension_numbers<[1], [1], [0], [0], [0, 0, 1, 0], [], []>} : vector<8x8xbf16>, vector<8x8xbf16>, vector<8x8xf32> -> vector<8x8xf32>
    %cst_43 = arith.constant -1.000000e+09 : f32
    %92 = vector.broadcast %cst_43 : f32 to vector<8x8xf32>
    %93 = arith.select %9, %91, %92 : vector<8x8xi1>, vector<8x8xf32>
    %cst_44 = arith.constant dense<0xFF800000> : vector<8xf32>
    %94 = vector.multi_reduction <maximumf>, %93, %cst_44 [1] : vector<8x8xf32> to vector<8xf32>
    %95 = vector.shape_cast %94 : vector<8xf32> to vector<8x1xf32>
    %96 = vector.broadcast %95 : vector<8x1xf32> to vector<8x8xf32>
    %97 = arith.subf %93, %96 : vector<8x8xf32>
    %98 = math.exp %97 : vector<8x8xf32>
    %cst_45 = arith.constant dense<0.000000e+00> : vector<8xf32>
    %99 = vector.multi_reduction <add>, %98, %cst_45 [1] : vector<8x8xf32> to vector<8xf32>
    %100 = vector.shape_cast %99 : vector<8xf32> to vector<8x1xf32>
    %101 = tpu.reciprocal %100 {approx = true} : vector<8x1xf32> -> vector<8x1xf32>
    %102 = vector.broadcast %101 : vector<8x1xf32> to vector<8x8xf32>
    %103 = arith.mulf %98, %102 : vector<8x8xf32>
    %104 = arith.mulf %103, %68 : vector<8x8xf32>
    %105 = arith.truncf %104 : vector<8x8xf32> to vector<8x8xbf16>
    %cst_46 = arith.constant dense<0.000000e+00> : vector<8x8xf32>
    %106 = tpu.matmul %105, %90, %cst_46 {dimension_numbers = #tpu.dot_dimension_numbers<[1], [0], [0], [1], [0, 0, 1, 1], [], []>} : vector<8x8xbf16>, vector<8x8xbf16>, vector<8x8xf32> -> vector<8x8xf32>
    %107 = vector.extract_strided_slice %64 {offsets = [0, 16], sizes = [8, 8], strides = [1, 1]} : vector<8x32xbf16> to vector<8x8xbf16>
    %108 = vector.extract_strided_slice %65 {offsets = [0, 16], sizes = [8, 8], strides = [1, 1]} : vector<8x32xbf16> to vector<8x8xbf16>
    %109 = vector.extract_strided_slice %66 {offsets = [0, 16], sizes = [8, 8], strides = [1, 1]} : vector<8x32xbf16> to vector<8x8xbf16>
    %cst_47 = arith.constant dense<0.000000e+00> : vector<8x8xf32>
    %110 = tpu.matmul %107, %108, %cst_47 {dimension_numbers = #tpu.dot_dimension_numbers<[1], [1], [0], [0], [0, 0, 1, 0], [], []>} : vector<8x8xbf16>, vector<8x8xbf16>, vector<8x8xf32> -> vector<8x8xf32>
    %cst_48 = arith.constant -1.000000e+09 : f32
    %111 = vector.broadcast %cst_48 : f32 to vector<8x8xf32>
    %112 = arith.select %9, %110, %111 : vector<8x8xi1>, vector<8x8xf32>
    %cst_49 = arith.constant dense<0xFF800000> : vector<8xf32>
    %113 = vector.multi_reduction <maximumf>, %112, %cst_49 [1] : vector<8x8xf32> to vector<8xf32>
    %114 = vector.shape_cast %113 : vector<8xf32> to vector<8x1xf32>
    %115 = vector.broadcast %114 : vector<8x1xf32> to vector<8x8xf32>
    %116 = arith.subf %112, %115 : vector<8x8xf32>
    %117 = math.exp %116 : vector<8x8xf32>
    %cst_50 = arith.constant dense<0.000000e+00> : vector<8xf32>
    %118 = vector.multi_reduction <add>, %117, %cst_50 [1] : vector<8x8xf32> to vector<8xf32>
    %119 = vector.shape_cast %118 : vector<8xf32> to vector<8x1xf32>
    %120 = tpu.reciprocal %119 {approx = true} : vector<8x1xf32> -> vector<8x1xf32>
    %121 = vector.broadcast %120 : vector<8x1xf32> to vector<8x8xf32>
    %122 = arith.mulf %117, %121 : vector<8x8xf32>
    %123 = arith.mulf %122, %68 : vector<8x8xf32>
    %124 = arith.truncf %123 : vector<8x8xf32> to vector<8x8xbf16>
    %cst_51 = arith.constant dense<0.000000e+00> : vector<8x8xf32>
    %125 = tpu.matmul %124, %109, %cst_51 {dimension_numbers = #tpu.dot_dimension_numbers<[1], [0], [0], [1], [0, 0, 1, 1], [], []>} : vector<8x8xbf16>, vector<8x8xbf16>, vector<8x8xf32> -> vector<8x8xf32>
    %126 = vector.extract_strided_slice %64 {offsets = [0, 24], sizes = [8, 8], strides = [1, 1]} : vector<8x32xbf16> to vector<8x8xbf16>
    %127 = vector.extract_strided_slice %65 {offsets = [0, 24], sizes = [8, 8], strides = [1, 1]} : vector<8x32xbf16> to vector<8x8xbf16>
    %128 = vector.extract_strided_slice %66 {offsets = [0, 24], sizes = [8, 8], strides = [1, 1]} : vector<8x32xbf16> to vector<8x8xbf16>
    %cst_52 = arith.constant dense<0.000000e+00> : vector<8x8xf32>
    %129 = tpu.matmul %126, %127, %cst_52 {dimension_numbers = #tpu.dot_dimension_numbers<[1], [1], [0], [0], [0, 0, 1, 0], [], []>} : vector<8x8xbf16>, vector<8x8xbf16>, vector<8x8xf32> -> vector<8x8xf32>
    %cst_53 = arith.constant -1.000000e+09 : f32
    %130 = vector.broadcast %cst_53 : f32 to vector<8x8xf32>
    %131 = arith.select %9, %129, %130 : vector<8x8xi1>, vector<8x8xf32>
    %cst_54 = arith.constant dense<0xFF800000> : vector<8xf32>
    %132 = vector.multi_reduction <maximumf>, %131, %cst_54 [1] : vector<8x8xf32> to vector<8xf32>
    %133 = vector.shape_cast %132 : vector<8xf32> to vector<8x1xf32>
    %134 = vector.broadcast %133 : vector<8x1xf32> to vector<8x8xf32>
    %135 = arith.subf %131, %134 : vector<8x8xf32>
    %136 = math.exp %135 : vector<8x8xf32>
    %cst_55 = arith.constant dense<0.000000e+00> : vector<8xf32>
    %137 = vector.multi_reduction <add>, %136, %cst_55 [1] : vector<8x8xf32> to vector<8xf32>
    %138 = vector.shape_cast %137 : vector<8xf32> to vector<8x1xf32>
    %139 = tpu.reciprocal %138 {approx = true} : vector<8x1xf32> -> vector<8x1xf32>
    %140 = vector.broadcast %139 : vector<8x1xf32> to vector<8x8xf32>
    %141 = arith.mulf %136, %140 : vector<8x8xf32>
    %142 = arith.mulf %141, %68 : vector<8x8xf32>
    %143 = arith.truncf %142 : vector<8x8xf32> to vector<8x8xbf16>
    %cst_56 = arith.constant dense<0.000000e+00> : vector<8x8xf32>
    %144 = tpu.matmul %143, %128, %cst_56 {dimension_numbers = #tpu.dot_dimension_numbers<[1], [0], [0], [1], [0, 0, 1, 1], [], []>} : vector<8x8xbf16>, vector<8x8xbf16>, vector<8x8xf32> -> vector<8x8xf32>
    %145 = tpu.concatenate %87, %106, %125, %144 in 1 : vector<8x8xf32>, vector<8x8xf32>, vector<8x8xf32>, vector<8x8xf32> -> vector<8x32xf32>
    %146 = arith.truncf %145 : vector<8x32xf32> to vector<8x32xbf16>
    %c0_57 = arith.constant 0 : index
    %c0_58 = arith.constant 0 : index
    %c0_59 = arith.constant 0 : index
    %c0_60 = arith.constant 0 : index
    %147 = vector.load %arg12[%c0_57, %c0_58, %c0_59, %c0_60] : memref<1x2x32x32xbf16, #tpu.memory_space<vmem>>, vector<1x1x32x32xbf16>
    %148 = vector.shape_cast %147 : vector<1x1x32x32xbf16> to vector<32x32xbf16>
    %cst_61 = arith.constant dense<0.000000e+00> : vector<8x32xf32>
    %149 = tpu.matmul %146, %148, %cst_61 {dimension_numbers = #tpu.dot_dimension_numbers<[1], [0], [0], [1], [0, 0, 1, 1], [], []>} : vector<8x32xbf16>, vector<32x32xbf16>, vector<8x32xf32> -> vector<8x32xf32>
    %c0_62 = arith.constant 0 : index
    %c0_63 = arith.constant 0 : index
    %c0_64 = arith.constant 0 : index
    %c0_65 = arith.constant 0 : index
    %150 = vector.load %arg13[%c0_62, %c0_63, %c0_64, %c0_65] : memref<1x2x1x32xf32, #tpu.memory_space<vmem>>, vector<1x1x1x32xf32>
    %151 = vector.shape_cast %150 : vector<1x1x1x32xf32> to vector<1x32xf32>
    %152 = vector.broadcast %151 : vector<1x32xf32> to vector<8x32xf32>
    %153 = arith.addf %149, %152 : vector<8x32xf32>
    %154 = arith.addf %17, %153 : vector<8x32xf32>
    %c0_66 = arith.constant 0 : index
    %c1 = arith.constant 1 : index
    %c0_67 = arith.constant 0 : index
    %c0_68 = arith.constant 0 : index
    %155 = vector.load %arg6[%c0_66, %c1, %c0_67, %c0_68] : memref<1x3x1x32xf32, #tpu.memory_space<vmem>>, vector<1x1x1x32xf32>
    %156 = vector.shape_cast %155 : vector<1x1x1x32xf32> to vector<1x32xf32>
    %c0_69 = arith.constant 0 : index
    %c1_70 = arith.constant 1 : index
    %c0_71 = arith.constant 0 : index
    %c0_72 = arith.constant 0 : index
    %157 = vector.load %arg7[%c0_69, %c1_70, %c0_71, %c0_72] : memref<1x3x1x32xf32, #tpu.memory_space<vmem>>, vector<1x1x1x32xf32>
    %158 = vector.shape_cast %157 : vector<1x1x1x32xf32> to vector<1x32xf32>
    %cst_73 = arith.constant dense<0.000000e+00> : vector<8xf32>
    %159 = vector.multi_reduction <add>, %154, %cst_73 [1] : vector<8x32xf32> to vector<8xf32>
    %160 = vector.shape_cast %159 : vector<8xf32> to vector<8x1xf32>
    %cst_74 = arith.constant 3.200000e+01 : f32
    %161 = vector.broadcast %cst_74 : f32 to vector<8x1xf32>
    %162 = arith.divf %160, %161 : vector<8x1xf32>
    %163 = vector.broadcast %162 : vector<8x1xf32> to vector<8x32xf32>
    %164 = arith.subf %154, %163 : vector<8x32xf32>
    %165 = arith.mulf %164, %164 : vector<8x32xf32>
    %cst_75 = arith.constant dense<0.000000e+00> : vector<8xf32>
    %166 = vector.multi_reduction <add>, %165, %cst_75 [1] : vector<8x32xf32> to vector<8xf32>
    %167 = vector.shape_cast %166 : vector<8xf32> to vector<8x1xf32>
    %cst_76 = arith.constant 3.200000e+01 : f32
    %168 = vector.broadcast %cst_76 : f32 to vector<8x1xf32>
    %169 = arith.divf %167, %168 : vector<8x1xf32>
    %cst_77 = arith.constant 9.99999974E-6 : f32
    %170 = vector.broadcast %cst_77 : f32 to vector<8x1xf32>
    %171 = arith.addf %169, %170 : vector<8x1xf32>
    %172 = math.rsqrt %171 : vector<8x1xf32>
    %173 = vector.broadcast %172 : vector<8x1xf32> to vector<8x32xf32>
    %174 = arith.mulf %164, %173 : vector<8x32xf32>
    %175 = vector.broadcast %156 : vector<1x32xf32> to vector<8x32xf32>
    %176 = arith.mulf %174, %175 : vector<8x32xf32>
    %177 = vector.broadcast %158 : vector<1x32xf32> to vector<8x32xf32>
    %178 = arith.addf %176, %177 : vector<8x32xf32>
    %179 = arith.truncf %178 : vector<8x32xf32> to vector<8x32xbf16>
    %c0_78 = arith.constant 0 : index
    %c1_79 = arith.constant 1 : index
    %c0_80 = arith.constant 0 : index
    %c0_81 = arith.constant 0 : index
    %180 = vector.load %arg8[%c0_78, %c1_79, %c0_80, %c0_81] : memref<1x2x32x32xbf16, #tpu.memory_space<vmem>>, vector<1x1x32x32xbf16>
    %181 = vector.shape_cast %180 : vector<1x1x32x32xbf16> to vector<32x32xbf16>
    %cst_82 = arith.constant dense<0.000000e+00> : vector<8x32xf32>
    %182 = tpu.matmul %179, %181, %cst_82 {dimension_numbers = #tpu.dot_dimension_numbers<[1], [0], [0], [1], [0, 0, 1, 1], [], []>} : vector<8x32xbf16>, vector<32x32xbf16>, vector<8x32xf32> -> vector<8x32xf32>
    %c0_83 = arith.constant 0 : index
    %c1_84 = arith.constant 1 : index
    %c0_85 = arith.constant 0 : index
    %c0_86 = arith.constant 0 : index
    %183 = vector.load %arg9[%c0_83, %c1_84, %c0_85, %c0_86] : memref<1x2x1x32xf32, #tpu.memory_space<vmem>>, vector<1x1x1x32xf32>
    %184 = vector.shape_cast %183 : vector<1x1x1x32xf32> to vector<1x32xf32>
    %185 = vector.broadcast %184 : vector<1x32xf32> to vector<8x32xf32>
    %186 = arith.addf %182, %185 : vector<8x32xf32>
    %c0_87 = arith.constant 0 : index
    %c1_88 = arith.constant 1 : index
    %c0_89 = arith.constant 0 : index
    %c0_90 = arith.constant 0 : index
    %187 = vector.load %arg10[%c0_87, %c1_88, %c0_89, %c0_90] : memref<1x2x32x64xbf16, #tpu.memory_space<vmem>>, vector<1x1x32x64xbf16>
    %188 = vector.shape_cast %187 : vector<1x1x32x64xbf16> to vector<32x64xbf16>
    %cst_91 = arith.constant dense<0.000000e+00> : vector<16x64xf32>
    %189 = tpu.matmul %19, %188, %cst_91 {dimension_numbers = #tpu.dot_dimension_numbers<[1], [0], [0], [1], [0, 0, 1, 1], [], []>} : vector<16x32xbf16>, vector<32x64xbf16>, vector<16x64xf32> -> vector<16x64xf32>
    %c0_92 = arith.constant 0 : index
    %c1_93 = arith.constant 1 : index
    %c0_94 = arith.constant 0 : index
    %c0_95 = arith.constant 0 : index
    %190 = vector.load %arg11[%c0_92, %c1_93, %c0_94, %c0_95] : memref<1x2x1x64xf32, #tpu.memory_space<vmem>>, vector<1x1x1x64xf32>
    %191 = vector.shape_cast %190 : vector<1x1x1x64xf32> to vector<1x64xf32>
    %192 = vector.broadcast %191 : vector<1x64xf32> to vector<16x64xf32>
    %193 = arith.addf %189, %192 : vector<16x64xf32>
    %194 = vector.extract_strided_slice %193 {offsets = [0, 0], sizes = [16, 32], strides = [1, 1]} : vector<16x64xf32> to vector<16x32xf32>
    %195 = vector.extract_strided_slice %193 {offsets = [0, 32], sizes = [16, 32], strides = [1, 1]} : vector<16x64xf32> to vector<16x32xf32>
    %cst_96 = arith.constant 0.353553385 : f32
    %196 = vector.broadcast %cst_96 : f32 to vector<8x32xf32>
    %197 = arith.mulf %186, %196 : vector<8x32xf32>
    %198 = arith.truncf %197 : vector<8x32xf32> to vector<8x32xbf16>
    %199 = arith.truncf %194 : vector<16x32xf32> to vector<16x32xbf16>
    %200 = arith.truncf %195 : vector<16x32xf32> to vector<16x32xbf16>
    %201 = arith.extui %12 : vector<8x16xi1> to vector<8x16xi32>
    %202 = arith.sitofp %201 : vector<8x16xi32> to vector<8x16xf32>
    %203 = vector.extract_strided_slice %198 {offsets = [0, 0], sizes = [8, 8], strides = [1, 1]} : vector<8x32xbf16> to vector<8x8xbf16>
    %204 = vector.extract_strided_slice %199 {offsets = [0, 0], sizes = [16, 8], strides = [1, 1]} : vector<16x32xbf16> to vector<16x8xbf16>
    %205 = vector.extract_strided_slice %200 {offsets = [0, 0], sizes = [16, 8], strides = [1, 1]} : vector<16x32xbf16> to vector<16x8xbf16>
    %cst_97 = arith.constant dense<0.000000e+00> : vector<8x16xf32>
    %206 = tpu.matmul %203, %204, %cst_97 {dimension_numbers = #tpu.dot_dimension_numbers<[1], [1], [0], [0], [0, 0, 1, 0], [], []>} : vector<8x8xbf16>, vector<16x8xbf16>, vector<8x16xf32> -> vector<8x16xf32>
    %cst_98 = arith.constant -1.000000e+09 : f32
    %207 = vector.broadcast %cst_98 : f32 to vector<8x16xf32>
    %208 = arith.select %12, %206, %207 : vector<8x16xi1>, vector<8x16xf32>
    %cst_99 = arith.constant dense<0xFF800000> : vector<8xf32>
    %209 = vector.multi_reduction <maximumf>, %208, %cst_99 [1] : vector<8x16xf32> to vector<8xf32>
    %210 = vector.shape_cast %209 : vector<8xf32> to vector<8x1xf32>
    %211 = vector.broadcast %210 : vector<8x1xf32> to vector<8x16xf32>
    %212 = arith.subf %208, %211 : vector<8x16xf32>
    %213 = math.exp %212 : vector<8x16xf32>
    %cst_100 = arith.constant dense<0.000000e+00> : vector<8xf32>
    %214 = vector.multi_reduction <add>, %213, %cst_100 [1] : vector<8x16xf32> to vector<8xf32>
    %215 = vector.shape_cast %214 : vector<8xf32> to vector<8x1xf32>
    %216 = tpu.reciprocal %215 {approx = true} : vector<8x1xf32> -> vector<8x1xf32>
    %217 = vector.broadcast %216 : vector<8x1xf32> to vector<8x16xf32>
    %218 = arith.mulf %213, %217 : vector<8x16xf32>
    %219 = arith.mulf %218, %202 : vector<8x16xf32>
    %220 = arith.truncf %219 : vector<8x16xf32> to vector<8x16xbf16>
    %cst_101 = arith.constant dense<0.000000e+00> : vector<8x8xf32>
    %221 = tpu.matmul %220, %205, %cst_101 {dimension_numbers = #tpu.dot_dimension_numbers<[1], [0], [0], [1], [0, 0, 1, 1], [], []>} : vector<8x16xbf16>, vector<16x8xbf16>, vector<8x8xf32> -> vector<8x8xf32>
    %222 = vector.extract_strided_slice %198 {offsets = [0, 8], sizes = [8, 8], strides = [1, 1]} : vector<8x32xbf16> to vector<8x8xbf16>
    %223 = vector.extract_strided_slice %199 {offsets = [0, 8], sizes = [16, 8], strides = [1, 1]} : vector<16x32xbf16> to vector<16x8xbf16>
    %224 = vector.extract_strided_slice %200 {offsets = [0, 8], sizes = [16, 8], strides = [1, 1]} : vector<16x32xbf16> to vector<16x8xbf16>
    %cst_102 = arith.constant dense<0.000000e+00> : vector<8x16xf32>
    %225 = tpu.matmul %222, %223, %cst_102 {dimension_numbers = #tpu.dot_dimension_numbers<[1], [1], [0], [0], [0, 0, 1, 0], [], []>} : vector<8x8xbf16>, vector<16x8xbf16>, vector<8x16xf32> -> vector<8x16xf32>
    %cst_103 = arith.constant -1.000000e+09 : f32
    %226 = vector.broadcast %cst_103 : f32 to vector<8x16xf32>
    %227 = arith.select %12, %225, %226 : vector<8x16xi1>, vector<8x16xf32>
    %cst_104 = arith.constant dense<0xFF800000> : vector<8xf32>
    %228 = vector.multi_reduction <maximumf>, %227, %cst_104 [1] : vector<8x16xf32> to vector<8xf32>
    %229 = vector.shape_cast %228 : vector<8xf32> to vector<8x1xf32>
    %230 = vector.broadcast %229 : vector<8x1xf32> to vector<8x16xf32>
    %231 = arith.subf %227, %230 : vector<8x16xf32>
    %232 = math.exp %231 : vector<8x16xf32>
    %cst_105 = arith.constant dense<0.000000e+00> : vector<8xf32>
    %233 = vector.multi_reduction <add>, %232, %cst_105 [1] : vector<8x16xf32> to vector<8xf32>
    %234 = vector.shape_cast %233 : vector<8xf32> to vector<8x1xf32>
    %235 = tpu.reciprocal %234 {approx = true} : vector<8x1xf32> -> vector<8x1xf32>
    %236 = vector.broadcast %235 : vector<8x1xf32> to vector<8x16xf32>
    %237 = arith.mulf %232, %236 : vector<8x16xf32>
    %238 = arith.mulf %237, %202 : vector<8x16xf32>
    %239 = arith.truncf %238 : vector<8x16xf32> to vector<8x16xbf16>
    %cst_106 = arith.constant dense<0.000000e+00> : vector<8x8xf32>
    %240 = tpu.matmul %239, %224, %cst_106 {dimension_numbers = #tpu.dot_dimension_numbers<[1], [0], [0], [1], [0, 0, 1, 1], [], []>} : vector<8x16xbf16>, vector<16x8xbf16>, vector<8x8xf32> -> vector<8x8xf32>
    %241 = vector.extract_strided_slice %198 {offsets = [0, 16], sizes = [8, 8], strides = [1, 1]} : vector<8x32xbf16> to vector<8x8xbf16>
    %242 = vector.extract_strided_slice %199 {offsets = [0, 16], sizes = [16, 8], strides = [1, 1]} : vector<16x32xbf16> to vector<16x8xbf16>
    %243 = vector.extract_strided_slice %200 {offsets = [0, 16], sizes = [16, 8], strides = [1, 1]} : vector<16x32xbf16> to vector<16x8xbf16>
    %cst_107 = arith.constant dense<0.000000e+00> : vector<8x16xf32>
    %244 = tpu.matmul %241, %242, %cst_107 {dimension_numbers = #tpu.dot_dimension_numbers<[1], [1], [0], [0], [0, 0, 1, 0], [], []>} : vector<8x8xbf16>, vector<16x8xbf16>, vector<8x16xf32> -> vector<8x16xf32>
    %cst_108 = arith.constant -1.000000e+09 : f32
    %245 = vector.broadcast %cst_108 : f32 to vector<8x16xf32>
    %246 = arith.select %12, %244, %245 : vector<8x16xi1>, vector<8x16xf32>
    %cst_109 = arith.constant dense<0xFF800000> : vector<8xf32>
    %247 = vector.multi_reduction <maximumf>, %246, %cst_109 [1] : vector<8x16xf32> to vector<8xf32>
    %248 = vector.shape_cast %247 : vector<8xf32> to vector<8x1xf32>
    %249 = vector.broadcast %248 : vector<8x1xf32> to vector<8x16xf32>
    %250 = arith.subf %246, %249 : vector<8x16xf32>
    %251 = math.exp %250 : vector<8x16xf32>
    %cst_110 = arith.constant dense<0.000000e+00> : vector<8xf32>
    %252 = vector.multi_reduction <add>, %251, %cst_110 [1] : vector<8x16xf32> to vector<8xf32>
    %253 = vector.shape_cast %252 : vector<8xf32> to vector<8x1xf32>
    %254 = tpu.reciprocal %253 {approx = true} : vector<8x1xf32> -> vector<8x1xf32>
    %255 = vector.broadcast %254 : vector<8x1xf32> to vector<8x16xf32>
    %256 = arith.mulf %251, %255 : vector<8x16xf32>
    %257 = arith.mulf %256, %202 : vector<8x16xf32>
    %258 = arith.truncf %257 : vector<8x16xf32> to vector<8x16xbf16>
    %cst_111 = arith.constant dense<0.000000e+00> : vector<8x8xf32>
    %259 = tpu.matmul %258, %243, %cst_111 {dimension_numbers = #tpu.dot_dimension_numbers<[1], [0], [0], [1], [0, 0, 1, 1], [], []>} : vector<8x16xbf16>, vector<16x8xbf16>, vector<8x8xf32> -> vector<8x8xf32>
    %260 = vector.extract_strided_slice %198 {offsets = [0, 24], sizes = [8, 8], strides = [1, 1]} : vector<8x32xbf16> to vector<8x8xbf16>
    %261 = vector.extract_strided_slice %199 {offsets = [0, 24], sizes = [16, 8], strides = [1, 1]} : vector<16x32xbf16> to vector<16x8xbf16>
    %262 = vector.extract_strided_slice %200 {offsets = [0, 24], sizes = [16, 8], strides = [1, 1]} : vector<16x32xbf16> to vector<16x8xbf16>
    %cst_112 = arith.constant dense<0.000000e+00> : vector<8x16xf32>
    %263 = tpu.matmul %260, %261, %cst_112 {dimension_numbers = #tpu.dot_dimension_numbers<[1], [1], [0], [0], [0, 0, 1, 0], [], []>} : vector<8x8xbf16>, vector<16x8xbf16>, vector<8x16xf32> -> vector<8x16xf32>
    %cst_113 = arith.constant -1.000000e+09 : f32
    %264 = vector.broadcast %cst_113 : f32 to vector<8x16xf32>
    %265 = arith.select %12, %263, %264 : vector<8x16xi1>, vector<8x16xf32>
    %cst_114 = arith.constant dense<0xFF800000> : vector<8xf32>
    %266 = vector.multi_reduction <maximumf>, %265, %cst_114 [1] : vector<8x16xf32> to vector<8xf32>
    %267 = vector.shape_cast %266 : vector<8xf32> to vector<8x1xf32>
    %268 = vector.broadcast %267 : vector<8x1xf32> to vector<8x16xf32>
    %269 = arith.subf %265, %268 : vector<8x16xf32>
    %270 = math.exp %269 : vector<8x16xf32>
    %cst_115 = arith.constant dense<0.000000e+00> : vector<8xf32>
    %271 = vector.multi_reduction <add>, %270, %cst_115 [1] : vector<8x16xf32> to vector<8xf32>
    %272 = vector.shape_cast %271 : vector<8xf32> to vector<8x1xf32>
    %273 = tpu.reciprocal %272 {approx = true} : vector<8x1xf32> -> vector<8x1xf32>
    %274 = vector.broadcast %273 : vector<8x1xf32> to vector<8x16xf32>
    %275 = arith.mulf %270, %274 : vector<8x16xf32>
    %276 = arith.mulf %275, %202 : vector<8x16xf32>
    %277 = arith.truncf %276 : vector<8x16xf32> to vector<8x16xbf16>
    %cst_116 = arith.constant dense<0.000000e+00> : vector<8x8xf32>
    %278 = tpu.matmul %277, %262, %cst_116 {dimension_numbers = #tpu.dot_dimension_numbers<[1], [0], [0], [1], [0, 0, 1, 1], [], []>} : vector<8x16xbf16>, vector<16x8xbf16>, vector<8x8xf32> -> vector<8x8xf32>
    %279 = tpu.concatenate %221, %240, %259, %278 in 1 : vector<8x8xf32>, vector<8x8xf32>, vector<8x8xf32>, vector<8x8xf32> -> vector<8x32xf32>
    %280 = arith.truncf %279 : vector<8x32xf32> to vector<8x32xbf16>
    %c0_117 = arith.constant 0 : index
    %c1_118 = arith.constant 1 : index
    %c0_119 = arith.constant 0 : index
    %c0_120 = arith.constant 0 : index
    %281 = vector.load %arg12[%c0_117, %c1_118, %c0_119, %c0_120] : memref<1x2x32x32xbf16, #tpu.memory_space<vmem>>, vector<1x1x32x32xbf16>
    %282 = vector.shape_cast %281 : vector<1x1x32x32xbf16> to vector<32x32xbf16>
    %cst_121 = arith.constant dense<0.000000e+00> : vector<8x32xf32>
    %283 = tpu.matmul %280, %282, %cst_121 {dimension_numbers = #tpu.dot_dimension_numbers<[1], [0], [0], [1], [0, 0, 1, 1], [], []>} : vector<8x32xbf16>, vector<32x32xbf16>, vector<8x32xf32> -> vector<8x32xf32>
    %c0_122 = arith.constant 0 : index
    %c1_123 = arith.constant 1 : index
    %c0_124 = arith.constant 0 : index
    %c0_125 = arith.constant 0 : index
    %284 = vector.load %arg13[%c0_122, %c1_123, %c0_124, %c0_125] : memref<1x2x1x32xf32, #tpu.memory_space<vmem>>, vector<1x1x1x32xf32>
    %285 = vector.shape_cast %284 : vector<1x1x1x32xf32> to vector<1x32xf32>
    %286 = vector.broadcast %285 : vector<1x32xf32> to vector<8x32xf32>
    %287 = arith.addf %283, %286 : vector<8x32xf32>
    %288 = arith.addf %154, %287 : vector<8x32xf32>
    %c0_126 = arith.constant 0 : index
    %c2 = arith.constant 2 : index
    %c0_127 = arith.constant 0 : index
    %c0_128 = arith.constant 0 : index
    %289 = vector.load %arg6[%c0_126, %c2, %c0_127, %c0_128] : memref<1x3x1x32xf32, #tpu.memory_space<vmem>>, vector<1x1x1x32xf32>
    %290 = vector.shape_cast %289 : vector<1x1x1x32xf32> to vector<1x32xf32>
    %c0_129 = arith.constant 0 : index
    %c2_130 = arith.constant 2 : index
    %c0_131 = arith.constant 0 : index
    %c0_132 = arith.constant 0 : index
    %291 = vector.load %arg7[%c0_129, %c2_130, %c0_131, %c0_132] : memref<1x3x1x32xf32, #tpu.memory_space<vmem>>, vector<1x1x1x32xf32>
    %292 = vector.shape_cast %291 : vector<1x1x1x32xf32> to vector<1x32xf32>
    %cst_133 = arith.constant dense<0.000000e+00> : vector<8xf32>
    %293 = vector.multi_reduction <add>, %288, %cst_133 [1] : vector<8x32xf32> to vector<8xf32>
    %294 = vector.shape_cast %293 : vector<8xf32> to vector<8x1xf32>
    %cst_134 = arith.constant 3.200000e+01 : f32
    %295 = vector.broadcast %cst_134 : f32 to vector<8x1xf32>
    %296 = arith.divf %294, %295 : vector<8x1xf32>
    %297 = vector.broadcast %296 : vector<8x1xf32> to vector<8x32xf32>
    %298 = arith.subf %288, %297 : vector<8x32xf32>
    %299 = arith.mulf %298, %298 : vector<8x32xf32>
    %cst_135 = arith.constant dense<0.000000e+00> : vector<8xf32>
    %300 = vector.multi_reduction <add>, %299, %cst_135 [1] : vector<8x32xf32> to vector<8xf32>
    %301 = vector.shape_cast %300 : vector<8xf32> to vector<8x1xf32>
    %cst_136 = arith.constant 3.200000e+01 : f32
    %302 = vector.broadcast %cst_136 : f32 to vector<8x1xf32>
    %303 = arith.divf %301, %302 : vector<8x1xf32>
    %cst_137 = arith.constant 9.99999974E-6 : f32
    %304 = vector.broadcast %cst_137 : f32 to vector<8x1xf32>
    %305 = arith.addf %303, %304 : vector<8x1xf32>
    %306 = math.rsqrt %305 : vector<8x1xf32>
    %307 = vector.broadcast %306 : vector<8x1xf32> to vector<8x32xf32>
    %308 = arith.mulf %298, %307 : vector<8x32xf32>
    %309 = vector.broadcast %290 : vector<1x32xf32> to vector<8x32xf32>
    %310 = arith.mulf %308, %309 : vector<8x32xf32>
    %311 = vector.broadcast %292 : vector<1x32xf32> to vector<8x32xf32>
    %312 = arith.addf %310, %311 : vector<8x32xf32>
    %313 = arith.truncf %312 : vector<8x32xf32> to vector<8x32xbf16>
    %c0_138 = arith.constant 0 : index
    %c0_139 = arith.constant 0 : index
    %c0_140 = arith.constant 0 : index
    %314 = vector.load %arg14[%c0_138, %c0_139, %c0_140] : memref<1x32x64xbf16, #tpu.memory_space<vmem>>, vector<1x32x64xbf16>
    %315 = vector.shape_cast %314 : vector<1x32x64xbf16> to vector<32x64xbf16>
    %cst_141 = arith.constant dense<0.000000e+00> : vector<8x64xf32>
    %316 = tpu.matmul %313, %315, %cst_141 {dimension_numbers = #tpu.dot_dimension_numbers<[1], [0], [0], [1], [0, 0, 1, 1], [], []>} : vector<8x32xbf16>, vector<32x64xbf16>, vector<8x64xf32> -> vector<8x64xf32>
    %c0_142 = arith.constant 0 : index
    %c0_143 = arith.constant 0 : index
    %c0_144 = arith.constant 0 : index
    %317 = vector.load %arg15[%c0_142, %c0_143, %c0_144] : memref<1x1x64xf32, #tpu.memory_space<vmem>>, vector<1x1x64xf32>
    %318 = vector.shape_cast %317 : vector<1x1x64xf32> to vector<1x64xf32>
    %319 = vector.broadcast %318 : vector<1x64xf32> to vector<8x64xf32>
    %320 = arith.addf %316, %319 : vector<8x64xf32>
    %cst_145 = arith.constant 0.000000e+00 : f32
    %321 = vector.broadcast %cst_145 : f32 to vector<8x64xf32>
    %322 = arith.maximumf %320, %321 : vector<8x64xf32>
    %323 = arith.truncf %322 : vector<8x64xf32> to vector<8x64xbf16>
    %c0_146 = arith.constant 0 : index
    %c0_147 = arith.constant 0 : index
    %c0_148 = arith.constant 0 : index
    %324 = vector.load %arg16[%c0_146, %c0_147, %c0_148] : memref<1x64x32xbf16, #tpu.memory_space<vmem>>, vector<1x64x32xbf16>
    %325 = vector.shape_cast %324 : vector<1x64x32xbf16> to vector<64x32xbf16>
    %cst_149 = arith.constant dense<0.000000e+00> : vector<8x32xf32>
    %326 = tpu.matmul %323, %325, %cst_149 {dimension_numbers = #tpu.dot_dimension_numbers<[1], [0], [0], [1], [0, 0, 1, 1], [], []>} : vector<8x64xbf16>, vector<64x32xbf16>, vector<8x32xf32> -> vector<8x32xf32>
    %327 = arith.addf %288, %326 : vector<8x32xf32>
    %c0_150 = arith.constant 0 : index
    %c0_151 = arith.constant 0 : index
    %c0_152 = arith.constant 0 : index
    %328 = vector.load %arg17[%c0_150, %c0_151, %c0_152] : memref<1x1x32xf32, #tpu.memory_space<vmem>>, vector<1x1x32xf32>
    %329 = vector.shape_cast %328 : vector<1x1x32xf32> to vector<1x32xf32>
    %330 = vector.broadcast %329 : vector<1x32xf32> to vector<8x32xf32>
    %331 = arith.addf %327, %330 : vector<8x32xf32>
    %c0_153 = arith.constant 0 : index
    %c0_154 = arith.constant 0 : index
    %c0_155 = arith.constant 0 : index
    %332 = vector.load %arg18[%c0_153, %c0_154, %c0_155] : memref<1x8x32xf32, #tpu.memory_space<vmem>>, vector<1x8x32xf32>
    %333 = vector.shape_cast %332 : vector<1x8x32xf32> to vector<8x32xf32>
    %334 = vector.shape_cast %331 : vector<8x32xf32> to vector<1x8x32xf32>
    tpu.vector_store %arg18[%c0_153, %c0_154, %c0_155], %334 {strides = array<i32>} : memref<1x8x32xf32, #tpu.memory_space<vmem>>, vector<1x8x32xf32>,
    return
  }
  func.func @transform_0(%arg0: i32, %arg1: i32, %arg2: memref<2xi32, #tpu.memory_space<smem>>, %arg3: memref<2xi32, #tpu.memory_space<smem>>) -> (i32, i32, i32) {
    %c0_i32 = arith.constant 0 : i32
    %c0_i32_0 = arith.constant 0 : i32
    %c0_i32_1 = arith.constant 0 : i32
    return %arg0, %c0_i32, %c0_i32_0 : i32, i32, i32
  }
  func.func @transform_1(%arg0: i32, %arg1: i32, %arg2: memref<2xi32, #tpu.memory_space<smem>>, %arg3: memref<2xi32, #tpu.memory_space<smem>>) -> (i32, i32, i32) {
    %c0_i32 = arith.constant 0 : i32
    %c0_i32_0 = arith.constant 0 : i32
    %c0_i32_1 = arith.constant 0 : i32
    return %arg0, %c0_i32, %c0_i32_0 : i32, i32, i32
  }
  func.func @transform_2(%arg0: i32, %arg1: i32, %arg2: memref<2xi32, #tpu.memory_space<smem>>, %arg3: memref<2xi32, #tpu.memory_space<smem>>) -> (i32, i32, i32, i32) {
    %c0_i32 = arith.constant 0 : i32
    %c0_i32_0 = arith.constant 0 : i32
    %c0_i32_1 = arith.constant 0 : i32
    %c0_i32_2 = arith.constant 0 : i32
    return %arg1, %c0_i32, %c0_i32_0, %c0_i32_1 : i32, i32, i32, i32
  }
  func.func @transform_3(%arg0: i32, %arg1: i32, %arg2: memref<2xi32, #tpu.memory_space<smem>>, %arg3: memref<2xi32, #tpu.memory_space<smem>>) -> (i32, i32, i32, i32) {
    %c0_i32 = arith.constant 0 : i32
    %c0_i32_0 = arith.constant 0 : i32
    %c0_i32_1 = arith.constant 0 : i32
    %c0_i32_2 = arith.constant 0 : i32
    return %arg1, %c0_i32, %c0_i32_0, %c0_i32_1 : i32, i32, i32, i32
  }
  func.func @transform_4(%arg0: i32, %arg1: i32, %arg2: memref<2xi32, #tpu.memory_space<smem>>, %arg3: memref<2xi32, #tpu.memory_space<smem>>) -> (i32, i32, i32, i32) {
    %c0_i32 = arith.constant 0 : i32
    %c0_i32_0 = arith.constant 0 : i32
    %c0_i32_1 = arith.constant 0 : i32
    %c0_i32_2 = arith.constant 0 : i32
    return %arg1, %c0_i32, %c0_i32_0, %c0_i32_1 : i32, i32, i32, i32
  }
  func.func @transform_5(%arg0: i32, %arg1: i32, %arg2: memref<2xi32, #tpu.memory_space<smem>>, %arg3: memref<2xi32, #tpu.memory_space<smem>>) -> (i32, i32, i32, i32) {
    %c0_i32 = arith.constant 0 : i32
    %c0_i32_0 = arith.constant 0 : i32
    %c0_i32_1 = arith.constant 0 : i32
    %c0_i32_2 = arith.constant 0 : i32
    return %arg1, %c0_i32, %c0_i32_0, %c0_i32_1 : i32, i32, i32, i32
  }
  func.func @transform_6(%arg0: i32, %arg1: i32, %arg2: memref<2xi32, #tpu.memory_space<smem>>, %arg3: memref<2xi32, #tpu.memory_space<smem>>) -> (i32, i32, i32, i32) {
    %c0_i32 = arith.constant 0 : i32
    %c0_i32_0 = arith.constant 0 : i32
    %c0_i32_1 = arith.constant 0 : i32
    %c0_i32_2 = arith.constant 0 : i32
    return %arg1, %c0_i32, %c0_i32_0, %c0_i32_1 : i32, i32, i32, i32
  }
  func.func @transform_7(%arg0: i32, %arg1: i32, %arg2: memref<2xi32, #tpu.memory_space<smem>>, %arg3: memref<2xi32, #tpu.memory_space<smem>>) -> (i32, i32, i32, i32) {
    %c0_i32 = arith.constant 0 : i32
    %c0_i32_0 = arith.constant 0 : i32
    %c0_i32_1 = arith.constant 0 : i32
    %c0_i32_2 = arith.constant 0 : i32
    return %arg1, %c0_i32, %c0_i32_0, %c0_i32_1 : i32, i32, i32, i32
  }
  func.func @transform_8(%arg0: i32, %arg1: i32, %arg2: memref<2xi32, #tpu.memory_space<smem>>, %arg3: memref<2xi32, #tpu.memory_space<smem>>) -> (i32, i32, i32, i32) {
    %c0_i32 = arith.constant 0 : i32
    %c0_i32_0 = arith.constant 0 : i32
    %c0_i32_1 = arith.constant 0 : i32
    %c0_i32_2 = arith.constant 0 : i32
    return %arg1, %c0_i32, %c0_i32_0, %c0_i32_1 : i32, i32, i32, i32
  }
  func.func @transform_9(%arg0: i32, %arg1: i32, %arg2: memref<2xi32, #tpu.memory_space<smem>>, %arg3: memref<2xi32, #tpu.memory_space<smem>>) -> (i32, i32, i32, i32) {
    %c0_i32 = arith.constant 0 : i32
    %c0_i32_0 = arith.constant 0 : i32
    %c0_i32_1 = arith.constant 0 : i32
    %c0_i32_2 = arith.constant 0 : i32
    return %arg1, %c0_i32, %c0_i32_0, %c0_i32_1 : i32, i32, i32, i32
  }
  func.func @transform_10(%arg0: i32, %arg1: i32, %arg2: memref<2xi32, #tpu.memory_space<smem>>, %arg3: memref<2xi32, #tpu.memory_space<smem>>) -> (i32, i32, i32) {
    %c0_i32 = arith.constant 0 : i32
    %c0_i32_0 = arith.constant 0 : i32
    %c0_i32_1 = arith.constant 0 : i32
    return %arg1, %c0_i32, %c0_i32_0 : i32, i32, i32
  }
  func.func @transform_11(%arg0: i32, %arg1: i32, %arg2: memref<2xi32, #tpu.memory_space<smem>>, %arg3: memref<2xi32, #tpu.memory_space<smem>>) -> (i32, i32, i32) {
    %c0_i32 = arith.constant 0 : i32
    %c0_i32_0 = arith.constant 0 : i32
    %c0_i32_1 = arith.constant 0 : i32
    return %arg1, %c0_i32, %c0_i32_0 : i32, i32, i32
  }
  func.func @transform_12(%arg0: i32, %arg1: i32, %arg2: memref<2xi32, #tpu.memory_space<smem>>, %arg3: memref<2xi32, #tpu.memory_space<smem>>) -> (i32, i32, i32) {
    %c0_i32 = arith.constant 0 : i32
    %c0_i32_0 = arith.constant 0 : i32
    %c0_i32_1 = arith.constant 0 : i32
    return %arg1, %c0_i32, %c0_i32_0 : i32, i32, i32
  }
  func.func @transform_13(%arg0: i32, %arg1: i32, %arg2: memref<2xi32, #tpu.memory_space<smem>>, %arg3: memref<2xi32, #tpu.memory_space<smem>>) -> (i32, i32, i32) {
    %c0_i32 = arith.constant 0 : i32
    %c0_i32_0 = arith.constant 0 : i32
    %c0_i32_1 = arith.constant 0 : i32
    return %arg1, %c0_i32, %c0_i32_0 : i32, i32, i32
  }
  func.func @transform_14(%arg0: i32, %arg1: i32, %arg2: memref<2xi32, #tpu.memory_space<smem>>, %arg3: memref<2xi32, #tpu.memory_space<smem>>) -> (i32, i32, i32) {
    %c0_i32 = arith.constant 0 : i32
    %c0_i32_0 = arith.constant 0 : i32
    %c0_i32_1 = arith.constant 0 : i32
    return %arg0, %c0_i32, %c0_i32_0 : i32, i32, i32
  }
}

</mosaic_0001>

<llo_original>
// kernel: tpu_custom_call.1
$region0: #{tpu_custom_call.1}
  #allocation0 [shape = 'u32[]', space=smem, size = 0x4, offset = 0x4, fixed_abs, tag = 'smem constant byte address 0x4 - core index']
  #allocation1 [shape = 'u32[144,128]{1,0:T(1,128)}', space=vmem, size = 0x12000, scoped, tag = 'internal scratch']
  #allocation2 [shape = 's32[1]{0}', space=sflag, size = 0x4, scoped, tag = 'scoped memory for tpu_custom_call.1']
  #allocation3 [shape = 'u8[512]{0}', space=smem, size = 0x200, scoped, tag = 'prefetched SMEM operand 0']
  #allocation4 [shape = 'u8[512]{0}', space=smem, size = 0x200, scoped, tag = 'prefetched SMEM operand 1']
  %s0 = inlined_call_operand.hbm [shape: s32[2], index: 0, kind: input, shape index: {}]
  %s1 = inlined_call_operand.hbm [shape: s32[2], index: 1, kind: input, shape index: {}]
  %s2 = inlined_call_operand.hbm [shape: f32[2,8,32], index: 2, kind: input, shape index: {}]
  %s3 = inlined_call_operand.hbm [shape: bf16[2,16,32], index: 3, kind: input, shape index: {}]
  %s4 = inlined_call_operand.vmem [shape: f32[2,3,1,32], index: 4, kind: input, shape index: {}]
  %s5 = inlined_call_operand.hbm [shape: f32[2,3,1,32], index: 5, kind: input, shape index: {}]
  %s6 = inlined_call_operand.vmem [shape: bf16[2,2,32,32], index: 6, kind: input, shape index: {}]
  %s7 = inlined_call_operand.vmem [shape: f32[2,2,1,32], index: 7, kind: input, shape index: {}]
  %s8 = inlined_call_operand.hbm [shape: bf16[2,2,32,64], index: 8, kind: input, shape index: {}]
  %s9 = inlined_call_operand.vmem [shape: f32[2,2,1,64], index: 9, kind: input, shape index: {}]
  %s10 = inlined_call_operand.hbm [shape: bf16[2,2,32,32], index: 10, kind: input, shape index: {}]
  %s11 = inlined_call_operand.vmem [shape: f32[2,2,1,32], index: 11, kind: input, shape index: {}]
  %s12 = inlined_call_operand.vmem [shape: bf16[2,32,64], index: 12, kind: input, shape index: {}]
  %s13 = inlined_call_operand.vmem [shape: f32[2,1,64], index: 13, kind: input, shape index: {}]
  %s14 = inlined_call_operand.vmem [shape: bf16[2,64,32], index: 14, kind: input, shape index: {}]
  %s15 = inlined_call_operand.vmem [shape: f32[2,1,32], index: 15, kind: input, shape index: {}]
  %s16 = inlined_call_operand.hbm [shape: f32[2,8,32], index: 16, kind: output, shape index: {}]
  %s17 = sld [smem:[#allocation0]]
  $region113: #{tpu_custom_call.1} parent=0
    _
  %s19 = ssub.s32 1, %s17
  %s20 = scalar_select 0, %s19, %s17
  %22 = dma.hbm_to_smem %s0, 16, [#allocation3], [#allocation2]
  %24 = dma.hbm_to_smem %s1, 16, [#allocation4], [#allocation2]
  %25 = dma.done [#allocation2], 32
  %26 = sfence
  $region1: #{tpu_custom_call.1} parent=0
    #allocation5 [shape = 'u8[8192]{0}', space=vmem, size = 0x2000, scoped, tag = 'input window, operand 2']
    #allocation6 [shape = 's32[2]{0}', space=sflag, size = 0x8, scoped, tag = 'scoped memory for tpu_custom_call.1']
    #allocation7 [shape = 's32[2]{0}', space=sflag, size = 0x8, scoped, tag = 'scoped memory for tpu_custom_call.1']
    #allocation8 [shape = 'u8[8192]{0}', space=vmem, size = 0x2000, scoped, tag = 'input window, operand 3']
    #allocation9 [shape = 's32[2]{0}', space=sflag, size = 0x8, scoped, tag = 'scoped memory for tpu_custom_call.1']
    #allocation10 [shape = 'u8[3072]{0}', space=vmem, size = 0xc00, scoped, tag = 'input window, operand 5']
    #allocation11 [shape = 'u8[32768]{0}', space=vmem, size = 0x8000, scoped, tag = 'input window, operand 8']
    #allocation12 [shape = 's32[2]{0}', space=sflag, size = 0x8, scoped, tag = 'scoped memory for tpu_custom_call.1']
    #allocation13 [shape = 'u8[32768]{0}', space=vmem, size = 0x8000, scoped, tag = 'input window, operand 10']
    #allocation14 [shape = 'u8[8192]{0}', space=vmem, size = 0x2000, scoped, tag = 'output window, operand 0']
    %27 = vsyncpa [#allocation6], 0
    %s28 = scalar_lea.sflag [#allocation6], 1
    %29 = vsyncpa %s28, 0
    %30 = vsyncpa [#allocation9], 0
    %s31 = scalar_lea.sflag [#allocation9], 1
    %32 = vsyncpa %s31, 0
    %33 = vsyncpa [#allocation12], 0
    %s34 = scalar_lea.sflag [#allocation12], 1
    %35 = vsyncpa %s34, 0
    %36 = vsyncpa [#allocation7], 0
    %s37 = scalar_lea.sflag [#allocation7], 1
    %38 = vsyncpa %s37, 0
    loop: start=0, step=1, limit=6
    $region2: #{tpu_custom_call.1} parent=1 // loop_pre_header
      _
    $region3: #{tpu_custom_call.1} parent=1 // loop_header
      %s40 = sphi 0, %s44
      %p41 = scmp.ge.s32.totalorder %s40, 6
      %s47 = sphi 0, %s59
      %s48 = sphi 0, %s55
      %s49 = sphi 0, %s47
      %s50 = sphi 0, %s48
      %s51 = sphi 0, %s49
      %s52 = sphi 0, %s50
      %s62 = sphi 0, %s64
      %s65 = sphi 0, %s62
      %s66 = sphi 0, %s65
      %s82 = sphi 0, %s66
      %s88 = sphi 0, %s90
      %s91 = sphi 0, %s88
      %s92 = sphi 0, %s91
      %s108 = sphi 0, %s92
      %s114 = sphi 0, %s116
      %s117 = sphi 0, %s114
      %s118 = sphi 0, %s117
      %s134 = sphi 0, %s118
      %s140 = sphi 0, %s142
      %s143 = sphi 0, %s140
      %s144 = sphi 0, %s143
      %s160 = sphi 0, %s144
      %s166 = sphi 0, %s168
      %s169 = sphi 0, %s166
      %s170 = sphi 0, %s169
      %s186 = sphi 0, %s170
      %s192 = sphi 0, %s194
      %s195 = sphi 0, %s192
      %s196 = sphi 0, %s195
      %s212 = sphi 0, %s196
      %s218 = sphi 0, %s220
      %s221 = sphi 0, %s218
      %s222 = sphi 0, %s221
      %s238 = sphi 0, %s222
      %s244 = sphi 0, %s246
      %s247 = sphi 0, %s244
      %s248 = sphi 0, %s247
      %s264 = sphi 0, %s248
      %s270 = sphi 0, %s272
      %s273 = sphi 0, %s270
      %s274 = sphi 0, %s273
      %s290 = sphi 0, %s274
      %s296 = sphi 0, %s298
      %s299 = sphi 0, %s296
      %s300 = sphi 0, %s299
      %s316 = sphi 0, %s300
      %s322 = sphi 0, %s324
      %s325 = sphi 0, %s322
      %s326 = sphi 0, %s325
      %s342 = sphi 0, %s326
      %s348 = sphi 0, %s350
      %s351 = sphi 0, %s348
      %s352 = sphi 0, %s351
      %s368 = sphi 0, %s352
      %s374 = sphi 0, %s376
      %s377 = sphi 0, %s374
      %s378 = sphi 0, %s377
      %s394 = sphi 0, %s378
      %s400 = sphi 0, %s402
      %s403 = sphi 0, %s400
      %s404 = sphi 0, %s403
      %s420 = sphi 0, %s404
      %s426 = sphi 0, %s428
      %s429 = sphi 0, %s426
      %s430 = sphi 0, %s429
      %s446 = sphi 0, %s430
    $region4: #{tpu_custom_call.1} parent=1 // loop_header_branch
      %43 = sbr.rel (%p41) target = $region8
    $region5: #{tpu_custom_call.1} parent=1 // loop_body
      %s45 = ssub.s32 %s40, 1
      %s46 = ssub.s32 %s40, 2
      %s53 = sadd.s32 1, %s48
      %p54 = scmp.ge.s32.totalorder %s53, 2
      %s55 = scalar_select %p54, 0, %s53
      %s56 = sadd.s32 1, %s47
      %s57 = scalar_select %p54, %s56, %s47
      %p58 = scmp.ge.s32.totalorder %s57, 2
      %s59 = scalar_select %p58, 0, %s57
      %s60 = ssub.s32 %s47, %s59
      %p61 = scmp.eq.s32.totalorder %s60, 0
      %s63 = sadd.s32 %s62, 1
      %s64 = scalar_select %p61, %s62, %s63
      %p67 = pneg %p61
      %p68 = scmp.eq.s32.totalorder %s40, 3
      %p69 = por %p67, %p68
      %p70 = scmp.ne.s32.totalorder %s62, %s65
      %p71 = scmp.eq.s32.totalorder %s40, 0
      %p72 = por %p70, %p71
      %p73 = scmp.ne.s32.totalorder %s62, %s65
      %p74 = scmp.eq.s32.totalorder %s45, 3
      %p75 = por %p73, %p74
      %p76 = scmp.ne.s32.totalorder %s65, %s66
      %p77 = scmp.eq.s32.totalorder %s45, 0
      %p78 = por %p76, %p77
      %p79 = scmp.ne.s32.totalorder %s65, %s66
      %p80 = scmp.eq.s32.totalorder %s46, 3
      %p81 = por %p79, %p80
      %p83 = scmp.ne.s32.totalorder %s66, %s82
      %p84 = scmp.eq.s32.totalorder %s46, 0
      %p85 = por %p83, %p84
      %s86 = ssub.s32 %s47, %s59
      %p87 = scmp.eq.s32.totalorder %s86, 0
      %s89 = sadd.s32 %s88, 1
      %s90 = scalar_select %p87, %s88, %s89
      %p93 = pneg %p87
      %p94 = scmp.eq.s32.totalorder %s40, 3
      %p95 = por %p93, %p94
      %p96 = scmp.ne.s32.totalorder %s88, %s91
      %p97 = scmp.eq.s32.totalorder %s40, 0
      %p98 = por %p96, %p97
      %p99 = scmp.ne.s32.totalorder %s88, %s91
      %p100 = scmp.eq.s32.totalorder %s45, 3
      %p101 = por %p99, %p100
      %p102 = scmp.ne.s32.totalorder %s91, %s92
      %p103 = scmp.eq.s32.totalorder %s45, 0
      %p104 = por %p102, %p103
      %p105 = scmp.ne.s32.totalorder %s91, %s92
      %p106 = scmp.eq.s32.totalorder %s46, 3
      %p107 = por %p105, %p106
      %p109 = scmp.ne.s32.totalorder %s92, %s108
      %p110 = scmp.eq.s32.totalorder %s46, 0
      %p111 = por %p109, %p110
      %s112 = ssub.s32 %s48, %s55
      %p113 = scmp.eq.s32.totalorder %s112, 0
      %s115 = sadd.s32 %s114, 1
      %s116 = scalar_select %p113, %s114, %s115
      %p119 = pneg %p113
      %p120 = scmp.eq.s32.totalorder %s40, 3
      %p121 = por %p119, %p120
      %p122 = scmp.ne.s32.totalorder %s114, %s117
      %p123 = scmp.eq.s32.totalorder %s40, 0
      %p124 = por %p122, %p123
      %p125 = scmp.ne.s32.totalorder %s114, %s117
      %p126 = scmp.eq.s32.totalorder %s45, 3
      %p127 = por %p125, %p126
      %p128 = scmp.ne.s32.totalorder %s117, %s118
      %p129 = scmp.eq.s32.totalorder %s45, 0
      %p130 = por %p128, %p129
      %p131 = scmp.ne.s32.totalorder %s117, %s118
      %p132 = scmp.eq.s32.totalorder %s46, 3
      %p133 = por %p131, %p132
      %p135 = scmp.ne.s32.totalorder %s118, %s134
      %p136 = scmp.eq.s32.totalorder %s46, 0
      %p137 = por %p135, %p136
      %s138 = ssub.s32 %s48, %s55
      %p139 = scmp.eq.s32.totalorder %s138, 0
      %s141 = sadd.s32 %s140, 1
      %s142 = scalar_select %p139, %s140, %s141
      %p145 = pneg %p139
      %p146 = scmp.eq.s32.totalorder %s40, 3
      %p147 = por %p145, %p146
      %p148 = scmp.ne.s32.totalorder %s140, %s143
      %p149 = scmp.eq.s32.totalorder %s40, 0
      %p150 = por %p148, %p149
      %p151 = scmp.ne.s32.totalorder %s140, %s143
      %p152 = scmp.eq.s32.totalorder %s45, 3
      %p153 = por %p151, %p152
      %p154 = scmp.ne.s32.totalorder %s143, %s144
      %p155 = scmp.eq.s32.totalorder %s45, 0
      %p156 = por %p154, %p155
      %p157 = scmp.ne.s32.totalorder %s143, %s144
      %p158 = scmp.eq.s32.totalorder %s46, 3
      %p159 = por %p157, %p158
      %p161 = scmp.ne.s32.totalorder %s144, %s160
      %p162 = scmp.eq.s32.totalorder %s46, 0
      %p163 = por %p161, %p162
      %s164 = ssub.s32 %s48, %s55
      %p165 = scmp.eq.s32.totalorder %s164, 0
      %s167 = sadd.s32 %s166, 1
      %s168 = scalar_select %p165, %s166, %s167
      %p171 = pneg %p165
      %p172 = scmp.eq.s32.totalorder %s40, 3
      %p173 = por %p171, %p172
      %p174 = scmp.ne.s32.totalorder %s166, %s169
      %p175 = scmp.eq.s32.totalorder %s40, 0
      %p176 = por %p174, %p175
      %p177 = scmp.ne.s32.totalorder %s166, %s169
      %p178 = scmp.eq.s32.totalorder %s45, 3
      %p179 = por %p177, %p178
      %p180 = scmp.ne.s32.totalorder %s169, %s170
      %p181 = scmp.eq.s32.totalorder %s45, 0
      %p182 = por %p180, %p181
      %p183 = scmp.ne.s32.totalorder %s169, %s170
      %p184 = scmp.eq.s32.totalorder %s46, 3
      %p185 = por %p183, %p184
      %p187 = scmp.ne.s32.totalorder %s170, %s186
      %p188 = scmp.eq.s32.totalorder %s46, 0
      %p189 = por %p187, %p188
      %s190 = ssub.s32 %s48, %s55
      %p191 = scmp.eq.s32.totalorder %s190, 0
      %s193 = sadd.s32 %s192, 1
      %s194 = scalar_select %p191, %s192, %s193
      %p197 = pneg %p191
      %p198 = scmp.eq.s32.totalorder %s40, 3
      %p199 = por %p197, %p198
      %p200 = scmp.ne.s32.totalorder %s192, %s195
      %p201 = scmp.eq.s32.totalorder %s40, 0
      %p202 = por %p200, %p201
      %p203 = scmp.ne.s32.totalorder %s192, %s195
      %p204 = scmp.eq.s32.totalorder %s45, 3
      %p205 = por %p203, %p204
      %p206 = scmp.ne.s32.totalorder %s195, %s196
      %p207 = scmp.eq.s32.totalorder %s45, 0
      %p208 = por %p206, %p207
      %p209 = scmp.ne.s32.totalorder %s195, %s196
      %p210 = scmp.eq.s32.totalorder %s46, 3
      %p211 = por %p209, %p210
      %p213 = scmp.ne.s32.totalorder %s196, %s212
      %p214 = scmp.eq.s32.totalorder %s46, 0
      %p215 = por %p213, %p214
      %s216 = ssub.s32 %s48, %s55
      %p217 = scmp.eq.s32.totalorder %s216, 0
      %s219 = sadd.s32 %s218, 1
      %s220 = scalar_select %p217, %s218, %s219
      %p223 = pneg %p217
      %p224 = scmp.eq.s32.totalorder %s40, 3
      %p225 = por %p223, %p224
      %p226 = scmp.ne.s32.totalorder %s218, %s221
      %p227 = scmp.eq.s32.totalorder %s40, 0
      %p228 = por %p226, %p227
      %p229 = scmp.ne.s32.totalorder %s218, %s221
      %p230 = scmp.eq.s32.totalorder %s45, 3
      %p231 = por %p229, %p230
      %p232 = scmp.ne.s32.totalorder %s221, %s222
      %p233 = scmp.eq.s32.totalorder %s45, 0
      %p234 = por %p232, %p233
      %p235 = scmp.ne.s32.totalorder %s221, %s222
      %p236 = scmp.eq.s32.totalorder %s46, 3
      %p237 = por %p235, %p236
      %p239 = scmp.ne.s32.totalorder %s222, %s238
      %p240 = scmp.eq.s32.totalorder %s46, 0
      %p241 = por %p239, %p240
      %s242 = ssub.s32 %s48, %s55
      %p243 = scmp.eq.s32.totalorder %s242, 0
      %s245 = sadd.s32 %s244, 1
      %s246 = scalar_select %p243, %s244, %s245
      %p249 = pneg %p243
      %p250 = scmp.eq.s32.totalorder %s40, 3
      %p251 = por %p249, %p250
      %p252 = scmp.ne.s32.totalorder %s244, %s247
      %p253 = scmp.eq.s32.totalorder %s40, 0
      %p254 = por %p252, %p253
      %p255 = scmp.ne.s32.totalorder %s244, %s247
      %p256 = scmp.eq.s32.totalorder %s45, 3
      %p257 = por %p255, %p256
      %p258 = scmp.ne.s32.totalorder %s247, %s248
      %p259 = scmp.eq.s32.totalorder %s45, 0
      %p260 = por %p258, %p259
      %p261 = scmp.ne.s32.totalorder %s247, %s248
      %p262 = scmp.eq.s32.totalorder %s46, 3
      %p263 = por %p261, %p262
      %p265 = scmp.ne.s32.totalorder %s248, %s264
      %p266 = scmp.eq.s32.totalorder %s46, 0
      %p267 = por %p265, %p266
      %s268 = ssub.s32 %s48, %s55
      %p269 = scmp.eq.s32.totalorder %s268, 0
      %s271 = sadd.s32 %s270, 1
      %s272 = scalar_select %p269, %s270, %s271
      %p275 = pneg %p269
      %p276 = scmp.eq.s32.totalorder %s40, 3
      %p277 = por %p275, %p276
      %p278 = scmp.ne.s32.totalorder %s270, %s273
      %p279 = scmp.eq.s32.totalorder %s40, 0
      %p280 = por %p278, %p279
      %p281 = scmp.ne.s32.totalorder %s270, %s273
      %p282 = scmp.eq.s32.totalorder %s45, 3
      %p283 = por %p281, %p282
      %p284 = scmp.ne.s32.totalorder %s273, %s274
      %p285 = scmp.eq.s32.totalorder %s45, 0
      %p286 = por %p284, %p285
      %p287 = scmp.ne.s32.totalorder %s273, %s274
      %p288 = scmp.eq.s32.totalorder %s46, 3
      %p289 = por %p287, %p288
      %p291 = scmp.ne.s32.totalorder %s274, %s290
      %p292 = scmp.eq.s32.totalorder %s46, 0
      %p293 = por %p291, %p292
      %s294 = ssub.s32 %s48, %s55
      %p295 = scmp.eq.s32.totalorder %s294, 0
      %s297 = sadd.s32 %s296, 1
      %s298 = scalar_select %p295, %s296, %s297
      %p301 = pneg %p295
      %p302 = scmp.eq.s32.totalorder %s40, 3
      %p303 = por %p301, %p302
      %p304 = scmp.ne.s32.totalorder %s296, %s299
      %p305 = scmp.eq.s32.totalorder %s40, 0
      %p306 = por %p304, %p305
      %p307 = scmp.ne.s32.totalorder %s296, %s299
      %p308 = scmp.eq.s32.totalorder %s45, 3
      %p309 = por %p307, %p308
      %p310 = scmp.ne.s32.totalorder %s299, %s300
      %p311 = scmp.eq.s32.totalorder %s45, 0
      %p312 = por %p310, %p311
      %p313 = scmp.ne.s32.totalorder %s299, %s300
      %p314 = scmp.eq.s32.totalorder %s46, 3
      %p315 = por %p313, %p314
      %p317 = scmp.ne.s32.totalorder %s300, %s316
      %p318 = scmp.eq.s32.totalorder %s46, 0
      %p319 = por %p317, %p318
      %s320 = ssub.s32 %s48, %s55
      %p321 = scmp.eq.s32.totalorder %s320, 0
      %s323 = sadd.s32 %s322, 1
      %s324 = scalar_select %p321, %s322, %s323
      %p327 = pneg %p321
      %p328 = scmp.eq.s32.totalorder %s40, 3
      %p329 = por %p327, %p328
      %p330 = scmp.ne.s32.totalorder %s322, %s325
      %p331 = scmp.eq.s32.totalorder %s40, 0
      %p332 = por %p330, %p331
      %p333 = scmp.ne.s32.totalorder %s322, %s325
      %p334 = scmp.eq.s32.totalorder %s45, 3
      %p335 = por %p333, %p334
      %p336 = scmp.ne.s32.totalorder %s325, %s326
      %p337 = scmp.eq.s32.totalorder %s45, 0
      %p338 = por %p336, %p337
      %p339 = scmp.ne.s32.totalorder %s325, %s326
      %p340 = scmp.eq.s32.totalorder %s46, 3
      %p341 = por %p339, %p340
      %p343 = scmp.ne.s32.totalorder %s326, %s342
      %p344 = scmp.eq.s32.totalorder %s46, 0
      %p345 = por %p343, %p344
      %s346 = ssub.s32 %s48, %s55
      %p347 = scmp.eq.s32.totalorder %s346, 0
      %s349 = sadd.s32 %s348, 1
      %s350 = scalar_select %p347, %s348, %s349
      %p353 = pneg %p347
      %p354 = scmp.eq.s32.totalorder %s40, 3
      %p355 = por %p353, %p354
      %p356 = scmp.ne.s32.totalorder %s348, %s351
      %p357 = scmp.eq.s32.totalorder %s40, 0
      %p358 = por %p356, %p357
      %p359 = scmp.ne.s32.totalorder %s348, %s351
      %p360 = scmp.eq.s32.totalorder %s45, 3
      %p361 = por %p359, %p360
      %p362 = scmp.ne.s32.totalorder %s351, %s352
      %p363 = scmp.eq.s32.totalorder %s45, 0
      %p364 = por %p362, %p363
      %p365 = scmp.ne.s32.totalorder %s351, %s352
      %p366 = scmp.eq.s32.totalorder %s46, 3
      %p367 = por %p365, %p366
      %p369 = scmp.ne.s32.totalorder %s352, %s368
      %p370 = scmp.eq.s32.totalorder %s46, 0
      %p371 = por %p369, %p370
      %s372 = ssub.s32 %s48, %s55
      %p373 = scmp.eq.s32.totalorder %s372, 0
      %s375 = sadd.s32 %s374, 1
      %s376 = scalar_select %p373, %s374, %s375
      %p379 = pneg %p373
      %p380 = scmp.eq.s32.totalorder %s40, 3
      %p381 = por %p379, %p380
      %p382 = scmp.ne.s32.totalorder %s374, %s377
      %p383 = scmp.eq.s32.totalorder %s40, 0
      %p384 = por %p382, %p383
      %p385 = scmp.ne.s32.totalorder %s374, %s377
      %p386 = scmp.eq.s32.totalorder %s45, 3
      %p387 = por %p385, %p386
      %p388 = scmp.ne.s32.totalorder %s377, %s378
      %p389 = scmp.eq.s32.totalorder %s45, 0
      %p390 = por %p388, %p389
      %p391 = scmp.ne.s32.totalorder %s377, %s378
      %p392 = scmp.eq.s32.totalorder %s46, 3
      %p393 = por %p391, %p392
      %p395 = scmp.ne.s32.totalorder %s378, %s394
      %p396 = scmp.eq.s32.totalorder %s46, 0
      %p397 = por %p395, %p396
      %s398 = ssub.s32 %s48, %s55
      %p399 = scmp.eq.s32.totalorder %s398, 0
      %s401 = sadd.s32 %s400, 1
      %s402 = scalar_select %p399, %s400, %s401
      %p405 = pneg %p399
      %p406 = scmp.eq.s32.totalorder %s40, 3
      %p407 = por %p405, %p406
      %p408 = scmp.ne.s32.totalorder %s400, %s403
      %p409 = scmp.eq.s32.totalorder %s40, 0
      %p410 = por %p408, %p409
      %p411 = scmp.ne.s32.totalorder %s400, %s403
      %p412 = scmp.eq.s32.totalorder %s45, 3
      %p413 = por %p411, %p412
      %p414 = scmp.ne.s32.totalorder %s403, %s404
      %p415 = scmp.eq.s32.totalorder %s45, 0
      %p416 = por %p414, %p415
      %p417 = scmp.ne.s32.totalorder %s403, %s404
      %p418 = scmp.eq.s32.totalorder %s46, 3
      %p419 = por %p417, %p418
      %p421 = scmp.ne.s32.totalorder %s404, %s420
      %p422 = scmp.eq.s32.totalorder %s46, 0
      %p423 = por %p421, %p422
      %s424 = ssub.s32 %s47, %s59
      %p425 = scmp.eq.s32.totalorder %s424, 0
      %s427 = sadd.s32 %s426, 1
      %s428 = scalar_select %p425, %s426, %s427
      %p431 = pneg %p425
      %p432 = scmp.eq.s32.totalorder %s40, 3
      %p433 = por %p431, %p432
      %p434 = scmp.ne.s32.totalorder %s426, %s429
      %p435 = scmp.eq.s32.totalorder %s40, 0
      %p436 = por %p434, %p435
      %p437 = scmp.ne.s32.totalorder %s426, %s429
      %p438 = scmp.eq.s32.totalorder %s45, 3
      %p439 = por %p437, %p438
      %p440 = scmp.ne.s32.totalorder %s429, %s430
      %p441 = scmp.eq.s32.totalorder %s45, 0
      %p442 = por %p440, %p441
      %p443 = scmp.ne.s32.totalorder %s429, %s430
      %p444 = scmp.eq.s32.totalorder %s46, 3
      %p445 = por %p443, %p444
      %p447 = scmp.ne.s32.totalorder %s430, %s446
      %p448 = scmp.eq.s32.totalorder %s46, 0
      %p449 = por %p447, %p448
      %p450 = scmp.le.s32.totalorder 1, %s40
      %p451 = scmp.lt.s32.totalorder %s40, 5
      %p452 = pnand %p450, %p451
      %p453 = pneg %p452
      // Predicated region
      $region9: #{tpu_custom_call.1} parent=5 // pred_check
        _
      $region10: #{tpu_custom_call.1} parent=5 // pred_check_branch
        %455 = sbr.rel (%p452) target = $region12
      $region11: #{tpu_custom_call.1} parent=5 // pred_region
        %s456 = ssub.s32 %s40, 1
      $region12: #{tpu_custom_call.1} parent=5 // pred_fallthru
        _
      %p457 = scmp.lt.s32.totalorder %s40, 4
      // Predicated region
      $region13: #{tpu_custom_call.1} parent=5 // pred_check
        %p458 = pneg %p457
      $region14: #{tpu_custom_call.1} parent=5 // pred_check_branch
        %460 = sbr.rel (%p458) target = $region16
      $region15: #{tpu_custom_call.1} parent=5 // pred_region
        // Predicated region
        $region17: #{tpu_custom_call.1} parent=15 // pred_check
          %p461 = pneg %p72
        $region18: #{tpu_custom_call.1} parent=15 // pred_check_branch
          %463 = sbr.rel (%p461) target = $region20
        $region19: #{tpu_custom_call.1} parent=15 // pred_region
          %s464 = sand.u32 %s62, 1
          %s465 = scalar_lea.sflag [#allocation6], %s464
          %s466 = sand.u32 %s62, 1
          %s467 = smul.addr %s466, 8
          %s468 = scalar_lea.vmem [#allocation5], %s467
          %s470 = ssub.s32 128, 128
          %471 = vsyncadd %s465, %s470
          %s472 = smul.addr %s47, 128
          %s473 = scalar_lea.hbm %s2, %s472
          %s475 = sshll.u32 %s468, 4
          %s476 = int_to_ptr.vmem [resolvable:$true] %s475
          %478 = dma.hbm_to_vmem [thread:$0]  %s473, 128, %s476, %s465
        $region20: #{tpu_custom_call.1} parent=15 // pred_fallthru
          _
        // Predicated region
        $region21: #{tpu_custom_call.1} parent=15 // pred_check
          %p479 = pneg %p98
        $region22: #{tpu_custom_call.1} parent=15 // pred_check_branch
          %481 = sbr.rel (%p479) target = $region24
        $region23: #{tpu_custom_call.1} parent=15 // pred_region
          %s482 = sand.u32 %s40, 1
          %s483 = scalar_lea.sflag [#allocation9], %s482
          %s484 = sand.u32 %s88, 1
          %s485 = smul.addr %s484, 8
          %s486 = scalar_lea.vmem [#allocation8], %s485
          %s488 = ssub.s32 128, 128
          %489 = vsyncadd %s483, %s488
          %s490 = smul.addr %s47, 2
          %s491 = smul.addr %s490, 64
          %s492 = scalar_lea.hbm %s3, %s491
          %s493 = sshll.u32 %s486, 4
          %s494 = int_to_ptr.vmem [resolvable:$true] %s493
          %499 = dma.hbm_to_vmem [thread:$0]  %s492, 128, %s494, %s483, 64, 64, 4
        $region24: #{tpu_custom_call.1} parent=15 // pred_fallthru
          _
        // Predicated region
        $region25: #{tpu_custom_call.1} parent=15 // pred_check
          %p500 = pneg %p124
        $region26: #{tpu_custom_call.1} parent=15 // pred_check_branch
          %502 = sbr.rel (%p500) target = $region28
        $region27: #{tpu_custom_call.1} parent=15 // pred_region
          %p503 = scmp.lt.s32.totalorder %s48, 1
          %s504 = scalar_select %p503, %s48, 1
          %s505 = smul.addr %s504, 3
          %s506 = scalar_lea.vmem %s4, %s505
        $region28: #{tpu_custom_call.1} parent=15 // pred_fallthru
          _
        // Predicated region
        $region29: #{tpu_custom_call.1} parent=15 // pred_check
          %p507 = pneg %p150
        $region30: #{tpu_custom_call.1} parent=15 // pred_check_branch
          %509 = sbr.rel (%p507) target = $region32
        $region31: #{tpu_custom_call.1} parent=15 // pred_region
          %s510 = sand.u32 %s40, 1
          %s511 = scalar_lea.sflag [#allocation9], %s510
          %s512 = sand.u32 %s140, 1
          %s513 = smul.addr %s512, 3
          %s514 = scalar_lea.vmem [#allocation10], %s513
          %s516 = ssub.s32 48, 48
          %517 = vsyncadd %s511, %s516
          %s518 = smul.addr %s48, 3
          %s519 = smul.addr %s518, 16
          %s520 = scalar_lea.hbm %s5, %s519
          %s521 = sshll.u32 %s514, 4
          %s522 = int_to_ptr.vmem [resolvable:$true] %s521
          %527 = dma.hbm_to_vmem [thread:$0]  %s520, 48, %s522, %s511, 16, 16, 1
        $region32: #{tpu_custom_call.1} parent=15 // pred_fallthru
          _
        // Predicated region
        $region33: #{tpu_custom_call.1} parent=15 // pred_check
          %p528 = pneg %p176
        $region34: #{tpu_custom_call.1} parent=15 // pred_check_branch
          %530 = sbr.rel (%p528) target = $region36
        $region35: #{tpu_custom_call.1} parent=15 // pred_region
          %p531 = scmp.lt.s32.totalorder %s48, 1
          %s532 = scalar_select %p531, %s48, 1
          %s533 = smul.addr %s532, 8
          %s534 = smul.addr %s533, 4
          %s535 = scalar_lea.vmem %s6, %s534
        $region36: #{tpu_custom_call.1} parent=15 // pred_fallthru
          _
        // Predicated region
        $region37: #{tpu_custom_call.1} parent=15 // pred_check
          %p536 = pneg %p202
        $region38: #{tpu_custom_call.1} parent=15 // pred_check_branch
          %538 = sbr.rel (%p536) target = $region40
        $region39: #{tpu_custom_call.1} parent=15 // pred_region
          %p539 = scmp.lt.s32.totalorder %s48, 1
          %s540 = scalar_select %p539, %s48, 1
          %s541 = smul.addr %s540, 2
          %s542 = scalar_lea.vmem %s7, %s541
        $region40: #{tpu_custom_call.1} parent=15 // pred_fallthru
          _
        // Predicated region
        $region41: #{tpu_custom_call.1} parent=15 // pred_check
          %p543 = pneg %p228
        $region42: #{tpu_custom_call.1} parent=15 // pred_check_branch
          %545 = sbr.rel (%p543) target = $region44
        $region43: #{tpu_custom_call.1} parent=15 // pred_region
          %s546 = sand.u32 %s40, 1
          %s547 = scalar_lea.sflag [#allocation12], %s546
          %s548 = sand.u32 %s218, 1
          %s549 = smul.addr %s548, 32
          %s550 = scalar_lea.vmem [#allocation11], %s549
          %s552 = ssub.s32 512, 512
          %553 = vsyncadd %s547, %s552
          %s554 = smul.addr %s48, 8
          %s555 = smul.addr %s554, 64
          %s556 = scalar_lea.hbm %s8, %s555
          %s557 = sshll.u32 %s550, 4
          %s558 = int_to_ptr.vmem [resolvable:$true] %s557
          %563 = dma.hbm_to_vmem [thread:$0]  %s556, 512, %s558, %s547, 64, 64, 4
        $region44: #{tpu_custom_call.1} parent=15 // pred_fallthru
          _
        // Predicated region
        $region45: #{tpu_custom_call.1} parent=15 // pred_check
          %p564 = pneg %p254
        $region46: #{tpu_custom_call.1} parent=15 // pred_check_branch
          %566 = sbr.rel (%p564) target = $region48
        $region47: #{tpu_custom_call.1} parent=15 // pred_region
          %p567 = scmp.lt.s32.totalorder %s48, 1
          %s568 = scalar_select %p567, %s48, 1
          %s569 = smul.addr %s568, 2
          %s570 = scalar_lea.vmem %s9, %s569
        $region48: #{tpu_custom_call.1} parent=15 // pred_fallthru
          _
        // Predicated region
        $region49: #{tpu_custom_call.1} parent=15 // pred_check
          %p571 = pneg %p280
        $region50: #{tpu_custom_call.1} parent=15 // pred_check_branch
          %573 = sbr.rel (%p571) target = $region52
        $region51: #{tpu_custom_call.1} parent=15 // pred_region
          %s574 = sand.u32 %s40, 1
          %s575 = scalar_lea.sflag [#allocation12], %s574
          %s576 = sand.u32 %s270, 1
          %s577 = smul.addr %s576, 32
          %s578 = scalar_lea.vmem [#allocation13], %s577
          %s580 = ssub.s32 512, 512
          %581 = vsyncadd %s575, %s580
          %s582 = smul.addr %s48, 8
          %s583 = smul.addr %s582, 64
          %s584 = scalar_lea.hbm %s10, %s583
          %s585 = sshll.u32 %s578, 4
          %s586 = int_to_ptr.vmem [resolvable:$true] %s585
          %591 = dma.hbm_to_vmem [thread:$0]  %s584, 512, %s586, %s575, 64, 64, 4
        $region52: #{tpu_custom_call.1} parent=15 // pred_fallthru
          _
        // Predicated region
        $region53: #{tpu_custom_call.1} parent=15 // pred_check
          %p592 = pneg %p306
        $region54: #{tpu_custom_call.1} parent=15 // pred_check_branch
          %594 = sbr.rel (%p592) target = $region56
        $region55: #{tpu_custom_call.1} parent=15 // pred_region
          %p595 = scmp.lt.s32.totalorder %s48, 1
          %s596 = scalar_select %p595, %s48, 1
          %s597 = smul.addr %s596, 2
          %s598 = scalar_lea.vmem %s11, %s597
        $region56: #{tpu_custom_call.1} parent=15 // pred_fallthru
          _
        // Predicated region
        $region57: #{tpu_custom_call.1} parent=15 // pred_check
          %p599 = pneg %p332
        $region58: #{tpu_custom_call.1} parent=15 // pred_check_branch
          %601 = sbr.rel (%p599) target = $region60
        $region59: #{tpu_custom_call.1} parent=15 // pred_region
          %p602 = scmp.lt.s32.totalorder %s48, 1
          %s603 = scalar_select %p602, %s48, 1
          %s604 = smul.addr %s603, 4
          %s605 = smul.addr %s604, 4
          %s606 = scalar_lea.vmem %s12, %s605
        $region60: #{tpu_custom_call.1} parent=15 // pred_fallthru
          _
        // Predicated region
        $region61: #{tpu_custom_call.1} parent=15 // pred_check
          %p607 = pneg %p358
        $region62: #{tpu_custom_call.1} parent=15 // pred_check_branch
          %609 = sbr.rel (%p607) target = $region64
        $region63: #{tpu_custom_call.1} parent=15 // pred_region
          %p610 = scmp.lt.s32.totalorder %s48, 1
          %s611 = scalar_select %p610, %s48, 1
          %s612 = scalar_lea.vmem %s13, %s611
        $region64: #{tpu_custom_call.1} parent=15 // pred_fallthru
          _
        // Predicated region
        $region65: #{tpu_custom_call.1} parent=15 // pred_check
          %p613 = pneg %p384
        $region66: #{tpu_custom_call.1} parent=15 // pred_check_branch
          %615 = sbr.rel (%p613) target = $region68
        $region67: #{tpu_custom_call.1} parent=15 // pred_region
          %p616 = scmp.lt.s32.totalorder %s48, 1
          %s617 = scalar_select %p616, %s48, 1
          %s618 = smul.addr %s617, 8
          %s619 = smul.addr %s618, 4
          %s620 = scalar_lea.vmem %s14, %s619
        $region68: #{tpu_custom_call.1} parent=15 // pred_fallthru
          _
        // Predicated region
        $region69: #{tpu_custom_call.1} parent=15 // pred_check
          %p621 = pneg %p410
        $region70: #{tpu_custom_call.1} parent=15 // pred_check_branch
          %623 = sbr.rel (%p621) target = $region72
        $region71: #{tpu_custom_call.1} parent=15 // pred_region
          %p624 = scmp.lt.s32.totalorder %s48, 1
          %s625 = scalar_select %p624, %s48, 1
          %s626 = scalar_lea.vmem %s15, %s625
        $region72: #{tpu_custom_call.1} parent=15 // pred_fallthru
          _
      $region16: #{tpu_custom_call.1} parent=5 // pred_fallthru
        _
      %p627 = scmp.le.s32.totalorder 1, %s40
      %p628 = scmp.lt.s32.totalorder %s40, 5
      %p629 = pnand %p627, %p628
      %p630 = pneg %p629
      // Predicated region
      $region73: #{tpu_custom_call.1} parent=5 // pred_check
        _
      $region74: #{tpu_custom_call.1} parent=5 // pred_check_branch
        %632 = sbr.rel (%p629) target = $region76
      $region75: #{tpu_custom_call.1} parent=5 // pred_region
        %s633 = ssub.s32 %s40, 1
        %s634 = sand.u32 %s65, 1
        %s635 = scalar_lea.sflag [#allocation6], %s634
        %s636 = sand.u32 %s65, 1
        %s637 = smul.addr %s636, 8
        %s638 = scalar_lea.vmem [#allocation5], %s637
        // Predicated region
        $region77: #{tpu_custom_call.1} parent=75 // pred_check
          %p639 = pneg %p78
        $region78: #{tpu_custom_call.1} parent=75 // pred_check_branch
          %641 = sbr.rel (%p639) target = $region80
        $region79: #{tpu_custom_call.1} parent=75 // pred_region
          %642 = dma.done %s635, 128
        $region80: #{tpu_custom_call.1} parent=75 // pred_fallthru
          _
        %s643 = sand.u32 %s45, 1
        %s644 = scalar_lea.sflag [#allocation9], %s643
        %s645 = sand.u32 %s91, 1
        %s646 = smul.addr %s645, 8
        %s647 = scalar_lea.vmem [#allocation8], %s646
        // Predicated region
        $region81: #{tpu_custom_call.1} parent=75 // pred_check
          %p648 = pneg %p104
        $region82: #{tpu_custom_call.1} parent=75 // pred_check_branch
          %650 = sbr.rel (%p648) target = $region84
        $region83: #{tpu_custom_call.1} parent=75 // pred_region
          %651 = dma.done %s644, 128
        $region84: #{tpu_custom_call.1} parent=75 // pred_fallthru
          _
        %s652 = sand.u32 %s45, 1
        %s653 = scalar_lea.sflag [#allocation9], %s652
        %s654 = sand.u32 %s143, 1
        %s655 = smul.addr %s654, 3
        %s656 = scalar_lea.vmem [#allocation10], %s655
        // Predicated region
        $region85: #{tpu_custom_call.1} parent=75 // pred_check
          %p657 = pneg %p156
        $region86: #{tpu_custom_call.1} parent=75 // pred_check_branch
          %659 = sbr.rel (%p657) target = $region88
        $region87: #{tpu_custom_call.1} parent=75 // pred_region
          %660 = dma.done %s653, 48
        $region88: #{tpu_custom_call.1} parent=75 // pred_fallthru
          _
        %s661 = sand.u32 %s45, 1
        %s662 = scalar_lea.sflag [#allocation12], %s661
        %s663 = sand.u32 %s221, 1
        %s664 = smul.addr %s663, 32
        %s665 = scalar_lea.vmem [#allocation11], %s664
        // Predicated region
        $region89: #{tpu_custom_call.1} parent=75 // pred_check
          %p666 = pneg %p234
        $region90: #{tpu_custom_call.1} parent=75 // pred_check_branch
          %668 = sbr.rel (%p666) target = $region92
        $region91: #{tpu_custom_call.1} parent=75 // pred_region
          %669 = dma.done %s662, 512
        $region92: #{tpu_custom_call.1} parent=75 // pred_fallthru
          _
        %s670 = sand.u32 %s45, 1
        %s671 = scalar_lea.sflag [#allocation12], %s670
        %s672 = sand.u32 %s273, 1
        %s673 = smul.addr %s672, 32
        %s674 = scalar_lea.vmem [#allocation13], %s673
        // Predicated region
        $region93: #{tpu_custom_call.1} parent=75 // pred_check
          %p675 = pneg %p286
        $region94: #{tpu_custom_call.1} parent=75 // pred_check_branch
          %677 = sbr.rel (%p675) target = $region96
        $region95: #{tpu_custom_call.1} parent=75 // pred_region
          %678 = dma.done %s671, 512
        $region96: #{tpu_custom_call.1} parent=75 // pred_fallthru
          _
        %s679 = sand.u32 %s65, 1
        %s680 = scalar_lea.sflag [#allocation6], %s679
        %s681 = sand.u32 %s65, 1
        %s682 = smul.addr %s681, 8
        %s683 = scalar_lea.vmem [#allocation5], %s682
        %p684 = pneg %p78
        %p685 = pneg %p75
        %s686 = sand.u32 %s45, 1
        %s687 = scalar_lea.sflag [#allocation9], %s686
        %s688 = sand.u32 %s91, 1
        %s689 = smul.addr %s688, 8
        %s690 = scalar_lea.vmem [#allocation8], %s689
        %p691 = pneg %p104
        %p692 = pneg %p101
        %p693 = scmp.lt.s32.totalorder %s50, 1
        %s694 = scalar_select %p693, %s50, 1
        %s695 = smul.addr %s694, 3
        %s696 = scalar_lea.vmem %s4, %s695
        %p697 = pneg %p130
        %p698 = pneg %p127
        %s699 = sand.u32 %s45, 1
        %s700 = scalar_lea.sflag [#allocation9], %s699
        %s701 = sand.u32 %s143, 1
        %s702 = smul.addr %s701, 3
        %s703 = scalar_lea.vmem [#allocation10], %s702
        %p704 = pneg %p156
        %p705 = pneg %p153
        %p706 = scmp.lt.s32.totalorder %s50, 1
        %s707 = scalar_select %p706, %s50, 1
        %s708 = smul.addr %s707, 8
        %s709 = smul.addr %s708, 4
        %s710 = scalar_lea.vmem %s6, %s709
        %p711 = pneg %p182
        %p712 = pneg %p179
        %p713 = scmp.lt.s32.totalorder %s50, 1
        %s714 = scalar_select %p713, %s50, 1
        %s715 = smul.addr %s714, 2
        %s716 = scalar_lea.vmem %s7, %s715
        %p717 = pneg %p208
        %p718 = pneg %p205
        %s719 = sand.u32 %s45, 1
        %s720 = scalar_lea.sflag [#allocation12], %s719
        %s721 = sand.u32 %s221, 1
        %s722 = smul.addr %s721, 32
        %s723 = scalar_lea.vmem [#allocation11], %s722
        %p724 = pneg %p234
        %p725 = pneg %p231
        %p726 = scmp.lt.s32.totalorder %s50, 1
        %s727 = scalar_select %p726, %s50, 1
        %s728 = smul.addr %s727, 2
        %s729 = scalar_lea.vmem %s9, %s728
        %p730 = pneg %p260
        %p731 = pneg %p257
        %s732 = sand.u32 %s45, 1
        %s733 = scalar_lea.sflag [#allocation12], %s732
        %s734 = sand.u32 %s273, 1
        %s735 = smul.addr %s734, 32
        %s736 = scalar_lea.vmem [#allocation13], %s735
        %p737 = pneg %p286
        %p738 = pneg %p283
        %p739 = scmp.lt.s32.totalorder %s50, 1
        %s740 = scalar_select %p739, %s50, 1
        %s741 = smul.addr %s740, 2
        %s742 = scalar_lea.vmem %s11, %s741
        %p743 = pneg %p312
        %p744 = pneg %p309
        %p745 = scmp.lt.s32.totalorder %s50, 1
        %s746 = scalar_select %p745, %s50, 1
        %s747 = smul.addr %s746, 4
        %s748 = smul.addr %s747, 4
        %s749 = scalar_lea.vmem %s12, %s748
        %p750 = pneg %p338
        %p751 = pneg %p335
        %p752 = scmp.lt.s32.totalorder %s50, 1
        %s753 = scalar_select %p752, %s50, 1
        %s754 = scalar_lea.vmem %s13, %s753
        %p755 = pneg %p364
        %p756 = pneg %p361
        %p757 = scmp.lt.s32.totalorder %s50, 1
        %s758 = scalar_select %p757, %s50, 1
        %s759 = smul.addr %s758, 8
        %s760 = smul.addr %s759, 4
        %s761 = scalar_lea.vmem %s14, %s760
        %p762 = pneg %p390
        %p763 = pneg %p387
        %p764 = scmp.lt.s32.totalorder %s50, 1
        %s765 = scalar_select %p764, %s50, 1
        %s766 = scalar_lea.vmem %s15, %s765
        %p767 = pneg %p416
        %p768 = pneg %p413
        %p769 = pneg %p442
        %p770 = pneg %p439
        %s771 = sand.u32 %s429, 1
        %s772 = scalar_lea.sflag [#allocation7], %s771
        %s773 = sand.u32 %s429, 1
        %s774 = smul.addr %s773, 8
        %s775 = scalar_lea.vmem [#allocation14], %s774
        %p776 = scmp.lt.s32.totalorder %s50, 1
        %s777 = scalar_select %p776, %s50, 1
        %s778 = smul.addr %s777, 3
        %s779 = scalar_lea.vmem %s4, %s778
        %p780 = scmp.lt.s32.totalorder %s50, 1
        %s781 = scalar_select %p780, %s50, 1
        %s782 = smul.addr %s781, 8
        %s783 = smul.addr %s782, 4
        %s784 = scalar_lea.vmem %s6, %s783
        %p785 = scmp.lt.s32.totalorder %s50, 1
        %s786 = scalar_select %p785, %s50, 1
        %s787 = smul.addr %s786, 2
        %s788 = scalar_lea.vmem %s7, %s787
        %p789 = scmp.lt.s32.totalorder %s50, 1
        %s790 = scalar_select %p789, %s50, 1
        %s791 = smul.addr %s790, 2
        %s792 = scalar_lea.vmem %s9, %s791
        %p793 = scmp.lt.s32.totalorder %s50, 1
        %s794 = scalar_select %p793, %s50, 1
        %s795 = smul.addr %s794, 2
        %s796 = scalar_lea.vmem %s11, %s795
        %p797 = scmp.lt.s32.totalorder %s50, 1
        %s798 = scalar_select %p797, %s50, 1
        %s799 = smul.addr %s798, 4
        %s800 = smul.addr %s799, 4
        %s801 = scalar_lea.vmem %s12, %s800
        %p802 = scmp.lt.s32.totalorder %s50, 1
        %s803 = scalar_select %p802, %s50, 1
        %s804 = scalar_lea.vmem %s13, %s803
        %p805 = scmp.lt.s32.totalorder %s50, 1
        %s806 = scalar_select %p805, %s50, 1
        %s807 = smul.addr %s806, 8
        %s808 = smul.addr %s807, 4
        %s809 = scalar_lea.vmem %s14, %s808
        %p810 = scmp.lt.s32.totalorder %s50, 1
        %s811 = scalar_select %p810, %s50, 1
        %s812 = scalar_lea.vmem %s15, %s811
        %s814 = sld [smem:[#allocation3 + %s49]]
        %s815 = sld [smem:[#allocation4 + %s49]]
        %v816 = vlaneseq
        %v817 = vshrl.u32 %v816, 7
        %v818 = vlaneseq
        %v819 = vand.u32 %v818, 127
        %vm820 = vcmp.le.s32.totalorder %v819, %v817
        %v821 = vstv %s814
        %vm822 = vcmp.lt.s32.totalorder %v819, %v821
        %vm823 = vmand %vm820, %vm822
        %v824 = vstv %s815
        %vm825 = vcmp.lt.s32.totalorder %v819, %v824
        %p826 = scmp.eq.s32.totalorder %s50, 0
        // Predicated region
        $region97: #{tpu_custom_call.1} parent=75 // pred_check
          %p827 = pneg %p826
        $region98: #{tpu_custom_call.1} parent=75 // pred_check_branch
          %829 = sbr.rel (%p827) target = $region100
        $region99: #{tpu_custom_call.1} parent=75 // pred_region
          %v830 = vld [vmem:[%s638] sm:$0xff]
          %vm831 = vcmask 261120
          %832 = vst.msk [vmem:[%s775] sm:$0xff] %vm831, %v830
        $region100: #{tpu_custom_call.1} parent=75 // pred_fallthru
          _
        %v833 = vld [vmem:[%s775] sm:$0xff]
        %v834 = vld [vmem:[%s647] sm:$0xf]
        %v835 = vld [vmem:[%s647 + $0x4] sm:$0xf]
        %v836 = vld [vmem:[%s779] sm:$0x1]
        %v837 = vld [vmem:[%s656] sm:$0x1]
        %vm838 = vcmask 261120
        %v839 = vsel %vm838, %v833, 0.0
        %840 = vadd.xlane.f32.xlu0 %v839
        %v841 = vpop.xlane.xlu0 %840
        %v842 = vrcp.pop 32.0
        %v843 = vmul.f32 %v841, %v842
        %v844 = vsub.f32 %v833, %v843
        %v845 = vmul.f32 %v844, %v844
        %v846 = vsel %vm838, %v845, 0.0
        %847 = vadd.xlane.f32.xlu0 %v846
        %v848 = vpop.xlane.xlu0 %847
        %v849 = vmul.f32 %v848, %v842
        %v850 = vadd.f32 %v849, 1e-05
        %v851 = vrsqrt.pop %v850
        %v852 = vmul.f32 %v844, %v851
        %v854 = vlaneseq
        %v855 = vshrl.u32 %v854, 7
        %v856 = vsub.s32 0, %v855
        %v857 = vrot.slane %v836, %v856
        %v859 = vmul.f32 %v852, %v857
        %v861 = vlaneseq
        %v862 = vshrl.u32 %v861, 7
        %v863 = vsub.s32 0, %v862
        %v864 = vrot.slane %v837, %v863
        %v866 = vadd.f32 %v859, %v864
        %v867 = vpack.c.bf16 %v866, %v866
        %v868 = vld [vmem:[%s784] sm:$0xf]
        %v869 = vld [vmem:[%s784 + $0x4] sm:$0xf]
        %v870 = vld [vmem:[%s784 + $0x8] sm:$0xf]
        %v871 = vld [vmem:[%s784 + $0xc] sm:$0xf]
        %v872 = vld [vmem:[%s788] sm:$0x1]
        %v874 = vlaneseq
        %v875 = vshrl.u32 %v874, 7
        %v876 = vsub.s32 0, %v875
        %v877 = vrot.slane %v872, %v876
        %v883 = vunpack.c.l.b16 %v868
        %v884 = vunpack.c.l.b16 %v869
        %v885 = vunpack.c.l.b16 %v870
        %v886 = vunpack.c.l.b16 %v871
        %v887 = vpack.c.b16 %v884, %v883
        %v888 = vpack.c.b16 %v886, %v885
        %v892 = vsel %vm838, %v867, 0
        %894 = vmatprep.subr.bf16.mxu0 0
        %895 = vmatpush1.bf16.msra.mxu0 0
        %896 = vmatprep.subr.bf16.mxu0 0
        %897 = vmatpush1.bf16.msra.mxu0 0
        %898 = vmatprep.subr.bf16.mxu0 0
        %899 = vmatpush1.bf16.msra.mxu0 0
        %900 = vmatprep.subr.bf16.mxu0 0
        %901 = vmatpush1.bf16.msra.mxu0 0
        %902 = vmatprep.subr.bf16.mxu0 0
        %903 = vmatpush1.bf16.msra.mxu0 0
        %904 = vmatprep.subr.bf16.mxu0 0
        %905 = vmatpush1.bf16.msra.mxu0 0
        %906 = vmatprep.subr.bf16.mxu0 0
        %907 = vmatpush1.bf16.msra.mxu0 %v888
        %908 = vmatprep.subr.bf16.mxu0 0
        %909 = vmatpush1.bf16.msra.mxu0 %v887
        %910 = vmatprep.subr.bf16.mxu0 0
        %911 = vmatpush2.bf16.msra.mxu0 0
        %912 = vmatprep.subr.bf16.mxu0 0
        %913 = vmatpush2.bf16.msra.mxu0 0
        %914 = vmatprep.subr.bf16.mxu0 0
        %915 = vmatpush2.bf16.msra.mxu0 0
        %916 = vmatprep.subr.bf16.mxu0 0
        %917 = vmatpush2.bf16.msra.mxu0 0
        %918 = vmatprep.subr.bf16.mxu0 0
        %919 = vmatpush2.bf16.msra.mxu0 0
        %920 = vmatprep.subr.bf16.mxu0 0
        %921 = vmatpush2.bf16.msra.mxu0 0
        %922 = vmatprep.subr.bf16.mxu0 0
        %923 = vmatpush2.bf16.msra.mxu0 0
        %924 = vmatprep.subr.bf16.mxu0 0
        %925 = vmatpush2.bf16.msra.mxu0 0
        %926 = vmatprep.mubr.bf16.mxu0 0
        %927 = vmatmul.mubr.bf16.gmra.mxu0 %v892
        %v928 = vpop.f32.mrf.mxu0
        %v929 = vadd.f32 %v877, %v928
        %v930 = vpop.f32.mrf.mxu0
        %v931 = vpop.f32.mrf.mxu0
        %v932 = vpop.f32.mrf.mxu0
        %933 = vdwg.mxu0
        %v934 = vld [vmem:[%s665] sm:$0xf]
        %v935 = vld [vmem:[%s665 + $0x4] sm:$0xf]
        %v936 = vld [vmem:[%s665 + $0x8] sm:$0xf]
        %v937 = vld [vmem:[%s665 + $0xc] sm:$0xf]
        %v938 = vld [vmem:[%s792] sm:$0x1]
        %v940 = vlaneseq
        %v941 = vshrl.u32 %v940, 7
        %v942 = vsub.s32 0, %v941
        %v943 = vrot.slane %v938, %v942
        %v949 = vunpack.c.l.b16 %v934
        %v950 = vunpack.c.l.b16 %v935
        %v951 = vunpack.c.l.b16 %v936
        %v952 = vunpack.c.l.b16 %v937
        %v953 = vpack.c.b16 %v950, %v949
        %v954 = vpack.c.b16 %v952, %v951
        %957 = vmatprep.subr.bf16.mxu0 0
        %958 = vmatpush1.bf16.msra.mxu0 0
        %959 = vmatprep.subr.bf16.mxu0 0
        %960 = vmatpush1.bf16.msra.mxu0 0
        %961 = vmatprep.subr.bf16.mxu0 0
        %962 = vmatpush1.bf16.msra.mxu0 0
        %963 = vmatprep.subr.bf16.mxu0 0
        %964 = vmatpush1.bf16.msra.mxu0 0
        %965 = vmatprep.subr.bf16.mxu0 0
        %966 = vmatpush1.bf16.msra.mxu0 0
        %967 = vmatprep.subr.bf16.mxu0 0
        %968 = vmatpush1.bf16.msra.mxu0 0
        %969 = vmatprep.subr.bf16.mxu0 0
        %970 = vmatpush1.bf16.msra.mxu0 %v954
        %971 = vmatprep.subr.bf16.mxu0 0
        %972 = vmatpush1.bf16.msra.mxu0 %v953
        %973 = vmatprep.subr.bf16.mxu0 0
        %974 = vmatpush2.bf16.msra.mxu0 0
        %975 = vmatprep.subr.bf16.mxu0 0
        %976 = vmatpush2.bf16.msra.mxu0 0
        %977 = vmatprep.subr.bf16.mxu0 0
        %978 = vmatpush2.bf16.msra.mxu0 0
        %979 = vmatprep.subr.bf16.mxu0 0
        %980 = vmatpush2.bf16.msra.mxu0 0
        %981 = vmatprep.subr.bf16.mxu0 0
        %982 = vmatpush2.bf16.msra.mxu0 0
        %983 = vmatprep.subr.bf16.mxu0 0
        %984 = vmatpush2.bf16.msra.mxu0 0
        %985 = vmatprep.subr.bf16.mxu0 0
        %986 = vmatpush2.bf16.msra.mxu0 0
        %987 = vmatprep.subr.bf16.mxu0 0
        %988 = vmatpush2.bf16.msra.mxu0 0
        %989 = vmatprep.mubr.bf16.mxu0 0
        %990 = vmatmul.mubr.bf16.gmra.mxu0 %v892
        %v991 = vpop.f32.mrf.mxu0
        %v992 = vadd.f32 %v943, %v991
        %v993 = vpop.f32.mrf.mxu0
        %v994 = vpop.f32.mrf.mxu0
        %v995 = vpop.f32.mrf.mxu0
        %996 = vdwg.mxu0
        %v997 = vmul.f32 %v929, 0.35355338
        %v998 = vpack.c.bf16 %v997, %v997
        %v999 = vpack.c.bf16 %v992, %v992
        %v1000 = vsel %vm823, 1, 0
        %v1001 = vcvt.s32.f32 %v1000
        %vm1002 = vcmask 64512
        %v1004 = vsel %vm1002, %v998, 0
        %v1007 = vsel %vm1002, %v999, 0
        %1009 = vmatprep.subr.bf16.mxu0 0
        %1010 = vmatpush1.bf16.xpose.msra.mxu0 0
        %1011 = vmatprep.subr.bf16.mxu0 0
        %1012 = vmatpush1.bf16.xpose.msra.mxu0 0
        %1013 = vmatprep.subr.bf16.mxu0 0
        %1014 = vmatpush1.bf16.xpose.msra.mxu0 0
        %1015 = vmatprep.subr.bf16.mxu0 0
        %1016 = vmatpush1.bf16.xpose.msra.mxu0 0
        %1017 = vmatprep.subr.bf16.mxu0 0
        %1018 = vmatpush1.bf16.xpose.msra.mxu0 0
        %1019 = vmatprep.subr.bf16.mxu0 0
        %1020 = vmatpush1.bf16.xpose.msra.mxu0 0
        %1021 = vmatprep.subr.bf16.mxu0 0
        %1022 = vmatpush1.bf16.xpose.msra.mxu0 0
        %1023 = vmatprep.subr.bf16.mxu0 0
        %1024 = vmatpush1.bf16.xpose.msra.mxu0 %v1007
        %1025 = vmatprep.subr.bf16.mxu0 0
        %1026 = vmatpush2.bf16.xpose.msra.mxu0 0
        %1027 = vmatprep.subr.bf16.mxu0 0
        %1028 = vmatpush2.bf16.xpose.msra.mxu0 0
        %1029 = vmatprep.subr.bf16.mxu0 0
        %1030 = vmatpush2.bf16.xpose.msra.mxu0 0
        %1031 = vmatprep.subr.bf16.mxu0 0
        %1032 = vmatpush2.bf16.xpose.msra.mxu0 0
        %1033 = vmatprep.subr.bf16.mxu0 0
        %1034 = vmatpush2.bf16.xpose.msra.mxu0 0
        %1035 = vmatprep.subr.bf16.mxu0 0
        %1036 = vmatpush2.bf16.xpose.msra.mxu0 0
        %1037 = vmatprep.subr.bf16.mxu0 0
        %1038 = vmatpush2.bf16.xpose.msra.mxu0 0
        %1039 = vmatprep.subr.bf16.mxu0 0
        %1040 = vmatpush2.bf16.xpose.msra.mxu0 0
        %1041 = vmatprep.mubr.bf16.mxu0 0
        %1042 = vmatmul.mubr.bf16.gmra.mxu0 %v1004
        %v1043 = vpop.f32.mrf.mxu0
        %v1044 = vadd.f32 0.0, %v1043
        %v1045 = vpop.f32.mrf.mxu0
        %v1046 = vpop.f32.mrf.mxu0
        %v1047 = vpop.f32.mrf.mxu0
        %1048 = vdwg.mxu0
        %v1049 = vsel %vm823, %v1044, -1e+09
        %v1050 = vsel %vm1002, %v1049, -inf
        %1051 = vmax.xlane.f32.xlu0 %v1050
        %v1052 = vpop.xlane.xlu0 %1051
        %v1053 = vsub.f32 %v1049, %v1052
        %v1054 = vmul.f32 %v1053, 1.442695
        %v1055 = vpow.pop %v1054
        %v1056 = vsel %vm1002, %v1055, 0.0
        %1057 = vadd.xlane.f32.xlu0 %v1056
        %v1058 = vpop.xlane.xlu0 %1057
        %v1059 = vrcp.pop %v1058
        %v1060 = vmul.f32 %v1055, %v1059
        %v1061 = vmul.f32 %v1060, %v1001
        %v1062 = vpack.c.bf16 %v1061, %v1061
        %1064 = vrot.lane.b32.xlu0 %v999, 96
        %v1065 = vpop.permute.xlu0 %1064
        %v1067 = vsel %vm1002, %v1062, 0
        %vm1069 = vcmask 1043456
        %v1071 = vsel %vm1069, %v1065, 0
        %1073 = vmatprep.subr.bf16.mxu0 0
        %1074 = vmatpush1.bf16.msra.mxu0 0
        %1075 = vmatprep.subr.bf16.mxu0 0
        %1076 = vmatpush1.bf16.msra.mxu0 0
        %1077 = vmatprep.subr.bf16.mxu0 0
        %1078 = vmatpush1.bf16.msra.mxu0 0
        %1079 = vmatprep.subr.bf16.mxu0 0
        %1080 = vmatpush1.bf16.msra.mxu0 0
        %1081 = vmatprep.subr.bf16.mxu0 0
        %1082 = vmatpush1.bf16.msra.mxu0 0
        %1083 = vmatprep.subr.bf16.mxu0 0
        %1084 = vmatpush1.bf16.msra.mxu0 0
        %1085 = vmatprep.subr.bf16.mxu0 0
        %1086 = vmatpush1.bf16.msra.mxu0 0
        %1087 = vmatprep.subr.bf16.mxu0 0
        %1088 = vmatpush1.bf16.msra.mxu0 %v1071
        %1089 = vmatprep.subr.bf16.mxu0 0
        %1090 = vmatpush2.bf16.msra.mxu0 0
        %1091 = vmatprep.subr.bf16.mxu0 0
        %1092 = vmatpush2.bf16.msra.mxu0 0
        %1093 = vmatprep.subr.bf16.mxu0 0
        %1094 = vmatpush2.bf16.msra.mxu0 0
        %1095 = vmatprep.subr.bf16.mxu0 0
        %1096 = vmatpush2.bf16.msra.mxu0 0
        %1097 = vmatprep.subr.bf16.mxu0 0
        %1098 = vmatpush2.bf16.msra.mxu0 0
        %1099 = vmatprep.subr.bf16.mxu0 0
        %1100 = vmatpush2.bf16.msra.mxu0 0
        %1101 = vmatprep.subr.bf16.mxu0 0
        %1102 = vmatpush2.bf16.msra.mxu0 0
        %1103 = vmatprep.subr.bf16.mxu0 0
        %1104 = vmatpush2.bf16.msra.mxu0 0
        %1105 = vmatprep.mubr.bf16.mxu0 0
        %1106 = vmatmul.mubr.bf16.gmra.mxu0 %v1067
        %v1107 = vpop.f32.mrf.mxu0
        %v1108 = vadd.f32 0.0, %v1107
        %v1109 = vpop.f32.mrf.mxu0
        %v1110 = vpop.f32.mrf.mxu0
        %v1111 = vpop.f32.mrf.mxu0
        %1112 = vdwg.mxu0
        %1114 = vrot.lane.b32.xlu0 %v998, 120
        %v1115 = vpop.permute.xlu0 %1114
        %1116 = vrot.lane.b32.xlu0 %v999, 120
        %v1117 = vpop.permute.xlu0 %1116
        %v1119 = vsel %vm1002, %v1115, 0
        %v1122 = vsel %vm1002, %v1117, 0
        %1124 = vmatprep.subr.bf16.mxu0 0
        %1125 = vmatpush1.bf16.xpose.msra.mxu0 0
        %1126 = vmatprep.subr.bf16.mxu0 0
        %1127 = vmatpush1.bf16.xpose.msra.mxu0 0
        %1128 = vmatprep.subr.bf16.mxu0 0
        %1129 = vmatpush1.bf16.xpose.msra.mxu0 0
        %1130 = vmatprep.subr.bf16.mxu0 0
        %1131 = vmatpush1.bf16.xpose.msra.mxu0 0
        %1132 = vmatprep.subr.bf16.mxu0 0
        %1133 = vmatpush1.bf16.xpose.msra.mxu0 0
        %1134 = vmatprep.subr.bf16.mxu0 0
        %1135 = vmatpush1.bf16.xpose.msra.mxu0 0
        %1136 = vmatprep.subr.bf16.mxu0 0
        %1137 = vmatpush1.bf16.xpose.msra.mxu0 0
        %1138 = vmatprep.subr.bf16.mxu0 0
        %1139 = vmatpush1.bf16.xpose.msra.mxu0 %v1122
        %1140 = vmatprep.subr.bf16.mxu0 0
        %1141 = vmatpush2.bf16.xpose.msra.mxu0 0
        %1142 = vmatprep.subr.bf16.mxu0 0
        %1143 = vmatpush2.bf16.xpose.msra.mxu0 0
        %1144 = vmatprep.subr.bf16.mxu0 0
        %1145 = vmatpush2.bf16.xpose.msra.mxu0 0
        %1146 = vmatprep.subr.bf16.mxu0 0
        %1147 = vmatpush2.bf16.xpose.msra.mxu0 0
        %1148 = vmatprep.subr.bf16.mxu0 0
        %1149 = vmatpush2.bf16.xpose.msra.mxu0 0
        %1150 = vmatprep.subr.bf16.mxu0 0
        %1151 = vmatpush2.bf16.xpose.msra.mxu0 0
        %1152 = vmatprep.subr.bf16.mxu0 0
        %1153 = vmatpush2.bf16.xpose.msra.mxu0 0
        %1154 = vmatprep.subr.bf16.mxu0 0
        %1155 = vmatpush2.bf16.xpose.msra.mxu0 0
        %1156 = vmatprep.mubr.bf16.mxu0 0
        %1157 = vmatmul.mubr.bf16.gmra.mxu0 %v1119
        %v1158 = vpop.f32.mrf.mxu0
        %v1159 = vadd.f32 0.0, %v1158
        %v1160 = vpop.f32.mrf.mxu0
        %v1161 = vpop.f32.mrf.mxu0
        %v1162 = vpop.f32.mrf.mxu0
        %1163 = vdwg.mxu0
        %v1164 = vsel %vm823, %v1159, -1e+09
        %v1165 = vsel %vm1002, %v1164, -inf
        %1166 = vmax.xlane.f32.xlu0 %v1165
        %v1167 = vpop.xlane.xlu0 %1166
        %v1168 = vsub.f32 %v1164, %v1167
        %v1169 = vmul.f32 %v1168, 1.442695
        %v1170 = vpow.pop %v1169
        %v1171 = vsel %vm1002, %v1170, 0.0
        %1172 = vadd.xlane.f32.xlu0 %v1171
        %v1173 = vpop.xlane.xlu0 %1172
        %v1174 = vrcp.pop %v1173
        %v1175 = vmul.f32 %v1170, %v1174
        %v1176 = vmul.f32 %v1175, %v1001
        %v1177 = vpack.c.bf16 %v1176, %v1176
        %1178 = vrot.lane.b32.xlu0 %v999, 88
        %v1179 = vpop.permute.xlu0 %1178
        %v1181 = vsel %vm1002, %v1177, 0
        %v1184 = vsel %vm1069, %v1179, 0
        %1186 = vmatprep.subr.bf16.mxu0 0
        %1187 = vmatpush1.bf16.msra.mxu0 0
        %1188 = vmatprep.subr.bf16.mxu0 0
        %1189 = vmatpush1.bf16.msra.mxu0 0
        %1190 = vmatprep.subr.bf16.mxu0 0
        %1191 = vmatpush1.bf16.msra.mxu0 0
        %1192 = vmatprep.subr.bf16.mxu0 0
        %1193 = vmatpush1.bf16.msra.mxu0 0
        %1194 = vmatprep.subr.bf16.mxu0 0
        %1195 = vmatpush1.bf16.msra.mxu0 0
        %1196 = vmatprep.subr.bf16.mxu0 0
        %1197 = vmatpush1.bf16.msra.mxu0 0
        %1198 = vmatprep.subr.bf16.mxu0 0
        %1199 = vmatpush1.bf16.msra.mxu0 0
        %1200 = vmatprep.subr.bf16.mxu0 0
        %1201 = vmatpush1.bf16.msra.mxu0 %v1184
        %1202 = vmatprep.subr.bf16.mxu0 0
        %1203 = vmatpush2.bf16.msra.mxu0 0
        %1204 = vmatprep.subr.bf16.mxu0 0
        %1205 = vmatpush2.bf16.msra.mxu0 0
        %1206 = vmatprep.subr.bf16.mxu0 0
        %1207 = vmatpush2.bf16.msra.mxu0 0
        %1208 = vmatprep.subr.bf16.mxu0 0
        %1209 = vmatpush2.bf16.msra.mxu0 0
        %1210 = vmatprep.subr.bf16.mxu0 0
        %1211 = vmatpush2.bf16.msra.mxu0 0
        %1212 = vmatprep.subr.bf16.mxu0 0
        %1213 = vmatpush2.bf16.msra.mxu0 0
        %1214 = vmatprep.subr.bf16.mxu0 0
        %1215 = vmatpush2.bf16.msra.mxu0 0
        %1216 = vmatprep.subr.bf16.mxu0 0
        %1217 = vmatpush2.bf16.msra.mxu0 0
        %1218 = vmatprep.mubr.bf16.mxu0 0
        %1219 = vmatmul.mubr.bf16.gmra.mxu0 %v1181
        %v1220 = vpop.f32.mrf.mxu0
        %v1221 = vadd.f32 0.0, %v1220
        %v1222 = vpop.f32.mrf.mxu0
        %v1223 = vpop.f32.mrf.mxu0
        %v1224 = vpop.f32.mrf.mxu0
        %1225 = vdwg.mxu0
        %1226 = vrot.lane.b32.xlu0 %v998, 112
        %v1227 = vpop.permute.xlu0 %1226
        %1228 = vrot.lane.b32.xlu0 %v999, 112
        %v1229 = vpop.permute.xlu0 %1228
        %v1231 = vsel %vm1002, %v1227, 0
        %v1234 = vsel %vm1002, %v1229, 0
        %1236 = vmatprep.subr.bf16.mxu0 0
        %1237 = vmatpush1.bf16.xpose.msra.mxu0 0
        %1238 = vmatprep.subr.bf16.mxu0 0
        %1239 = vmatpush1.bf16.xpose.msra.mxu0 0
        %1240 = vmatprep.subr.bf16.mxu0 0
        %1241 = vmatpush1.bf16.xpose.msra.mxu0 0
        %1242 = vmatprep.subr.bf16.mxu0 0
        %1243 = vmatpush1.bf16.xpose.msra.mxu0 0
        %1244 = vmatprep.subr.bf16.mxu0 0
        %1245 = vmatpush1.bf16.xpose.msra.mxu0 0
        %1246 = vmatprep.subr.bf16.mxu0 0
        %1247 = vmatpush1.bf16.xpose.msra.mxu0 0
        %1248 = vmatprep.subr.bf16.mxu0 0
        %1249 = vmatpush1.bf16.xpose.msra.mxu0 0
        %1250 = vmatprep.subr.bf16.mxu0 0
        %1251 = vmatpush1.bf16.xpose.msra.mxu0 %v1234
        %1252 = vmatprep.subr.bf16.mxu0 0
        %1253 = vmatpush2.bf16.xpose.msra.mxu0 0
        %1254 = vmatprep.subr.bf16.mxu0 0
        %1255 = vmatpush2.bf16.xpose.msra.mxu0 0
        %1256 = vmatprep.subr.bf16.mxu0 0
        %1257 = vmatpush2.bf16.xpose.msra.mxu0 0
        %1258 = vmatprep.subr.bf16.mxu0 0
        %1259 = vmatpush2.bf16.xpose.msra.mxu0 0
        %1260 = vmatprep.subr.bf16.mxu0 0
        %1261 = vmatpush2.bf16.xpose.msra.mxu0 0
        %1262 = vmatprep.subr.bf16.mxu0 0
        %1263 = vmatpush2.bf16.xpose.msra.mxu0 0
        %1264 = vmatprep.subr.bf16.mxu0 0
        %1265 = vmatpush2.bf16.xpose.msra.mxu0 0
        %1266 = vmatprep.subr.bf16.mxu0 0
        %1267 = vmatpush2.bf16.xpose.msra.mxu0 0
        %1268 = vmatprep.mubr.bf16.mxu0 0
        %1269 = vmatmul.mubr.bf16.gmra.mxu0 %v1231
        %v1270 = vpop.f32.mrf.mxu0
        %v1271 = vadd.f32 0.0, %v1270
        %v1272 = vpop.f32.mrf.mxu0
        %v1273 = vpop.f32.mrf.mxu0
        %v1274 = vpop.f32.mrf.mxu0
        %1275 = vdwg.mxu0
        %v1276 = vsel %vm823, %v1271, -1e+09
        %v1277 = vsel %vm1002, %v1276, -inf
        %1278 = vmax.xlane.f32.xlu0 %v1277
        %v1279 = vpop.xlane.xlu0 %1278
        %v1280 = vsub.f32 %v1276, %v1279
        %v1281 = vmul.f32 %v1280, 1.442695
        %v1282 = vpow.pop %v1281
        %v1283 = vsel %vm1002, %v1282, 0.0
        %1284 = vadd.xlane.f32.xlu0 %v1283
        %v1285 = vpop.xlane.xlu0 %1284
        %v1286 = vrcp.pop %v1285
        %v1287 = vmul.f32 %v1282, %v1286
        %v1288 = vmul.f32 %v1287, %v1001
        %v1289 = vpack.c.bf16 %v1288, %v1288
        %1290 = vrot.lane.b32.xlu0 %v999, 80
        %v1291 = vpop.permute.xlu0 %1290
        %v1293 = vsel %vm1002, %v1289, 0
        %v1296 = vsel %vm1069, %v1291, 0
        %1298 = vmatprep.subr.bf16.mxu0 0
        %1299 = vmatpush1.bf16.msra.mxu0 0
        %1300 = vmatprep.subr.bf16.mxu0 0
        %1301 = vmatpush1.bf16.msra.mxu0 0
        %1302 = vmatprep.subr.bf16.mxu0 0
        %1303 = vmatpush1.bf16.msra.mxu0 0
        %1304 = vmatprep.subr.bf16.mxu0 0
        %1305 = vmatpush1.bf16.msra.mxu0 0
        %1306 = vmatprep.subr.bf16.mxu0 0
        %1307 = vmatpush1.bf16.msra.mxu0 0
        %1308 = vmatprep.subr.bf16.mxu0 0
        %1309 = vmatpush1.bf16.msra.mxu0 0
        %1310 = vmatprep.subr.bf16.mxu0 0
        %1311 = vmatpush1.bf16.msra.mxu0 0
        %1312 = vmatprep.subr.bf16.mxu0 0
        %1313 = vmatpush1.bf16.msra.mxu0 %v1296
        %1314 = vmatprep.subr.bf16.mxu0 0
        %1315 = vmatpush2.bf16.msra.mxu0 0
        %1316 = vmatprep.subr.bf16.mxu0 0
        %1317 = vmatpush2.bf16.msra.mxu0 0
        %1318 = vmatprep.subr.bf16.mxu0 0
        %1319 = vmatpush2.bf16.msra.mxu0 0
        %1320 = vmatprep.subr.bf16.mxu0 0
        %1321 = vmatpush2.bf16.msra.mxu0 0
        %1322 = vmatprep.subr.bf16.mxu0 0
        %1323 = vmatpush2.bf16.msra.mxu0 0
        %1324 = vmatprep.subr.bf16.mxu0 0
        %1325 = vmatpush2.bf16.msra.mxu0 0
        %1326 = vmatprep.subr.bf16.mxu0 0
        %1327 = vmatpush2.bf16.msra.mxu0 0
        %1328 = vmatprep.subr.bf16.mxu0 0
        %1329 = vmatpush2.bf16.msra.mxu0 0
        %1330 = vmatprep.mubr.bf16.mxu0 0
        %1331 = vmatmul.mubr.bf16.gmra.mxu0 %v1293
        %v1332 = vpop.f32.mrf.mxu0
        %v1333 = vadd.f32 0.0, %v1332
        %v1334 = vpop.f32.mrf.mxu0
        %v1335 = vpop.f32.mrf.mxu0
        %v1336 = vpop.f32.mrf.mxu0
        %1337 = vdwg.mxu0
        %1338 = vrot.lane.b32.xlu0 %v998, 104
        %v1339 = vpop.permute.xlu0 %1338
        %1340 = vrot.lane.b32.xlu0 %v999, 104
        %v1341 = vpop.permute.xlu0 %1340
        %v1343 = vsel %vm1002, %v1339, 0
        %v1346 = vsel %vm1002, %v1341, 0
        %1348 = vmatprep.subr.bf16.mxu0 0
        %1349 = vmatpush1.bf16.xpose.msra.mxu0 0
        %1350 = vmatprep.subr.bf16.mxu0 0
        %1351 = vmatpush1.bf16.xpose.msra.mxu0 0
        %1352 = vmatprep.subr.bf16.mxu0 0
        %1353 = vmatpush1.bf16.xpose.msra.mxu0 0
        %1354 = vmatprep.subr.bf16.mxu0 0
        %1355 = vmatpush1.bf16.xpose.msra.mxu0 0
        %1356 = vmatprep.subr.bf16.mxu0 0
        %1357 = vmatpush1.bf16.xpose.msra.mxu0 0
        %1358 = vmatprep.subr.bf16.mxu0 0
        %1359 = vmatpush1.bf16.xpose.msra.mxu0 0
        %1360 = vmatprep.subr.bf16.mxu0 0
        %1361 = vmatpush1.bf16.xpose.msra.mxu0 0
        %1362 = vmatprep.subr.bf16.mxu0 0
        %1363 = vmatpush1.bf16.xpose.msra.mxu0 %v1346
        %1364 = vmatprep.subr.bf16.mxu0 0
        %1365 = vmatpush2.bf16.xpose.msra.mxu0 0
        %1366 = vmatprep.subr.bf16.mxu0 0
        %1367 = vmatpush2.bf16.xpose.msra.mxu0 0
        %1368 = vmatprep.subr.bf16.mxu0 0
        %1369 = vmatpush2.bf16.xpose.msra.mxu0 0
        %1370 = vmatprep.subr.bf16.mxu0 0
        %1371 = vmatpush2.bf16.xpose.msra.mxu0 0
        %1372 = vmatprep.subr.bf16.mxu0 0
        %1373 = vmatpush2.bf16.xpose.msra.mxu0 0
        %1374 = vmatprep.subr.bf16.mxu0 0
        %1375 = vmatpush2.bf16.xpose.msra.mxu0 0
        %1376 = vmatprep.subr.bf16.mxu0 0
        %1377 = vmatpush2.bf16.xpose.msra.mxu0 0
        %1378 = vmatprep.subr.bf16.mxu0 0
        %1379 = vmatpush2.bf16.xpose.msra.mxu0 0
        %1380 = vmatprep.mubr.bf16.mxu0 0
        %1381 = vmatmul.mubr.bf16.gmra.mxu0 %v1343
        %v1382 = vpop.f32.mrf.mxu0
        %v1383 = vadd.f32 0.0, %v1382
        %v1384 = vpop.f32.mrf.mxu0
        %v1385 = vpop.f32.mrf.mxu0
        %v1386 = vpop.f32.mrf.mxu0
        %1387 = vdwg.mxu0
        %v1388 = vsel %vm823, %v1383, -1e+09
        %v1389 = vsel %vm1002, %v1388, -inf
        %1390 = vmax.xlane.f32.xlu0 %v1389
        %v1391 = vpop.xlane.xlu0 %1390
        %v1392 = vsub.f32 %v1388, %v1391
        %v1393 = vmul.f32 %v1392, 1.442695
        %v1394 = vpow.pop %v1393
        %v1395 = vsel %vm1002, %v1394, 0.0
        %1396 = vadd.xlane.f32.xlu0 %v1395
        %v1397 = vpop.xlane.xlu0 %1396
        %v1398 = vrcp.pop %v1397
        %v1399 = vmul.f32 %v1394, %v1398
        %v1400 = vmul.f32 %v1399, %v1001
        %v1401 = vpack.c.bf16 %v1400, %v1400
        %1402 = vrot.lane.b32.xlu0 %v999, 72
        %v1403 = vpop.permute.xlu0 %1402
        %v1405 = vsel %vm1002, %v1401, 0
        %v1408 = vsel %vm1069, %v1403, 0
        %1410 = vmatprep.subr.bf16.mxu0 0
        %1411 = vmatpush1.bf16.msra.mxu0 0
        %1412 = vmatprep.subr.bf16.mxu0 0
        %1413 = vmatpush1.bf16.msra.mxu0 0
        %1414 = vmatprep.subr.bf16.mxu0 0
        %1415 = vmatpush1.bf16.msra.mxu0 0
        %1416 = vmatprep.subr.bf16.mxu0 0
        %1417 = vmatpush1.bf16.msra.mxu0 0
        %1418 = vmatprep.subr.bf16.mxu0 0
        %1419 = vmatpush1.bf16.msra.mxu0 0
        %1420 = vmatprep.subr.bf16.mxu0 0
        %1421 = vmatpush1.bf16.msra.mxu0 0
        %1422 = vmatprep.subr.bf16.mxu0 0
        %1423 = vmatpush1.bf16.msra.mxu0 0
        %1424 = vmatprep.subr.bf16.mxu0 0
        %1425 = vmatpush1.bf16.msra.mxu0 %v1408
        %1426 = vmatprep.subr.bf16.mxu0 0
        %1427 = vmatpush2.bf16.msra.mxu0 0
        %1428 = vmatprep.subr.bf16.mxu0 0
        %1429 = vmatpush2.bf16.msra.mxu0 0
        %1430 = vmatprep.subr.bf16.mxu0 0
        %1431 = vmatpush2.bf16.msra.mxu0 0
        %1432 = vmatprep.subr.bf16.mxu0 0
        %1433 = vmatpush2.bf16.msra.mxu0 0
        %1434 = vmatprep.subr.bf16.mxu0 0
        %1435 = vmatpush2.bf16.msra.mxu0 0
        %1436 = vmatprep.subr.bf16.mxu0 0
        %1437 = vmatpush2.bf16.msra.mxu0 0
        %1438 = vmatprep.subr.bf16.mxu0 0
        %1439 = vmatpush2.bf16.msra.mxu0 0
        %1440 = vmatprep.subr.bf16.mxu0 0
        %1441 = vmatpush2.bf16.msra.mxu0 0
        %1442 = vmatprep.mubr.bf16.mxu0 0
        %1443 = vmatmul.mubr.bf16.gmra.mxu0 %v1405
        %v1444 = vpop.f32.mrf.mxu0
        %v1445 = vadd.f32 0.0, %v1444
        %v1446 = vpop.f32.mrf.mxu0
        %v1447 = vpop.f32.mrf.mxu0
        %v1448 = vpop.f32.mrf.mxu0
        %1449 = vdwg.mxu0
        %1451 = vrot.lane.b32.xlu0 %v1221, 8
        %v1452 = vpop.permute.xlu0 %1451
        %1455 = vrot.lane.b32.xlu0 %v1333, 16
        %v1456 = vpop.permute.xlu0 %1455
        %1459 = vrot.lane.b32.xlu0 %v1445, 24
        %v1460 = vpop.permute.xlu0 %1459
        %v1462 = vsel %vm1002, %v1108, %v1452
        %vm1463 = vcmask 130048
        %v1464 = vsel %vm1463, %v1462, %v1456
        %vm1465 = vcmask 195584
        %v1466 = vsel %vm1465, %v1464, %v1460
        %v1467 = vpack.c.bf16 %v1466, %v1466
        %v1468 = vld [vmem:[%s674] sm:$0xf]
        %v1469 = vld [vmem:[%s674 + $0x4] sm:$0xf]
        %v1470 = vld [vmem:[%s674 + $0x8] sm:$0xf]
        %v1471 = vld [vmem:[%s674 + $0xc] sm:$0xf]
        %v1472 = vld [vmem:[%s796] sm:$0x1]
        %v1474 = vlaneseq
        %v1475 = vshrl.u32 %v1474, 7
        %v1476 = vsub.s32 0, %v1475
        %v1477 = vrot.slane %v1472, %v1476
        %v1483 = vunpack.c.l.b16 %v1468
        %v1484 = vunpack.c.l.b16 %v1469
        %v1485 = vunpack.c.l.b16 %v1470
        %v1486 = vunpack.c.l.b16 %v1471
        %v1487 = vpack.c.b16 %v1484, %v1483
        %v1488 = vpack.c.b16 %v1486, %v1485
        %v1492 = vsel %vm838, %v1467, 0
        %1494 = vmatprep.subr.bf16.mxu0 0
        %1495 = vmatpush1.bf16.msra.mxu0 0
        %1496 = vmatprep.subr.bf16.mxu0 0
        %1497 = vmatpush1.bf16.msra.mxu0 0
        %1498 = vmatprep.subr.bf16.mxu0 0
        %1499 = vmatpush1.bf16.msra.mxu0 0
        %1500 = vmatprep.subr.bf16.mxu0 0
        %1501 = vmatpush1.bf16.msra.mxu0 0
        %1502 = vmatprep.subr.bf16.mxu0 0
        %1503 = vmatpush1.bf16.msra.mxu0 0
        %1504 = vmatprep.subr.bf16.mxu0 0
        %1505 = vmatpush1.bf16.msra.mxu0 0
        %1506 = vmatprep.subr.bf16.mxu0 0
        %1507 = vmatpush1.bf16.msra.mxu0 %v1488
        %1508 = vmatprep.subr.bf16.mxu0 0
        %1509 = vmatpush1.bf16.msra.mxu0 %v1487
        %1510 = vmatprep.subr.bf16.mxu0 0
        %1511 = vmatpush2.bf16.msra.mxu0 0
        %1512 = vmatprep.subr.bf16.mxu0 0
        %1513 = vmatpush2.bf16.msra.mxu0 0
        %1514 = vmatprep.subr.bf16.mxu0 0
        %1515 = vmatpush2.bf16.msra.mxu0 0
        %1516 = vmatprep.subr.bf16.mxu0 0
        %1517 = vmatpush2.bf16.msra.mxu0 0
        %1518 = vmatprep.subr.bf16.mxu0 0
        %1519 = vmatpush2.bf16.msra.mxu0 0
        %1520 = vmatprep.subr.bf16.mxu0 0
        %1521 = vmatpush2.bf16.msra.mxu0 0
        %1522 = vmatprep.subr.bf16.mxu0 0
        %1523 = vmatpush2.bf16.msra.mxu0 0
        %1524 = vmatprep.subr.bf16.mxu0 0
        %1525 = vmatpush2.bf16.msra.mxu0 0
        %1526 = vmatprep.mubr.bf16.mxu0 0
        %1527 = vmatmul.mubr.bf16.gmra.mxu0 %v1492
        %v1528 = vpop.f32.mrf.mxu0
        %v1529 = vadd.f32 %v1477, %v1528
        %v1530 = vpop.f32.mrf.mxu0
        %v1531 = vpop.f32.mrf.mxu0
        %v1532 = vpop.f32.mrf.mxu0
        %1533 = vdwg.mxu0
        %v1534 = vadd.f32 %v833, %v1529
        %s1535 = scalar_lea.vmem %s779, 1
        %v1536 = vld [vmem:[%s1535] sm:$0x1]
        %s1537 = scalar_lea.vmem %s656, 1 [#allocation10]
        %v1538 = vld [vmem:[%s1537] sm:$0x1]
        %v1539 = vsel %vm838, %v1534, 0.0
        %1540 = vadd.xlane.f32.xlu0 %v1539
        %v1541 = vpop.xlane.xlu0 %1540
        %v1542 = vmul.f32 %v1541, %v842
        %v1543 = vsub.f32 %v1534, %v1542
        %v1544 = vmul.f32 %v1543, %v1543
        %v1545 = vsel %vm838, %v1544, 0.0
        %1546 = vadd.xlane.f32.xlu0 %v1545
        %v1547 = vpop.xlane.xlu0 %1546
        %v1548 = vmul.f32 %v1547, %v842
        %v1549 = vadd.f32 %v1548, 1e-05
        %v1550 = vrsqrt.pop %v1549
        %v1551 = vmul.f32 %v1543, %v1550
        %v1553 = vlaneseq
        %v1554 = vshrl.u32 %v1553, 7
        %v1555 = vsub.s32 0, %v1554
        %v1556 = vrot.slane %v1536, %v1555
        %v1558 = vmul.f32 %v1551, %v1556
        %v1560 = vlaneseq
        %v1561 = vshrl.u32 %v1560, 7
        %v1562 = vsub.s32 0, %v1561
        %v1563 = vrot.slane %v1538, %v1562
        %v1565 = vadd.f32 %v1558, %v1563
        %v1566 = vpack.c.bf16 %v1565, %v1565
        %s1567 = scalar_lea.vmem %s784, 16
        %v1568 = vld [vmem:[%s1567] sm:$0xf]
        %v1569 = vld [vmem:[%s1567 + $0x4] sm:$0xf]
        %v1570 = vld [vmem:[%s1567 + $0x8] sm:$0xf]
        %v1571 = vld [vmem:[%s1567 + $0xc] sm:$0xf]
        %s1572 = scalar_lea.vmem %s788, 1
        %v1573 = vld [vmem:[%s1572] sm:$0x1]
        %v1575 = vlaneseq
        %v1576 = vshrl.u32 %v1575, 7
        %v1577 = vsub.s32 0, %v1576
        %v1578 = vrot.slane %v1573, %v1577
        %v1584 = vunpack.c.l.b16 %v1568
        %v1585 = vunpack.c.l.b16 %v1569
        %v1586 = vunpack.c.l.b16 %v1570
        %v1587 = vunpack.c.l.b16 %v1571
        %v1588 = vpack.c.b16 %v1585, %v1584
        %v1589 = vpack.c.b16 %v1587, %v1586
        %v1593 = vsel %vm838, %v1566, 0
        %1595 = vmatprep.subr.bf16.mxu0 0
        %1596 = vmatpush1.bf16.msra.mxu0 0
        %1597 = vmatprep.subr.bf16.mxu0 0
        %1598 = vmatpush1.bf16.msra.mxu0 0
        %1599 = vmatprep.subr.bf16.mxu0 0
        %1600 = vmatpush1.bf16.msra.mxu0 0
        %1601 = vmatprep.subr.bf16.mxu0 0
        %1602 = vmatpush1.bf16.msra.mxu0 0
        %1603 = vmatprep.subr.bf16.mxu0 0
        %1604 = vmatpush1.bf16.msra.mxu0 0
        %1605 = vmatprep.subr.bf16.mxu0 0
        %1606 = vmatpush1.bf16.msra.mxu0 0
        %1607 = vmatprep.subr.bf16.mxu0 0
        %1608 = vmatpush1.bf16.msra.mxu0 %v1589
        %1609 = vmatprep.subr.bf16.mxu0 0
        %1610 = vmatpush1.bf16.msra.mxu0 %v1588
        %1611 = vmatprep.subr.bf16.mxu0 0
        %1612 = vmatpush2.bf16.msra.mxu0 0
        %1613 = vmatprep.subr.bf16.mxu0 0
        %1614 = vmatpush2.bf16.msra.mxu0 0
        %1615 = vmatprep.subr.bf16.mxu0 0
        %1616 = vmatpush2.bf16.msra.mxu0 0
        %1617 = vmatprep.subr.bf16.mxu0 0
        %1618 = vmatpush2.bf16.msra.mxu0 0
        %1619 = vmatprep.subr.bf16.mxu0 0
        %1620 = vmatpush2.bf16.msra.mxu0 0
        %1621 = vmatprep.subr.bf16.mxu0 0
        %1622 = vmatpush2.bf16.msra.mxu0 0
        %1623 = vmatprep.subr.bf16.mxu0 0
        %1624 = vmatpush2.bf16.msra.mxu0 0
        %1625 = vmatprep.subr.bf16.mxu0 0
        %1626 = vmatpush2.bf16.msra.mxu0 0
        %1627 = vmatprep.mubr.bf16.mxu0 0
        %1628 = vmatmul.mubr.bf16.gmra.mxu0 %v1593
        %v1629 = vpop.f32.mrf.mxu0
        %v1630 = vadd.f32 %v1578, %v1629
        %v1631 = vpop.f32.mrf.mxu0
        %v1632 = vpop.f32.mrf.mxu0
        %v1633 = vpop.f32.mrf.mxu0
        %1634 = vdwg.mxu0
        %s1635 = scalar_lea.vmem %s665, 16 [#allocation11]
        %v1636 = vld [vmem:[%s1635] sm:$0xf]
        %v1637 = vld [vmem:[%s1635 + $0x4] sm:$0xf]
        %v1638 = vld [vmem:[%s1635 + $0x8] sm:$0xf]
        %v1639 = vld [vmem:[%s1635 + $0xc] sm:$0xf]
        %s1640 = scalar_lea.vmem %s792, 1
        %v1641 = vld [vmem:[%s1640] sm:$0x1]
        %v1643 = vlaneseq
        %v1644 = vshrl.u32 %v1643, 7
        %v1645 = vsub.s32 0, %v1644
        %v1646 = vrot.slane %v1641, %v1645
        %v1650 = vunpack.c.l.b16 %v834
        %v1651 = vunpack.c.l.b16 %v835
        %v1652 = vpack.c.b16 %v1651, %v1650
        %v1657 = vunpack.c.l.b16 %v1636
        %v1658 = vunpack.c.l.b16 %v1637
        %v1659 = vunpack.c.l.b16 %v1638
        %v1660 = vunpack.c.l.b16 %v1639
        %v1661 = vpack.c.b16 %v1658, %v1657
        %v1662 = vpack.c.b16 %v1660, %v1659
        %v1666 = vsel %vm838, %v1652, 0
        %1668 = vmatprep.subr.bf16.mxu0 0
        %1669 = vmatpush1.bf16.msra.mxu0 0
        %1670 = vmatprep.subr.bf16.mxu0 0
        %1671 = vmatpush1.bf16.msra.mxu0 0
        %1672 = vmatprep.subr.bf16.mxu0 0
        %1673 = vmatpush1.bf16.msra.mxu0 0
        %1674 = vmatprep.subr.bf16.mxu0 0
        %1675 = vmatpush1.bf16.msra.mxu0 0
        %1676 = vmatprep.subr.bf16.mxu0 0
        %1677 = vmatpush1.bf16.msra.mxu0 0
        %1678 = vmatprep.subr.bf16.mxu0 0
        %1679 = vmatpush1.bf16.msra.mxu0 0
        %1680 = vmatprep.subr.bf16.mxu0 0
        %1681 = vmatpush1.bf16.msra.mxu0 %v1662
        %1682 = vmatprep.subr.bf16.mxu0 0
        %1683 = vmatpush1.bf16.msra.mxu0 %v1661
        %1684 = vmatprep.subr.bf16.mxu0 0
        %1685 = vmatpush2.bf16.msra.mxu0 0
        %1686 = vmatprep.subr.bf16.mxu0 0
        %1687 = vmatpush2.bf16.msra.mxu0 0
        %1688 = vmatprep.subr.bf16.mxu0 0
        %1689 = vmatpush2.bf16.msra.mxu0 0
        %1690 = vmatprep.subr.bf16.mxu0 0
        %1691 = vmatpush2.bf16.msra.mxu0 0
        %1692 = vmatprep.subr.bf16.mxu0 0
        %1693 = vmatpush2.bf16.msra.mxu0 0
        %1694 = vmatprep.subr.bf16.mxu0 0
        %1695 = vmatpush2.bf16.msra.mxu0 0
        %1696 = vmatprep.subr.bf16.mxu0 0
        %1697 = vmatpush2.bf16.msra.mxu0 0
        %1698 = vmatprep.subr.bf16.mxu0 0
        %1699 = vmatpush2.bf16.msra.mxu0 0
        %1700 = vmatprep.mubr.bf16.mxu0 0
        %1701 = vmatmul.mubr.bf16.gmra.mxu0 %v1666
        %v1702 = vpop.f32.mrf.mxu0
        %v1703 = vadd.f32 %v1646, %v1702
        %v1704 = vpop.f32.mrf.mxu0
        %v1705 = vpop.f32.mrf.mxu0
        %v1706 = vadd.f32 %v1646, %v1705
        %v1707 = vpop.f32.mrf.mxu0
        %1708 = vdwg.mxu0
        %v1709 = vmul.f32 %v1630, 0.35355338
        %v1710 = vpack.c.bf16 %v1709, %v1709
        %v1711 = vpack.c.bf16 %v1706, %v1703
        %v1712 = vsel %vm825, 1, 0
        %v1713 = vcvt.s32.f32 %v1712
        %v1715 = vsel %vm1002, %v1710, 0
        %v1718 = vsel %vm1002, %v1711, 0
        %1720 = vmatprep.subr.bf16.mxu0 0
        %1721 = vmatpush1.bf16.xpose.msra.mxu0 0
        %1722 = vmatprep.subr.bf16.mxu0 0
        %1723 = vmatpush1.bf16.xpose.msra.mxu0 0
        %1724 = vmatprep.subr.bf16.mxu0 0
        %1725 = vmatpush1.bf16.xpose.msra.mxu0 0
        %1726 = vmatprep.subr.bf16.mxu0 0
        %1727 = vmatpush1.bf16.xpose.msra.mxu0 0
        %1728 = vmatprep.subr.bf16.mxu0 0
        %1729 = vmatpush1.bf16.xpose.msra.mxu0 0
        %1730 = vmatprep.subr.bf16.mxu0 0
        %1731 = vmatpush1.bf16.xpose.msra.mxu0 0
        %1732 = vmatprep.subr.bf16.mxu0 0
        %1733 = vmatpush1.bf16.xpose.msra.mxu0 0
        %1734 = vmatprep.subr.bf16.mxu0 0
        %1735 = vmatpush1.bf16.xpose.msra.mxu0 %v1718
        %1736 = vmatprep.subr.bf16.mxu0 0
        %1737 = vmatpush2.bf16.xpose.msra.mxu0 0
        %1738 = vmatprep.subr.bf16.mxu0 0
        %1739 = vmatpush2.bf16.xpose.msra.mxu0 0
        %1740 = vmatprep.subr.bf16.mxu0 0
        %1741 = vmatpush2.bf16.xpose.msra.mxu0 0
        %1742 = vmatprep.subr.bf16.mxu0 0
        %1743 = vmatpush2.bf16.xpose.msra.mxu0 0
        %1744 = vmatprep.subr.bf16.mxu0 0
        %1745 = vmatpush2.bf16.xpose.msra.mxu0 0
        %1746 = vmatprep.subr.bf16.mxu0 0
        %1747 = vmatpush2.bf16.xpose.msra.mxu0 0
        %1748 = vmatprep.subr.bf16.mxu0 0
        %1749 = vmatpush2.bf16.xpose.msra.mxu0 0
        %1750 = vmatprep.subr.bf16.mxu0 0
        %1751 = vmatpush2.bf16.xpose.msra.mxu0 0
        %1752 = vmatprep.mubr.bf16.mxu0 0
        %1753 = vmatmul.mubr.bf16.gmra.mxu0 %v1715
        %v1754 = vpop.f32.mrf.mxu0
        %v1755 = vadd.f32 0.0, %v1754
        %v1756 = vpop.f32.mrf.mxu0
        %v1757 = vpop.f32.mrf.mxu0
        %v1758 = vpop.f32.mrf.mxu0
        %1759 = vdwg.mxu0
        %v1760 = vsel %vm825, %v1755, -1e+09
        %v1761 = vsel %vm1463, %v1760, -inf
        %1762 = vmax.xlane.f32.xlu0 %v1761
        %v1763 = vpop.xlane.xlu0 %1762
        %v1764 = vsub.f32 %v1760, %v1763
        %v1765 = vmul.f32 %v1764, 1.442695
        %v1766 = vpow.pop %v1765
        %v1767 = vsel %vm1463, %v1766, 0.0
        %1768 = vadd.xlane.f32.xlu0 %v1767
        %v1769 = vpop.xlane.xlu0 %1768
        %v1770 = vrcp.pop %v1769
        %v1771 = vmul.f32 %v1766, %v1770
        %v1772 = vmul.f32 %v1771, %v1713
        %v1773 = vpack.c.bf16 %v1772, %v1772
        %1775 = vrot.lane.b32.xlu0 %v1711, 96
        %v1776 = vpop.permute.xlu0 %1775
        %v1779 = vsel %vm1463, %v1773, 0
        %1781 = vmatprep.subr.bf16.mxu0 0
        %1782 = vmatpush1.bf16.msra.mxu0 0
        %1783 = vmatprep.subr.bf16.mxu0 0
        %1784 = vmatpush1.bf16.msra.mxu0 0
        %1785 = vmatprep.subr.bf16.mxu0 0
        %1786 = vmatpush1.bf16.msra.mxu0 0
        %1787 = vmatprep.subr.bf16.mxu0 0
        %1788 = vmatpush1.bf16.msra.mxu0 0
        %1789 = vmatprep.subr.bf16.mxu0 0
        %1790 = vmatpush1.bf16.msra.mxu0 0
        %1791 = vmatprep.subr.bf16.mxu0 0
        %1792 = vmatpush1.bf16.msra.mxu0 0
        %1793 = vmatprep.subr.bf16.mxu0 0
        %1794 = vmatpush1.bf16.msra.mxu0 0
        %1795 = vmatprep.subr.bf16.mxu0 0
        %1796 = vmatpush1.bf16.msra.mxu0 %v1776
        %1797 = vmatprep.subr.bf16.mxu0 0
        %1798 = vmatpush2.bf16.msra.mxu0 0
        %1799 = vmatprep.subr.bf16.mxu0 0
        %1800 = vmatpush2.bf16.msra.mxu0 0
        %1801 = vmatprep.subr.bf16.mxu0 0
        %1802 = vmatpush2.bf16.msra.mxu0 0
        %1803 = vmatprep.subr.bf16.mxu0 0
        %1804 = vmatpush2.bf16.msra.mxu0 0
        %1805 = vmatprep.subr.bf16.mxu0 0
        %1806 = vmatpush2.bf16.msra.mxu0 0
        %1807 = vmatprep.subr.bf16.mxu0 0
        %1808 = vmatpush2.bf16.msra.mxu0 0
        %1809 = vmatprep.subr.bf16.mxu0 0
        %1810 = vmatpush2.bf16.msra.mxu0 0
        %1811 = vmatprep.subr.bf16.mxu0 0
        %1812 = vmatpush2.bf16.msra.mxu0 0
        %1813 = vmatprep.mubr.bf16.mxu0 0
        %1814 = vmatmul.mubr.bf16.gmra.mxu0 %v1779
        %v1815 = vpop.f32.mrf.mxu0
        %v1816 = vadd.f32 0.0, %v1815
        %v1817 = vpop.f32.mrf.mxu0
        %v1818 = vpop.f32.mrf.mxu0
        %v1819 = vpop.f32.mrf.mxu0
        %1820 = vdwg.mxu0
        %1822 = vrot.lane.b32.xlu0 %v1710, 120
        %v1823 = vpop.permute.xlu0 %1822
        %1824 = vrot.lane.b32.xlu0 %v1711, 120
        %v1825 = vpop.permute.xlu0 %1824
        %v1827 = vsel %vm1002, %v1823, 0
        %v1830 = vsel %vm1002, %v1825, 0
        %1832 = vmatprep.subr.bf16.mxu0 0
        %1833 = vmatpush1.bf16.xpose.msra.mxu0 0
        %1834 = vmatprep.subr.bf16.mxu0 0
        %1835 = vmatpush1.bf16.xpose.msra.mxu0 0
        %1836 = vmatprep.subr.bf16.mxu0 0
        %1837 = vmatpush1.bf16.xpose.msra.mxu0 0
        %1838 = vmatprep.subr.bf16.mxu0 0
        %1839 = vmatpush1.bf16.xpose.msra.mxu0 0
        %1840 = vmatprep.subr.bf16.mxu0 0
        %1841 = vmatpush1.bf16.xpose.msra.mxu0 0
        %1842 = vmatprep.subr.bf16.mxu0 0
        %1843 = vmatpush1.bf16.xpose.msra.mxu0 0
        %1844 = vmatprep.subr.bf16.mxu0 0
        %1845 = vmatpush1.bf16.xpose.msra.mxu0 0
        %1846 = vmatprep.subr.bf16.mxu0 0
        %1847 = vmatpush1.bf16.xpose.msra.mxu0 %v1830
        %1848 = vmatprep.subr.bf16.mxu0 0
        %1849 = vmatpush2.bf16.xpose.msra.mxu0 0
        %1850 = vmatprep.subr.bf16.mxu0 0
        %1851 = vmatpush2.bf16.xpose.msra.mxu0 0
        %1852 = vmatprep.subr.bf16.mxu0 0
        %1853 = vmatpush2.bf16.xpose.msra.mxu0 0
        %1854 = vmatprep.subr.bf16.mxu0 0
        %1855 = vmatpush2.bf16.xpose.msra.mxu0 0
        %1856 = vmatprep.subr.bf16.mxu0 0
        %1857 = vmatpush2.bf16.xpose.msra.mxu0 0
        %1858 = vmatprep.subr.bf16.mxu0 0
        %1859 = vmatpush2.bf16.xpose.msra.mxu0 0
        %1860 = vmatprep.subr.bf16.mxu0 0
        %1861 = vmatpush2.bf16.xpose.msra.mxu0 0
        %1862 = vmatprep.subr.bf16.mxu0 0
        %1863 = vmatpush2.bf16.xpose.msra.mxu0 0
        %1864 = vmatprep.mubr.bf16.mxu0 0
        %1865 = vmatmul.mubr.bf16.gmra.mxu0 %v1827
        %v1866 = vpop.f32.mrf.mxu0
        %v1867 = vadd.f32 0.0, %v1866
        %v1868 = vpop.f32.mrf.mxu0
        %v1869 = vpop.f32.mrf.mxu0
        %v1870 = vpop.f32.mrf.mxu0
        %1871 = vdwg.mxu0
        %v1872 = vsel %vm825, %v1867, -1e+09
        %v1873 = vsel %vm1463, %v1872, -inf
        %1874 = vmax.xlane.f32.xlu0 %v1873
        %v1875 = vpop.xlane.xlu0 %1874
        %v1876 = vsub.f32 %v1872, %v1875
        %v1877 = vmul.f32 %v1876, 1.442695
        %v1878 = vpow.pop %v1877
        %v1879 = vsel %vm1463, %v1878, 0.0
        %1880 = vadd.xlane.f32.xlu0 %v1879
        %v1881 = vpop.xlane.xlu0 %1880
        %v1882 = vrcp.pop %v1881
        %v1883 = vmul.f32 %v1878, %v1882
        %v1884 = vmul.f32 %v1883, %v1713
        %v1885 = vpack.c.bf16 %v1884, %v1884
        %1886 = vrot.lane.b32.xlu0 %v1711, 88
        %v1887 = vpop.permute.xlu0 %1886
        %v1890 = vsel %vm1463, %v1885, 0
        %1892 = vmatprep.subr.bf16.mxu0 0
        %1893 = vmatpush1.bf16.msra.mxu0 0
        %1894 = vmatprep.subr.bf16.mxu0 0
        %1895 = vmatpush1.bf16.msra.mxu0 0
        %1896 = vmatprep.subr.bf16.mxu0 0
        %1897 = vmatpush1.bf16.msra.mxu0 0
        %1898 = vmatprep.subr.bf16.mxu0 0
        %1899 = vmatpush1.bf16.msra.mxu0 0
        %1900 = vmatprep.subr.bf16.mxu0 0
        %1901 = vmatpush1.bf16.msra.mxu0 0
        %1902 = vmatprep.subr.bf16.mxu0 0
        %1903 = vmatpush1.bf16.msra.mxu0 0
        %1904 = vmatprep.subr.bf16.mxu0 0
        %1905 = vmatpush1.bf16.msra.mxu0 0
        %1906 = vmatprep.subr.bf16.mxu0 0
        %1907 = vmatpush1.bf16.msra.mxu0 %v1887
        %1908 = vmatprep.subr.bf16.mxu0 0
        %1909 = vmatpush2.bf16.msra.mxu0 0
        %1910 = vmatprep.subr.bf16.mxu0 0
        %1911 = vmatpush2.bf16.msra.mxu0 0
        %1912 = vmatprep.subr.bf16.mxu0 0
        %1913 = vmatpush2.bf16.msra.mxu0 0
        %1914 = vmatprep.subr.bf16.mxu0 0
        %1915 = vmatpush2.bf16.msra.mxu0 0
        %1916 = vmatprep.subr.bf16.mxu0 0
        %1917 = vmatpush2.bf16.msra.mxu0 0
        %1918 = vmatprep.subr.bf16.mxu0 0
        %1919 = vmatpush2.bf16.msra.mxu0 0
        %1920 = vmatprep.subr.bf16.mxu0 0
        %1921 = vmatpush2.bf16.msra.mxu0 0
        %1922 = vmatprep.subr.bf16.mxu0 0
        %1923 = vmatpush2.bf16.msra.mxu0 0
        %1924 = vmatprep.mubr.bf16.mxu0 0
        %1925 = vmatmul.mubr.bf16.gmra.mxu0 %v1890
        %v1926 = vpop.f32.mrf.mxu0
        %v1927 = vadd.f32 0.0, %v1926
        %v1928 = vpop.f32.mrf.mxu0
        %v1929 = vpop.f32.mrf.mxu0
        %v1930 = vpop.f32.mrf.mxu0
        %1931 = vdwg.mxu0
        %1932 = vrot.lane.b32.xlu0 %v1710, 112
        %v1933 = vpop.permute.xlu0 %1932
        %1934 = vrot.lane.b32.xlu0 %v1711, 112
        %v1935 = vpop.permute.xlu0 %1934
        %v1937 = vsel %vm1002, %v1933, 0
        %v1940 = vsel %vm1002, %v1935, 0
        %1942 = vmatprep.subr.bf16.mxu0 0
        %1943 = vmatpush1.bf16.xpose.msra.mxu0 0
        %1944 = vmatprep.subr.bf16.mxu0 0
        %1945 = vmatpush1.bf16.xpose.msra.mxu0 0
        %1946 = vmatprep.subr.bf16.mxu0 0
        %1947 = vmatpush1.bf16.xpose.msra.mxu0 0
        %1948 = vmatprep.subr.bf16.mxu0 0
        %1949 = vmatpush1.bf16.xpose.msra.mxu0 0
        %1950 = vmatprep.subr.bf16.mxu0 0
        %1951 = vmatpush1.bf16.xpose.msra.mxu0 0
        %1952 = vmatprep.subr.bf16.mxu0 0
        %1953 = vmatpush1.bf16.xpose.msra.mxu0 0
        %1954 = vmatprep.subr.bf16.mxu0 0
        %1955 = vmatpush1.bf16.xpose.msra.mxu0 0
        %1956 = vmatprep.subr.bf16.mxu0 0
        %1957 = vmatpush1.bf16.xpose.msra.mxu0 %v1940
        %1958 = vmatprep.subr.bf16.mxu0 0
        %1959 = vmatpush2.bf16.xpose.msra.mxu0 0
        %1960 = vmatprep.subr.bf16.mxu0 0
        %1961 = vmatpush2.bf16.xpose.msra.mxu0 0
        %1962 = vmatprep.subr.bf16.mxu0 0
        %1963 = vmatpush2.bf16.xpose.msra.mxu0 0
        %1964 = vmatprep.subr.bf16.mxu0 0
        %1965 = vmatpush2.bf16.xpose.msra.mxu0 0
        %1966 = vmatprep.subr.bf16.mxu0 0
        %1967 = vmatpush2.bf16.xpose.msra.mxu0 0
        %1968 = vmatprep.subr.bf16.mxu0 0
        %1969 = vmatpush2.bf16.xpose.msra.mxu0 0
        %1970 = vmatprep.subr.bf16.mxu0 0
        %1971 = vmatpush2.bf16.xpose.msra.mxu0 0
        %1972 = vmatprep.subr.bf16.mxu0 0
        %1973 = vmatpush2.bf16.xpose.msra.mxu0 0
        %1974 = vmatprep.mubr.bf16.mxu0 0
        %1975 = vmatmul.mubr.bf16.gmra.mxu0 %v1937
        %v1976 = vpop.f32.mrf.mxu0
        %v1977 = vadd.f32 0.0, %v1976
        %v1978 = vpop.f32.mrf.mxu0
        %v1979 = vpop.f32.mrf.mxu0
        %v1980 = vpop.f32.mrf.mxu0
        %1981 = vdwg.mxu0
        %v1982 = vsel %vm825, %v1977, -1e+09
        %v1983 = vsel %vm1463, %v1982, -inf
        %1984 = vmax.xlane.f32.xlu0 %v1983
        %v1985 = vpop.xlane.xlu0 %1984
        %v1986 = vsub.f32 %v1982, %v1985
        %v1987 = vmul.f32 %v1986, 1.442695
        %v1988 = vpow.pop %v1987
        %v1989 = vsel %vm1463, %v1988, 0.0
        %1990 = vadd.xlane.f32.xlu0 %v1989
        %v1991 = vpop.xlane.xlu0 %1990
        %v1992 = vrcp.pop %v1991
        %v1993 = vmul.f32 %v1988, %v1992
        %v1994 = vmul.f32 %v1993, %v1713
        %v1995 = vpack.c.bf16 %v1994, %v1994
        %1996 = vrot.lane.b32.xlu0 %v1711, 80
        %v1997 = vpop.permute.xlu0 %1996
        %v2000 = vsel %vm1463, %v1995, 0
        %2002 = vmatprep.subr.bf16.mxu0 0
        %2003 = vmatpush1.bf16.msra.mxu0 0
        %2004 = vmatprep.subr.bf16.mxu0 0
        %2005 = vmatpush1.bf16.msra.mxu0 0
        %2006 = vmatprep.subr.bf16.mxu0 0
        %2007 = vmatpush1.bf16.msra.mxu0 0
        %2008 = vmatprep.subr.bf16.mxu0 0
        %2009 = vmatpush1.bf16.msra.mxu0 0
        %2010 = vmatprep.subr.bf16.mxu0 0
        %2011 = vmatpush1.bf16.msra.mxu0 0
        %2012 = vmatprep.subr.bf16.mxu0 0
        %2013 = vmatpush1.bf16.msra.mxu0 0
        %2014 = vmatprep.subr.bf16.mxu0 0
        %2015 = vmatpush1.bf16.msra.mxu0 0
        %2016 = vmatprep.subr.bf16.mxu0 0
        %2017 = vmatpush1.bf16.msra.mxu0 %v1997
        %2018 = vmatprep.subr.bf16.mxu0 0
        %2019 = vmatpush2.bf16.msra.mxu0 0
        %2020 = vmatprep.subr.bf16.mxu0 0
        %2021 = vmatpush2.bf16.msra.mxu0 0
        %2022 = vmatprep.subr.bf16.mxu0 0
        %2023 = vmatpush2.bf16.msra.mxu0 0
        %2024 = vmatprep.subr.bf16.mxu0 0
        %2025 = vmatpush2.bf16.msra.mxu0 0
        %2026 = vmatprep.subr.bf16.mxu0 0
        %2027 = vmatpush2.bf16.msra.mxu0 0
        %2028 = vmatprep.subr.bf16.mxu0 0
        %2029 = vmatpush2.bf16.msra.mxu0 0
        %2030 = vmatprep.subr.bf16.mxu0 0
        %2031 = vmatpush2.bf16.msra.mxu0 0
        %2032 = vmatprep.subr.bf16.mxu0 0
        %2033 = vmatpush2.bf16.msra.mxu0 0
        %2034 = vmatprep.mubr.bf16.mxu0 0
        %2035 = vmatmul.mubr.bf16.gmra.mxu0 %v2000
        %v2036 = vpop.f32.mrf.mxu0
        %v2037 = vadd.f32 0.0, %v2036
        %v2038 = vpop.f32.mrf.mxu0
        %v2039 = vpop.f32.mrf.mxu0
        %v2040 = vpop.f32.mrf.mxu0
        %2041 = vdwg.mxu0
        %2042 = vrot.lane.b32.xlu0 %v1710, 104
        %v2043 = vpop.permute.xlu0 %2042
        %2044 = vrot.lane.b32.xlu0 %v1711, 104
        %v2045 = vpop.permute.xlu0 %2044
        %v2047 = vsel %vm1002, %v2043, 0
        %v2050 = vsel %vm1002, %v2045, 0
        %2052 = vmatprep.subr.bf16.mxu0 0
        %2053 = vmatpush1.bf16.xpose.msra.mxu0 0
        %2054 = vmatprep.subr.bf16.mxu0 0
        %2055 = vmatpush1.bf16.xpose.msra.mxu0 0
        %2056 = vmatprep.subr.bf16.mxu0 0
        %2057 = vmatpush1.bf16.xpose.msra.mxu0 0
        %2058 = vmatprep.subr.bf16.mxu0 0
        %2059 = vmatpush1.bf16.xpose.msra.mxu0 0
        %2060 = vmatprep.subr.bf16.mxu0 0
        %2061 = vmatpush1.bf16.xpose.msra.mxu0 0
        %2062 = vmatprep.subr.bf16.mxu0 0
        %2063 = vmatpush1.bf16.xpose.msra.mxu0 0
        %2064 = vmatprep.subr.bf16.mxu0 0
        %2065 = vmatpush1.bf16.xpose.msra.mxu0 0
        %2066 = vmatprep.subr.bf16.mxu0 0
        %2067 = vmatpush1.bf16.xpose.msra.mxu0 %v2050
        %2068 = vmatprep.subr.bf16.mxu0 0
        %2069 = vmatpush2.bf16.xpose.msra.mxu0 0
        %2070 = vmatprep.subr.bf16.mxu0 0
        %2071 = vmatpush2.bf16.xpose.msra.mxu0 0
        %2072 = vmatprep.subr.bf16.mxu0 0
        %2073 = vmatpush2.bf16.xpose.msra.mxu0 0
        %2074 = vmatprep.subr.bf16.mxu0 0
        %2075 = vmatpush2.bf16.xpose.msra.mxu0 0
        %2076 = vmatprep.subr.bf16.mxu0 0
        %2077 = vmatpush2.bf16.xpose.msra.mxu0 0
        %2078 = vmatprep.subr.bf16.mxu0 0
        %2079 = vmatpush2.bf16.xpose.msra.mxu0 0
        %2080 = vmatprep.subr.bf16.mxu0 0
        %2081 = vmatpush2.bf16.xpose.msra.mxu0 0
        %2082 = vmatprep.subr.bf16.mxu0 0
        %2083 = vmatpush2.bf16.xpose.msra.mxu0 0
        %2084 = vmatprep.mubr.bf16.mxu0 0
        %2085 = vmatmul.mubr.bf16.gmra.mxu0 %v2047
        %v2086 = vpop.f32.mrf.mxu0
        %v2087 = vadd.f32 0.0, %v2086
        %v2088 = vpop.f32.mrf.mxu0
        %v2089 = vpop.f32.mrf.mxu0
        %v2090 = vpop.f32.mrf.mxu0
        %2091 = vdwg.mxu0
        %v2092 = vsel %vm825, %v2087, -1e+09
        %v2093 = vsel %vm1463, %v2092, -inf
        %2094 = vmax.xlane.f32.xlu0 %v2093
        %v2095 = vpop.xlane.xlu0 %2094
        %v2096 = vsub.f32 %v2092, %v2095
        %v2097 = vmul.f32 %v2096, 1.442695
        %v2098 = vpow.pop %v2097
        %v2099 = vsel %vm1463, %v2098, 0.0
        %2100 = vadd.xlane.f32.xlu0 %v2099
        %v2101 = vpop.xlane.xlu0 %2100
        %v2102 = vrcp.pop %v2101
        %v2103 = vmul.f32 %v2098, %v2102
        %v2104 = vmul.f32 %v2103, %v1713
        %v2105 = vpack.c.bf16 %v2104, %v2104
        %2106 = vrot.lane.b32.xlu0 %v1711, 72
        %v2107 = vpop.permute.xlu0 %2106
        %v2110 = vsel %vm1463, %v2105, 0
        %2112 = vmatprep.subr.bf16.mxu0 0
        %2113 = vmatpush1.bf16.msra.mxu0 0
        %2114 = vmatprep.subr.bf16.mxu0 0
        %2115 = vmatpush1.bf16.msra.mxu0 0
        %2116 = vmatprep.subr.bf16.mxu0 0
        %2117 = vmatpush1.bf16.msra.mxu0 0
        %2118 = vmatprep.subr.bf16.mxu0 0
        %2119 = vmatpush1.bf16.msra.mxu0 0
        %2120 = vmatprep.subr.bf16.mxu0 0
        %2121 = vmatpush1.bf16.msra.mxu0 0
        %2122 = vmatprep.subr.bf16.mxu0 0
        %2123 = vmatpush1.bf16.msra.mxu0 0
        %2124 = vmatprep.subr.bf16.mxu0 0
        %2125 = vmatpush1.bf16.msra.mxu0 0
        %2126 = vmatprep.subr.bf16.mxu0 0
        %2127 = vmatpush1.bf16.msra.mxu0 %v2107
        %2128 = vmatprep.subr.bf16.mxu0 0
        %2129 = vmatpush2.bf16.msra.mxu0 0
        %2130 = vmatprep.subr.bf16.mxu0 0
        %2131 = vmatpush2.bf16.msra.mxu0 0
        %2132 = vmatprep.subr.bf16.mxu0 0
        %2133 = vmatpush2.bf16.msra.mxu0 0
        %2134 = vmatprep.subr.bf16.mxu0 0
        %2135 = vmatpush2.bf16.msra.mxu0 0
        %2136 = vmatprep.subr.bf16.mxu0 0
        %2137 = vmatpush2.bf16.msra.mxu0 0
        %2138 = vmatprep.subr.bf16.mxu0 0
        %2139 = vmatpush2.bf16.msra.mxu0 0
        %2140 = vmatprep.subr.bf16.mxu0 0
        %2141 = vmatpush2.bf16.msra.mxu0 0
        %2142 = vmatprep.subr.bf16.mxu0 0
        %2143 = vmatpush2.bf16.msra.mxu0 0
        %2144 = vmatprep.mubr.bf16.mxu0 0
        %2145 = vmatmul.mubr.bf16.gmra.mxu0 %v2110
        %v2146 = vpop.f32.mrf.mxu0
        %v2147 = vadd.f32 0.0, %v2146
        %v2148 = vpop.f32.mrf.mxu0
        %v2149 = vpop.f32.mrf.mxu0
        %v2150 = vpop.f32.mrf.mxu0
        %2151 = vdwg.mxu0
        %2153 = vrot.lane.b32.xlu0 %v1927, 8
        %v2154 = vpop.permute.xlu0 %2153
        %2157 = vrot.lane.b32.xlu0 %v2037, 16
        %v2158 = vpop.permute.xlu0 %2157
        %2161 = vrot.lane.b32.xlu0 %v2147, 24
        %v2162 = vpop.permute.xlu0 %2161
        %v2164 = vsel %vm1002, %v1816, %v2154
        %v2165 = vsel %vm1463, %v2164, %v2158
        %v2166 = vsel %vm1465, %v2165, %v2162
        %v2167 = vpack.c.bf16 %v2166, %v2166
        %s2168 = scalar_lea.vmem %s674, 16 [#allocation13]
        %v2169 = vld [vmem:[%s2168] sm:$0xf]
        %v2170 = vld [vmem:[%s2168 + $0x4] sm:$0xf]
        %v2171 = vld [vmem:[%s2168 + $0x8] sm:$0xf]
        %v2172 = vld [vmem:[%s2168 + $0xc] sm:$0xf]
        %s2173 = scalar_lea.vmem %s796, 1
        %v2174 = vld [vmem:[%s2173] sm:$0x1]
        %v2176 = vlaneseq
        %v2177 = vshrl.u32 %v2176, 7
        %v2178 = vsub.s32 0, %v2177
        %v2179 = vrot.slane %v2174, %v2178
        %v2185 = vunpack.c.l.b16 %v2169
        %v2186 = vunpack.c.l.b16 %v2170
        %v2187 = vunpack.c.l.b16 %v2171
        %v2188 = vunpack.c.l.b16 %v2172
        %v2189 = vpack.c.b16 %v2186, %v2185
        %v2190 = vpack.c.b16 %v2188, %v2187
        %v2194 = vsel %vm838, %v2167, 0
        %2196 = vmatprep.subr.bf16.mxu0 0
        %2197 = vmatpush1.bf16.msra.mxu0 0
        %2198 = vmatprep.subr.bf16.mxu0 0
        %2199 = vmatpush1.bf16.msra.mxu0 0
        %2200 = vmatprep.subr.bf16.mxu0 0
        %2201 = vmatpush1.bf16.msra.mxu0 0
        %2202 = vmatprep.subr.bf16.mxu0 0
        %2203 = vmatpush1.bf16.msra.mxu0 0
        %2204 = vmatprep.subr.bf16.mxu0 0
        %2205 = vmatpush1.bf16.msra.mxu0 0
        %2206 = vmatprep.subr.bf16.mxu0 0
        %2207 = vmatpush1.bf16.msra.mxu0 0
        %2208 = vmatprep.subr.bf16.mxu0 0
        %2209 = vmatpush1.bf16.msra.mxu0 %v2190
        %2210 = vmatprep.subr.bf16.mxu0 0
        %2211 = vmatpush1.bf16.msra.mxu0 %v2189
        %2212 = vmatprep.subr.bf16.mxu0 0
        %2213 = vmatpush2.bf16.msra.mxu0 0
        %2214 = vmatprep.subr.bf16.mxu0 0
        %2215 = vmatpush2.bf16.msra.mxu0 0
        %2216 = vmatprep.subr.bf16.mxu0 0
        %2217 = vmatpush2.bf16.msra.mxu0 0
        %2218 = vmatprep.subr.bf16.mxu0 0
        %2219 = vmatpush2.bf16.msra.mxu0 0
        %2220 = vmatprep.subr.bf16.mxu0 0
        %2221 = vmatpush2.bf16.msra.mxu0 0
        %2222 = vmatprep.subr.bf16.mxu0 0
        %2223 = vmatpush2.bf16.msra.mxu0 0
        %2224 = vmatprep.subr.bf16.mxu0 0
        %2225 = vmatpush2.bf16.msra.mxu0 0
        %2226 = vmatprep.subr.bf16.mxu0 0
        %2227 = vmatpush2.bf16.msra.mxu0 0
        %2228 = vmatprep.mubr.bf16.mxu0 0
        %2229 = vmatmul.mubr.bf16.gmra.mxu0 %v2194
        %v2230 = vpop.f32.mrf.mxu0
        %v2231 = vadd.f32 %v2179, %v2230
        %v2232 = vpop.f32.mrf.mxu0
        %v2233 = vpop.f32.mrf.mxu0
        %v2234 = vpop.f32.mrf.mxu0
        %2235 = vdwg.mxu0
        %v2236 = vadd.f32 %v1534, %v2231
        %s2237 = scalar_lea.vmem %s779, 2
        %v2238 = vld [vmem:[%s2237] sm:$0x1]
        %s2239 = scalar_lea.vmem %s656, 2 [#allocation10]
        %v2240 = vld [vmem:[%s2239] sm:$0x1]
        %v2241 = vsel %vm838, %v2236, 0.0
        %2242 = vadd.xlane.f32.xlu0 %v2241
        %v2243 = vpop.xlane.xlu0 %2242
        %v2244 = vmul.f32 %v2243, %v842
        %v2245 = vsub.f32 %v2236, %v2244
        %v2246 = vmul.f32 %v2245, %v2245
        %v2247 = vsel %vm838, %v2246, 0.0
        %2248 = vadd.xlane.f32.xlu0 %v2247
        %v2249 = vpop.xlane.xlu0 %2248
        %v2250 = vmul.f32 %v2249, %v842
        %v2251 = vadd.f32 %v2250, 1e-05
        %v2252 = vrsqrt.pop %v2251
        %v2253 = vmul.f32 %v2245, %v2252
        %v2255 = vlaneseq
        %v2256 = vshrl.u32 %v2255, 7
        %v2257 = vsub.s32 0, %v2256
        %v2258 = vrot.slane %v2238, %v2257
        %v2260 = vmul.f32 %v2253, %v2258
        %v2262 = vlaneseq
        %v2263 = vshrl.u32 %v2262, 7
        %v2264 = vsub.s32 0, %v2263
        %v2265 = vrot.slane %v2240, %v2264
        %v2267 = vadd.f32 %v2260, %v2265
        %v2268 = vpack.c.bf16 %v2267, %v2267
        %v2269 = vld [vmem:[%s801] sm:$0xf]
        %v2270 = vld [vmem:[%s801 + $0x4] sm:$0xf]
        %v2271 = vld [vmem:[%s801 + $0x8] sm:$0xf]
        %v2272 = vld [vmem:[%s801 + $0xc] sm:$0xf]
        %v2273 = vld [vmem:[%s804] sm:$0x1]
        %v2275 = vlaneseq
        %v2276 = vshrl.u32 %v2275, 7
        %v2277 = vsub.s32 0, %v2276
        %v2278 = vrot.slane %v2273, %v2277
        %v2284 = vunpack.c.l.b16 %v2269
        %v2285 = vunpack.c.l.b16 %v2270
        %v2286 = vunpack.c.l.b16 %v2271
        %v2287 = vunpack.c.l.b16 %v2272
        %v2288 = vpack.c.b16 %v2285, %v2284
        %v2289 = vpack.c.b16 %v2287, %v2286
        %v2293 = vsel %vm838, %v2268, 0
        %2295 = vmatprep.subr.bf16.mxu0 0
        %2296 = vmatpush1.bf16.msra.mxu0 0
        %2297 = vmatprep.subr.bf16.mxu0 0
        %2298 = vmatpush1.bf16.msra.mxu0 0
        %2299 = vmatprep.subr.bf16.mxu0 0
        %2300 = vmatpush1.bf16.msra.mxu0 0
        %2301 = vmatprep.subr.bf16.mxu0 0
        %2302 = vmatpush1.bf16.msra.mxu0 0
        %2303 = vmatprep.subr.bf16.mxu0 0
        %2304 = vmatpush1.bf16.msra.mxu0 0
        %2305 = vmatprep.subr.bf16.mxu0 0
        %2306 = vmatpush1.bf16.msra.mxu0 0
        %2307 = vmatprep.subr.bf16.mxu0 0
        %2308 = vmatpush1.bf16.msra.mxu0 %v2289
        %2309 = vmatprep.subr.bf16.mxu0 0
        %2310 = vmatpush1.bf16.msra.mxu0 %v2288
        %2311 = vmatprep.subr.bf16.mxu0 0
        %2312 = vmatpush2.bf16.msra.mxu0 0
        %2313 = vmatprep.subr.bf16.mxu0 0
        %2314 = vmatpush2.bf16.msra.mxu0 0
        %2315 = vmatprep.subr.bf16.mxu0 0
        %2316 = vmatpush2.bf16.msra.mxu0 0
        %2317 = vmatprep.subr.bf16.mxu0 0
        %2318 = vmatpush2.bf16.msra.mxu0 0
        %2319 = vmatprep.subr.bf16.mxu0 0
        %2320 = vmatpush2.bf16.msra.mxu0 0
        %2321 = vmatprep.subr.bf16.mxu0 0
        %2322 = vmatpush2.bf16.msra.mxu0 0
        %2323 = vmatprep.subr.bf16.mxu0 0
        %2324 = vmatpush2.bf16.msra.mxu0 0
        %2325 = vmatprep.subr.bf16.mxu0 0
        %2326 = vmatpush2.bf16.msra.mxu0 0
        %2327 = vmatprep.mubr.bf16.mxu0 0
        %2328 = vmatmul.mubr.bf16.gmra.mxu0 %v2293
        %v2329 = vpop.f32.mrf.mxu0
        %v2330 = vadd.f32 %v2278, %v2329
        %v2331 = vpop.f32.mrf.mxu0
        %v2332 = vpop.f32.mrf.mxu0
        %v2333 = vpop.f32.mrf.mxu0
        %2334 = vdwg.mxu0
        %v2335 = vmax.f32 %v2330, 0.0
        %v2336 = vpack.c.bf16 %v2335, %v2335
        %v2337 = vld [vmem:[%s809] sm:$0xf]
        %v2338 = vld [vmem:[%s809 + $0x4] sm:$0xf]
        %v2339 = vld [vmem:[%s809 + $0x8] sm:$0xf]
        %v2340 = vld [vmem:[%s809 + $0xc] sm:$0xf]
        %v2341 = vld [vmem:[%s809 + $0x10] sm:$0xf]
        %v2342 = vld [vmem:[%s809 + $0x14] sm:$0xf]
        %v2343 = vld [vmem:[%s809 + $0x18] sm:$0xf]
        %v2344 = vld [vmem:[%s809 + $0x1c] sm:$0xf]
        %v2353 = vunpack.c.l.b16 %v2337
        %v2354 = vunpack.c.l.b16 %v2338
        %v2355 = vunpack.c.l.b16 %v2339
        %v2356 = vunpack.c.l.b16 %v2340
        %v2357 = vunpack.c.l.b16 %v2341
        %v2358 = vunpack.c.l.b16 %v2342
        %v2359 = vunpack.c.l.b16 %v2343
        %v2360 = vunpack.c.l.b16 %v2344
        %v2361 = vpack.c.b16 %v2354, %v2353
        %v2362 = vpack.c.b16 %v2356, %v2355
        %v2363 = vpack.c.b16 %v2358, %v2357
        %v2364 = vpack.c.b16 %v2360, %v2359
        %vm2369 = vcmask 523264
        %v2371 = vsel %vm2369, %v2336, 0
        %2373 = vmatprep.subr.bf16.mxu0 0
        %2374 = vmatpush1.bf16.msra.mxu0 0
        %2375 = vmatprep.subr.bf16.mxu0 0
        %2376 = vmatpush1.bf16.msra.mxu0 0
        %2377 = vmatprep.subr.bf16.mxu0 0
        %2378 = vmatpush1.bf16.msra.mxu0 0
        %2379 = vmatprep.subr.bf16.mxu0 0
        %2380 = vmatpush1.bf16.msra.mxu0 0
        %2381 = vmatprep.subr.bf16.mxu0 0
        %2382 = vmatpush1.bf16.msra.mxu0 %v2364
        %2383 = vmatprep.subr.bf16.mxu0 0
        %2384 = vmatpush1.bf16.msra.mxu0 %v2363
        %2385 = vmatprep.subr.bf16.mxu0 0
        %2386 = vmatpush1.bf16.msra.mxu0 %v2362
        %2387 = vmatprep.subr.bf16.mxu0 0
        %2388 = vmatpush1.bf16.msra.mxu0 %v2361
        %2389 = vmatprep.subr.bf16.mxu0 0
        %2390 = vmatpush2.bf16.msra.mxu0 0
        %2391 = vmatprep.subr.bf16.mxu0 0
        %2392 = vmatpush2.bf16.msra.mxu0 0
        %2393 = vmatprep.subr.bf16.mxu0 0
        %2394 = vmatpush2.bf16.msra.mxu0 0
        %2395 = vmatprep.subr.bf16.mxu0 0
        %2396 = vmatpush2.bf16.msra.mxu0 0
        %2397 = vmatprep.subr.bf16.mxu0 0
        %2398 = vmatpush2.bf16.msra.mxu0 0
        %2399 = vmatprep.subr.bf16.mxu0 0
        %2400 = vmatpush2.bf16.msra.mxu0 0
        %2401 = vmatprep.subr.bf16.mxu0 0
        %2402 = vmatpush2.bf16.msra.mxu0 0
        %2403 = vmatprep.subr.bf16.mxu0 0
        %2404 = vmatpush2.bf16.msra.mxu0 0
        %2405 = vmatprep.mubr.bf16.mxu0 0
        %2406 = vmatmul.mubr.bf16.gmra.mxu0 %v2371
        %v2407 = vpop.f32.mrf.mxu0
        %v2408 = vadd.f32 0.0, %v2407
        %v2409 = vpop.f32.mrf.mxu0
        %v2410 = vpop.f32.mrf.mxu0
        %v2411 = vpop.f32.mrf.mxu0
        %2412 = vdwg.mxu0
        %v2413 = vadd.f32 %v2236, %v2408
        %v2414 = vld [vmem:[%s812] sm:$0x1]
        %v2416 = vlaneseq
        %v2417 = vshrl.u32 %v2416, 7
        %v2418 = vsub.s32 0, %v2417
        %v2419 = vrot.slane %v2414, %v2418
        %v2421 = vadd.f32 %v2413, %v2419
        %2422 = vst.msk [vmem:[%s775] sm:$0xff] %vm838, %v2421
        %s2423 = sand.u32 %s429, 1
        %s2424 = scalar_lea.sflag [#allocation7], %s2423
        %s2425 = sand.u32 %s429, 1
        %s2426 = smul.addr %s2425, 8
        %s2427 = scalar_lea.vmem [#allocation14], %s2426
        // Predicated region
        $region101: #{tpu_custom_call.1} parent=75 // pred_check
          %p2428 = pneg %p439
        $region102: #{tpu_custom_call.1} parent=75 // pred_check_branch
          %2430 = sbr.rel (%p2428) target = $region104
        $region103: #{tpu_custom_call.1} parent=75 // pred_region
          %s2432 = ssub.s32 128, 128
          %2433 = vsyncadd %s2424, %s2432
          %s2434 = smul.addr %s49, 128
          %s2435 = scalar_lea.hbm %s16, %s2434
          %s2437 = sshll.u32 %s2427, 4
          %s2438 = int_to_ptr.vmem [resolvable:$true] %s2437
          %2440 = dma.vmem_to_hbm [thread:$0]  %s2438, 128, %s2435, %s2424
        $region104: #{tpu_custom_call.1} parent=75 // pred_fallthru
          _
      $region76: #{tpu_custom_call.1} parent=5 // pred_fallthru
        _
      %p2441 = scmp.le.s32.totalorder 2, %s40
      // Predicated region
      $region105: #{tpu_custom_call.1} parent=5 // pred_check
        %p2442 = pneg %p2441
      $region106: #{tpu_custom_call.1} parent=5 // pred_check_branch
        %2444 = sbr.rel (%p2442) target = $region108
      $region107: #{tpu_custom_call.1} parent=5 // pred_region
        %s2445 = ssub.s32 %s40, 2
        // Predicated region
        $region109: #{tpu_custom_call.1} parent=107 // pred_check
          %p2446 = pneg %p445
        $region110: #{tpu_custom_call.1} parent=107 // pred_check_branch
          %2448 = sbr.rel (%p2446) target = $region112
        $region111: #{tpu_custom_call.1} parent=107 // pred_region
          %s2449 = sand.u32 %s430, 1
          %s2450 = scalar_lea.sflag [#allocation7], %s2449
          %s2451 = sand.u32 %s430, 1
          %s2452 = smul.addr %s2451, 8
          %s2453 = scalar_lea.vmem [#allocation14], %s2452
          %2454 = dma.done %s2450, 128
        $region112: #{tpu_custom_call.1} parent=107 // pred_fallthru
          _
      $region108: #{tpu_custom_call.1} parent=5 // pred_fallthru
        _
    $region6: #{tpu_custom_call.1} parent=1 // loop_footer
      %s44 = sadd.s32 1, %s40
    $region7: #{tpu_custom_call.1} parent=1 // loop_footer_branch
      %39 = sbr.rel target = $region3
    $region8: #{tpu_custom_call.1} parent=1 // loop_exit
      _
    %2455 = vsyncpa [#allocation6], 1
    %s2456 = scalar_lea.sflag [#allocation6], 1
    %2457 = vsyncpa %s2456, 1
    %2458 = vsyncpa [#allocation9], 1
    %s2459 = scalar_lea.sflag [#allocation9], 1
    %2460 = vsyncpa %s2459, 1
    %2461 = vsyncpa [#allocation12], 1
    %s2462 = scalar_lea.sflag [#allocation12], 1
    %2463 = vsyncpa %s2462, 1
    %2464 = vsyncpa [#allocation7], 1
    %s2465 = scalar_lea.sflag [#allocation7], 1
    %2466 = vsyncpa %s2465, 1

</llo_original>
